<compile_context>
chip_gen: v7x
topology: tpu7x:2x2x1
jax: 0.10.0
libtpu: 0.0.40
codegen_flags: <defaults>
</compile_context>

<pallas_src>
import jax
import jax.numpy as jnp
from jax.experimental import pallas as pl
from jax.experimental.pallas import tpu as pltpu


def _roundup(x, m):
    return -(-x // m) * m


def _padded_tile_bytes(rows, cols, dtype):
    """Bytes a (rows, cols) slab really occupies in VMEM after (8,128) tiling,
    accounting for sub-32-bit sublane packing."""
    it = jnp.dtype(dtype).itemsize
    sub = 8 * max(1, 4 // it)           # 8 rows for f32, 16 for bf16, 32 for i8
    return _roundup(max(rows, 1), sub) * _roundup(max(cols, 1), 128) * it


def _vmem_capacity_bytes():
    try:
        cap = int(getattr(pltpu.get_tpu_info(), "vmem_capacity_bytes", 0))
        if cap > 0:
            return cap
    except Exception:
        pass
    return 128 << 20                    # v5e / v6e default


def _pick_block_c(C, HW, dtype, budget_bytes):
    """Largest channel tile (multiple of the sublane packing, or all of C)
    whose padded (block_c, HW) slab fits the per-buffer budget."""
    if _padded_tile_bytes(C, HW, dtype) <= budget_bytes:
        return C
    it = jnp.dtype(dtype).itemsize
    sub = 8 * max(1, 4 // it)
    lane_bytes = _roundup(HW, 128) * it
    rows = max(sub, (budget_bytes // max(lane_bytes, 1)) // sub * sub)
    return int(min(rows, C))


def _make_kernel(C, H, W, ks, block_c):
    HW = H * W
    pad = ks // 2
    inv_c = 1.0 / float(C)
    has_tail = (C % block_c) != 0

    def kernel(x_ref, w_ref, out_ref, sum_ref, max_ref, pad_ref):
        # x_ref:   (1, block_c, H*W)  lane-dense input tile (one batch slice)
        # w_ref:   (2*ks*ks,)         conv taps in SMEM, order [chan, ky, kx]
        # out_ref: (1, 1, H, W)       output block, resident across the C axis
        # sum_ref: (1, H*W) f32       running channel sum
        # max_ref: (1, H*W)           running channel max (input dtype)
        # pad_ref: (2, H+2p, W+2p)    zero-padded [avg; max] conv staging buffer
        kc = pl.program_id(1)

        @pl.when(kc == 0)
        def _init():
            sum_ref[...] = jnp.zeros_like(sum_ref)
            max_ref[...] = jnp.full_like(max_ref, -jnp.inf)

        x = x_ref[0]                                          # (block_c, HW)
        if has_tail:
            # Mask channels past the true C out of the reduction (tail tile).
            ch = kc * block_c + jax.lax.broadcasted_iota(
                jnp.int32, (block_c, 1), 0)
            valid = ch < C
            x_sum = jnp.where(valid, x, jnp.zeros((), x.dtype))
            x_max = jnp.where(valid, x, jnp.array(-jnp.inf, x.dtype))
        else:
            x_sum = x
            x_max = x

        # Fused cast-into-reduction (no full f32 temp of the tile).
        sum_ref[...] = sum_ref[...] + jnp.sum(
            x_sum, axis=0, keepdims=True, dtype=jnp.float32)
        max_ref[...] = jnp.maximum(
            max_ref[...], jnp.max(x_max, axis=0, keepdims=True))

        @pl.when(kc == pl.num_programs(1) - 1)
        def _finalize():
            # Zero padding == PyTorch Conv2d(padding=ks//2) zero padding.
            pad_ref[...] = jnp.zeros_like(pad_ref)
            # Scatter the lane-dense (1, H*W) accumulators into the (H, W)
            # padded planes row by row (tiny: 2*H short copies, once/batch).
            for r in range(H):
                row = pl.ds(r * W, W)
                pad_ref[0, pad + r, pl.ds(pad, W)] = sum_ref[0, row] * inv_c
                pad_ref[1, pad + r, pl.ds(pad, W)] = (
                    max_ref[0, row].astype(jnp.float32))

            acc = jnp.zeros((H, W), jnp.float32)
            for c in range(2):
                for ky in range(ks):
                    for kx in range(ks):
                        wv = w_ref[c * ks * ks + ky * ks + kx]   # SMEM scalar
                        acc = acc + wv * pad_ref[c, pl.ds(ky, H), pl.ds(kx, W)]
            out_ref[0, 0, :, :] = jax.nn.sigmoid(acc).astype(out_ref.dtype)

    return kernel


def spatial_attention(x, w, *, block_c=None):
    """x: (B, C, H, W); w: (1, 2, ks, ks) Conv2d(2 -> 1, ks, bias=False) weight.
    Returns sigmoid(conv([mean_c(x); max_c(x)])) of shape (B, 1, H, W)."""
    B, C, H, W = x.shape
    O, I, KH, KW = w.shape
    assert O == 1 and I == 2 and KH == KW, "expected Conv2d(2, 1, k, k) weight"
    ks = KH
    pad = ks // 2
    HW = H * W

    if not jnp.issubdtype(x.dtype, jnp.floating):
        x = x.astype(jnp.float32)

    cap = _vmem_capacity_bytes()
    if block_c is None:
        budget = max(1 << 20, min(12 << 20, cap // 12))
        block_c = _pick_block_c(C, HW, x.dtype, budget)
    block_c = int(min(block_c, C))
    if block_c < C:
        # Keep the sublane dim of the block a multiple of the packing unit.
        sub = 8 * max(1, 4 // jnp.dtype(x.dtype).itemsize)
        block_c = int(min(_roundup(block_c, sub), C))
    n_c = pl.cdiv(C, block_c)

    # Lane-dense input: flatten spatial dims onto the 128-lane axis
    # (free metadata reshape for contiguous NCHW).
    x_flat = x.reshape(B, C, HW)
    w_flat = w.reshape(-1).astype(jnp.float32)                # (2*ks*ks,)

    # VMEM budget with real (8,128) tile padding accounted for.
    est = (2 * _padded_tile_bytes(block_c, HW, x.dtype)       # double-buffered x
           + 2 * _padded_tile_bytes(H, W, x.dtype)            # resident out block
           + _padded_tile_bytes(1, HW, jnp.float32)           # sum accumulator
           + _padded_tile_bytes(1, HW, x.dtype)               # max accumulator
           + 2 * _padded_tile_bytes(H + 2 * pad, W + 2 * pad, jnp.float32))
    vmem_limit = int(min(max(int(1.5 * est) + (2 << 20), 16 << 20),
                         int(0.75 * cap)))

    kernel = _make_kernel(C, H, W, ks, block_c)

    return pl.pallas_call(
        kernel,
        out_shape=jax.ShapeDtypeStruct((B, 1, H, W), x.dtype),
        grid_spec=pltpu.PrefetchScalarGridSpec(
            num_scalar_prefetch=0,
            grid=(B, n_c),
            in_specs=[
                pl.BlockSpec((1, block_c, HW), lambda b, k: (b, k, 0)),
                pl.BlockSpec(memory_space=pltpu.MemorySpace.SMEM),
            ],
            out_specs=pl.BlockSpec((1, 1, H, W), lambda b, k: (b, 0, 0, 0)),
            scratch_shapes=[
                pltpu.VMEM((1, HW), jnp.float32),
                pltpu.VMEM((1, HW), x.dtype),
                pltpu.VMEM((2, H + 2 * pad, W + 2 * pad), jnp.float32),
            ],
        ),
        compiler_params=pltpu.CompilerParams(
            dimension_semantics=("parallel", "arbitrary"),
            vmem_limit_bytes=vmem_limit,
        ),
    )(x_flat, w_flat)


def spatial_attention_ref(x, w):
    """Pure-JAX reference matching the PyTorch module."""
    avg = jnp.mean(x, axis=1, keepdims=True)
    mx = jnp.max(x, axis=1, keepdims=True)
    xm = jnp.concatenate([avg, mx], axis=1)                    # (B, 2, H, W)
    out = jax.lax.conv_general_dilated(
        xm, w, window_strides=(1, 1), padding="SAME",
        dimension_numbers=("NCHW", "OIHW", "NCHW"))
    return jax.nn.sigmoid(out)


if __name__ == "__main__":
    key = jax.random.PRNGKey(0)
    kx, kw = jax.random.split(key, 2)

    B, C, H, W = 2, 4, 16, 16
    KS = 7

    x = jax.random.normal(kx, (B, C, H, W), dtype=jnp.float32)
    # Conv2d(2, 1, 7, padding=3, bias=False) weight, OIHW layout.
    w = jax.random.normal(kw, (1, 2, KS, KS), dtype=jnp.float32) * 0.1

    out = spatial_attention(x, w)
    out = jax.block_until_ready(out)

    ref = spatial_attention_ref(x, w)
    assert out.shape == (B, 1, H, W)
    assert jnp.allclose(out, ref, atol=1e-5, rtol=1e-5), "mismatch vs reference"

    print("KERNEL_OK")
</pallas_src>

<mosaic_0001>
module attributes {stable_mosaic.version = 11 : i64} {
  func.func @kernel(%arg0: i32, %arg1: i32, %arg2: memref<1x4x256xf32, #tpu.memory_space<vmem>>, %arg3: memref<98xf32, #tpu.memory_space<smem>>, %arg4: memref<1x1x16x16xf32, #tpu.memory_space<vmem>>, %arg5: memref<1x256xf32, #tpu.memory_space<vmem>>, %arg6: memref<1x256xf32, #tpu.memory_space<vmem>>, %arg7: memref<2x22x22xf32, #tpu.memory_space<vmem>>) attributes {dimension_semantics = [#tpu.dimension_semantics<parallel>, #tpu.dimension_semantics<arbitrary>], iteration_bounds = array<i64: 2, 1>, scalar_prefetch = 0 : i64, scratch_operands = 3 : i64, tpu.core_type = #tpu.core_type<tc>, window_params = [{transform_indices = @transform_0, window_bounds = array<i64: 1, 4, 256>}, {transform_indices = @transform_1, window_bounds = array<i64: 98>}, {transform_indices = @transform_2, window_bounds = array<i64: 1, 1, 16, 16>}]} {
    %c0_i32 = arith.constant 0 : i32
    %0 = arith.cmpi eq, %arg1, %c0_i32 : i32
    %1 = arith.extui %0 : i1 to i32
    %c0_i32_0 = arith.constant 0 : i32
    %2 = arith.cmpi ne, %1, %c0_i32_0 : i32
    scf.if %2 {
      %cst_14 = arith.constant 0.000000e+00 : f32
      %18 = vector.broadcast %cst_14 : f32 to vector<1x256xf32>
      %c0_15 = arith.constant 0 : index
      %c0_16 = arith.constant 0 : index
      %19 = vector.load %arg5[%c0_15, %c0_16] : memref<1x256xf32, #tpu.memory_space<vmem>>, vector<1x256xf32>
      tpu.vector_store %arg5[%c0_15, %c0_16], %18 {strides = array<i32>} : memref<1x256xf32, #tpu.memory_space<vmem>>, vector<1x256xf32>,
      %cst_17 = arith.constant 0xFF800000 : f32
      %20 = vector.broadcast %cst_17 : f32 to vector<1x256xf32>
      %c0_18 = arith.constant 0 : index
      %c0_19 = arith.constant 0 : index
      %21 = vector.load %arg6[%c0_18, %c0_19] : memref<1x256xf32, #tpu.memory_space<vmem>>, vector<1x256xf32>
      tpu.vector_store %arg6[%c0_18, %c0_19], %20 {strides = array<i32>} : memref<1x256xf32, #tpu.memory_space<vmem>>, vector<1x256xf32>,
    } else {
    }
    %c0 = arith.constant 0 : index
    %c0_1 = arith.constant 0 : index
    %c0_2 = arith.constant 0 : index
    %3 = vector.load %arg2[%c0, %c0_1, %c0_2] : memref<1x4x256xf32, #tpu.memory_space<vmem>>, vector<1x4x256xf32>
    %4 = vector.shape_cast %3 : vector<1x4x256xf32> to vector<4x256xf32>
    %c0_3 = arith.constant 0 : index
    %c0_4 = arith.constant 0 : index
    %5 = vector.load %arg5[%c0_3, %c0_4] : memref<1x256xf32, #tpu.memory_space<vmem>>, vector<1x256xf32>
    %cst = arith.constant dense<0.000000e+00> : vector<256xf32>
    %6 = vector.multi_reduction <add>, %4, %cst [0] : vector<4x256xf32> to vector<256xf32>
    %7 = vector.shape_cast %6 : vector<256xf32> to vector<1x256xf32>
    %8 = arith.addf %5, %7 : vector<1x256xf32>
    %c0_5 = arith.constant 0 : index
    %c0_6 = arith.constant 0 : index
    %9 = vector.load %arg5[%c0_5, %c0_6] : memref<1x256xf32, #tpu.memory_space<vmem>>, vector<1x256xf32>
    tpu.vector_store %arg5[%c0_5, %c0_6], %8 {strides = array<i32>} : memref<1x256xf32, #tpu.memory_space<vmem>>, vector<1x256xf32>,
    %c0_7 = arith.constant 0 : index
    %c0_8 = arith.constant 0 : index
    %10 = vector.load %arg6[%c0_7, %c0_8] : memref<1x256xf32, #tpu.memory_space<vmem>>, vector<1x256xf32>
    %cst_9 = arith.constant dense<0xFF800000> : vector<256xf32>
    %11 = vector.multi_reduction <maximumf>, %4, %cst_9 [0] : vector<4x256xf32> to vector<256xf32>
    %12 = vector.shape_cast %11 : vector<256xf32> to vector<1x256xf32>
    %13 = arith.maximumf %10, %12 : vector<1x256xf32>
    %c0_10 = arith.constant 0 : index
    %c0_11 = arith.constant 0 : index
    %14 = vector.load %arg6[%c0_10, %c0_11] : memref<1x256xf32, #tpu.memory_space<vmem>>, vector<1x256xf32>
    tpu.vector_store %arg6[%c0_10, %c0_11], %13 {strides = array<i32>} : memref<1x256xf32, #tpu.memory_space<vmem>>, vector<1x256xf32>,
    %c0_i32_12 = arith.constant 0 : i32
    %15 = arith.cmpi eq, %arg1, %c0_i32_12 : i32
    %16 = arith.extui %15 : i1 to i32
    %c0_i32_13 = arith.constant 0 : i32
    %17 = arith.cmpi ne, %16, %c0_i32_13 : i32
    scf.if %17 {
      %cst_14 = arith.constant 0.000000e+00 : f32
      %18 = vector.broadcast %cst_14 : f32 to vector<2x22x22xf32>
      %c0_15 = arith.constant 0 : index
      %c0_16 = arith.constant 0 : index
      %c0_17 = arith.constant 0 : index
      %19 = vector.load %arg7[%c0_15, %c0_16, %c0_17] : memref<2x22x22xf32, #tpu.memory_space<vmem>>, vector<2x22x22xf32>
      tpu.vector_store %arg7[%c0_15, %c0_16, %c0_17], %18 {strides = array<i32>} : memref<2x22x22xf32, #tpu.memory_space<vmem>>, vector<2x22x22xf32>,
      %c0_18 = arith.constant 0 : index
      %c0_19 = arith.constant 0 : index
      %20 = vector.load %arg5[%c0_18, %c0_19] : memref<1x256xf32, #tpu.memory_space<vmem>>, vector<1x16xf32>
      %21 = vector.shape_cast %20 : vector<1x16xf32> to vector<16xf32>
      %cst_20 = arith.constant 2.500000e-01 : f32
      %22 = vector.broadcast %cst_20 : f32 to vector<16xf32>
      %23 = arith.mulf %21, %22 : vector<16xf32>
      %c0_21 = arith.constant 0 : index
      %c3 = arith.constant 3 : index
      %c3_22 = arith.constant 3 : index
      %24 = vector.load %arg7[%c0_21, %c3, %c3_22] : memref<2x22x22xf32, #tpu.memory_space<vmem>>, vector<1x1x16xf32>
      %25 = vector.shape_cast %24 : vector<1x1x16xf32> to vector<16xf32>
      %26 = vector.shape_cast %23 : vector<16xf32> to vector<1x1x16xf32>
      tpu.vector_store %arg7[%c0_21, %c3, %c3_22], %26 {strides = array<i32>} : memref<2x22x22xf32, #tpu.memory_space<vmem>>, vector<1x1x16xf32>,
      %c0_23 = arith.constant 0 : index
      %c0_24 = arith.constant 0 : index
      %27 = vector.load %arg6[%c0_23, %c0_24] : memref<1x256xf32, #tpu.memory_space<vmem>>, vector<1x16xf32>
      %28 = vector.shape_cast %27 : vector<1x16xf32> to vector<16xf32>
      %c1 = arith.constant 1 : index
      %c3_25 = arith.constant 3 : index
      %c3_26 = arith.constant 3 : index
      %29 = vector.load %arg7[%c1, %c3_25, %c3_26] : memref<2x22x22xf32, #tpu.memory_space<vmem>>, vector<1x1x16xf32>
      %30 = vector.shape_cast %29 : vector<1x1x16xf32> to vector<16xf32>
      %31 = vector.shape_cast %28 : vector<16xf32> to vector<1x1x16xf32>
      tpu.vector_store %arg7[%c1, %c3_25, %c3_26], %31 {strides = array<i32>} : memref<2x22x22xf32, #tpu.memory_space<vmem>>, vector<1x1x16xf32>,
      %c0_27 = arith.constant 0 : index
      %c16 = arith.constant 16 : index
      %32 = vector.load %arg5[%c0_27, %c16] : memref<1x256xf32, #tpu.memory_space<vmem>>, vector<1x16xf32>
      %33 = vector.shape_cast %32 : vector<1x16xf32> to vector<16xf32>
      %cst_28 = arith.constant 2.500000e-01 : f32
      %34 = vector.broadcast %cst_28 : f32 to vector<16xf32>
      %35 = arith.mulf %33, %34 : vector<16xf32>
      %c0_29 = arith.constant 0 : index
      %c4 = arith.constant 4 : index
      %c3_30 = arith.constant 3 : index
      %36 = vector.load %arg7[%c0_29, %c4, %c3_30] : memref<2x22x22xf32, #tpu.memory_space<vmem>>, vector<1x1x16xf32>
      %37 = vector.shape_cast %36 : vector<1x1x16xf32> to vector<16xf32>
      %38 = vector.shape_cast %35 : vector<16xf32> to vector<1x1x16xf32>
      tpu.vector_store %arg7[%c0_29, %c4, %c3_30], %38 {strides = array<i32>} : memref<2x22x22xf32, #tpu.memory_space<vmem>>, vector<1x1x16xf32>,
      %c0_31 = arith.constant 0 : index
      %c16_32 = arith.constant 16 : index
      %39 = vector.load %arg6[%c0_31, %c16_32] : memref<1x256xf32, #tpu.memory_space<vmem>>, vector<1x16xf32>
      %40 = vector.shape_cast %39 : vector<1x16xf32> to vector<16xf32>
      %c1_33 = arith.constant 1 : index
      %c4_34 = arith.constant 4 : index
      %c3_35 = arith.constant 3 : index
      %41 = vector.load %arg7[%c1_33, %c4_34, %c3_35] : memref<2x22x22xf32, #tpu.memory_space<vmem>>, vector<1x1x16xf32>
      %42 = vector.shape_cast %41 : vector<1x1x16xf32> to vector<16xf32>
      %43 = vector.shape_cast %40 : vector<16xf32> to vector<1x1x16xf32>
      tpu.vector_store %arg7[%c1_33, %c4_34, %c3_35], %43 {strides = array<i32>} : memref<2x22x22xf32, #tpu.memory_space<vmem>>, vector<1x1x16xf32>,
      %c0_36 = arith.constant 0 : index
      %c32 = arith.constant 32 : index
      %44 = vector.load %arg5[%c0_36, %c32] : memref<1x256xf32, #tpu.memory_space<vmem>>, vector<1x16xf32>
      %45 = vector.shape_cast %44 : vector<1x16xf32> to vector<16xf32>
      %cst_37 = arith.constant 2.500000e-01 : f32
      %46 = vector.broadcast %cst_37 : f32 to vector<16xf32>
      %47 = arith.mulf %45, %46 : vector<16xf32>
      %c0_38 = arith.constant 0 : index
      %c5 = arith.constant 5 : index
      %c3_39 = arith.constant 3 : index
      %48 = vector.load %arg7[%c0_38, %c5, %c3_39] : memref<2x22x22xf32, #tpu.memory_space<vmem>>, vector<1x1x16xf32>
      %49 = vector.shape_cast %48 : vector<1x1x16xf32> to vector<16xf32>
      %50 = vector.shape_cast %47 : vector<16xf32> to vector<1x1x16xf32>
      tpu.vector_store %arg7[%c0_38, %c5, %c3_39], %50 {strides = array<i32>} : memref<2x22x22xf32, #tpu.memory_space<vmem>>, vector<1x1x16xf32>,
      %c0_40 = arith.constant 0 : index
      %c32_41 = arith.constant 32 : index
      %51 = vector.load %arg6[%c0_40, %c32_41] : memref<1x256xf32, #tpu.memory_space<vmem>>, vector<1x16xf32>
      %52 = vector.shape_cast %51 : vector<1x16xf32> to vector<16xf32>
      %c1_42 = arith.constant 1 : index
      %c5_43 = arith.constant 5 : index
      %c3_44 = arith.constant 3 : index
      %53 = vector.load %arg7[%c1_42, %c5_43, %c3_44] : memref<2x22x22xf32, #tpu.memory_space<vmem>>, vector<1x1x16xf32>
      %54 = vector.shape_cast %53 : vector<1x1x16xf32> to vector<16xf32>
      %55 = vector.shape_cast %52 : vector<16xf32> to vector<1x1x16xf32>
      tpu.vector_store %arg7[%c1_42, %c5_43, %c3_44], %55 {strides = array<i32>} : memref<2x22x22xf32, #tpu.memory_space<vmem>>, vector<1x1x16xf32>,
      %c0_45 = arith.constant 0 : index
      %c48 = arith.constant 48 : index
      %56 = vector.load %arg5[%c0_45, %c48] : memref<1x256xf32, #tpu.memory_space<vmem>>, vector<1x16xf32>
      %57 = vector.shape_cast %56 : vector<1x16xf32> to vector<16xf32>
      %cst_46 = arith.constant 2.500000e-01 : f32
      %58 = vector.broadcast %cst_46 : f32 to vector<16xf32>
      %59 = arith.mulf %57, %58 : vector<16xf32>
      %c0_47 = arith.constant 0 : index
      %c6 = arith.constant 6 : index
      %c3_48 = arith.constant 3 : index
      %60 = vector.load %arg7[%c0_47, %c6, %c3_48] : memref<2x22x22xf32, #tpu.memory_space<vmem>>, vector<1x1x16xf32>
      %61 = vector.shape_cast %60 : vector<1x1x16xf32> to vector<16xf32>
      %62 = vector.shape_cast %59 : vector<16xf32> to vector<1x1x16xf32>
      tpu.vector_store %arg7[%c0_47, %c6, %c3_48], %62 {strides = array<i32>} : memref<2x22x22xf32, #tpu.memory_space<vmem>>, vector<1x1x16xf32>,
      %c0_49 = arith.constant 0 : index
      %c48_50 = arith.constant 48 : index
      %63 = vector.load %arg6[%c0_49, %c48_50] : memref<1x256xf32, #tpu.memory_space<vmem>>, vector<1x16xf32>
      %64 = vector.shape_cast %63 : vector<1x16xf32> to vector<16xf32>
      %c1_51 = arith.constant 1 : index
      %c6_52 = arith.constant 6 : index
      %c3_53 = arith.constant 3 : index
      %65 = vector.load %arg7[%c1_51, %c6_52, %c3_53] : memref<2x22x22xf32, #tpu.memory_space<vmem>>, vector<1x1x16xf32>
      %66 = vector.shape_cast %65 : vector<1x1x16xf32> to vector<16xf32>
      %67 = vector.shape_cast %64 : vector<16xf32> to vector<1x1x16xf32>
      tpu.vector_store %arg7[%c1_51, %c6_52, %c3_53], %67 {strides = array<i32>} : memref<2x22x22xf32, #tpu.memory_space<vmem>>, vector<1x1x16xf32>,
      %c0_54 = arith.constant 0 : index
      %c64 = arith.constant 64 : index
      %68 = vector.load %arg5[%c0_54, %c64] : memref<1x256xf32, #tpu.memory_space<vmem>>, vector<1x16xf32>
      %69 = vector.shape_cast %68 : vector<1x16xf32> to vector<16xf32>
      %cst_55 = arith.constant 2.500000e-01 : f32
      %70 = vector.broadcast %cst_55 : f32 to vector<16xf32>
      %71 = arith.mulf %69, %70 : vector<16xf32>
      %c0_56 = arith.constant 0 : index
      %c7 = arith.constant 7 : index
      %c3_57 = arith.constant 3 : index
      %72 = vector.load %arg7[%c0_56, %c7, %c3_57] : memref<2x22x22xf32, #tpu.memory_space<vmem>>, vector<1x1x16xf32>
      %73 = vector.shape_cast %72 : vector<1x1x16xf32> to vector<16xf32>
      %74 = vector.shape_cast %71 : vector<16xf32> to vector<1x1x16xf32>
      tpu.vector_store %arg7[%c0_56, %c7, %c3_57], %74 {strides = array<i32>} : memref<2x22x22xf32, #tpu.memory_space<vmem>>, vector<1x1x16xf32>,
      %c0_58 = arith.constant 0 : index
      %c64_59 = arith.constant 64 : index
      %75 = vector.load %arg6[%c0_58, %c64_59] : memref<1x256xf32, #tpu.memory_space<vmem>>, vector<1x16xf32>
      %76 = vector.shape_cast %75 : vector<1x16xf32> to vector<16xf32>
      %c1_60 = arith.constant 1 : index
      %c7_61 = arith.constant 7 : index
      %c3_62 = arith.constant 3 : index
      %77 = vector.load %arg7[%c1_60, %c7_61, %c3_62] : memref<2x22x22xf32, #tpu.memory_space<vmem>>, vector<1x1x16xf32>
      %78 = vector.shape_cast %77 : vector<1x1x16xf32> to vector<16xf32>
      %79 = vector.shape_cast %76 : vector<16xf32> to vector<1x1x16xf32>
      tpu.vector_store %arg7[%c1_60, %c7_61, %c3_62], %79 {strides = array<i32>} : memref<2x22x22xf32, #tpu.memory_space<vmem>>, vector<1x1x16xf32>,
      %c0_63 = arith.constant 0 : index
      %c80 = arith.constant 80 : index
      %80 = vector.load %arg5[%c0_63, %c80] : memref<1x256xf32, #tpu.memory_space<vmem>>, vector<1x16xf32>
      %81 = vector.shape_cast %80 : vector<1x16xf32> to vector<16xf32>
      %cst_64 = arith.constant 2.500000e-01 : f32
      %82 = vector.broadcast %cst_64 : f32 to vector<16xf32>
      %83 = arith.mulf %81, %82 : vector<16xf32>
      %c0_65 = arith.constant 0 : index
      %c8 = arith.constant 8 : index
      %c3_66 = arith.constant 3 : index
      %84 = vector.load %arg7[%c0_65, %c8, %c3_66] : memref<2x22x22xf32, #tpu.memory_space<vmem>>, vector<1x1x16xf32>
      %85 = vector.shape_cast %84 : vector<1x1x16xf32> to vector<16xf32>
      %86 = vector.shape_cast %83 : vector<16xf32> to vector<1x1x16xf32>
      tpu.vector_store %arg7[%c0_65, %c8, %c3_66], %86 {strides = array<i32>} : memref<2x22x22xf32, #tpu.memory_space<vmem>>, vector<1x1x16xf32>,
      %c0_67 = arith.constant 0 : index
      %c80_68 = arith.constant 80 : index
      %87 = vector.load %arg6[%c0_67, %c80_68] : memref<1x256xf32, #tpu.memory_space<vmem>>, vector<1x16xf32>
      %88 = vector.shape_cast %87 : vector<1x16xf32> to vector<16xf32>
      %c1_69 = arith.constant 1 : index
      %c8_70 = arith.constant 8 : index
      %c3_71 = arith.constant 3 : index
      %89 = vector.load %arg7[%c1_69, %c8_70, %c3_71] : memref<2x22x22xf32, #tpu.memory_space<vmem>>, vector<1x1x16xf32>
      %90 = vector.shape_cast %89 : vector<1x1x16xf32> to vector<16xf32>
      %91 = vector.shape_cast %88 : vector<16xf32> to vector<1x1x16xf32>
      tpu.vector_store %arg7[%c1_69, %c8_70, %c3_71], %91 {strides = array<i32>} : memref<2x22x22xf32, #tpu.memory_space<vmem>>, vector<1x1x16xf32>,
      %c0_72 = arith.constant 0 : index
      %c96 = arith.constant 96 : index
      %92 = vector.load %arg5[%c0_72, %c96] : memref<1x256xf32, #tpu.memory_space<vmem>>, vector<1x16xf32>
      %93 = vector.shape_cast %92 : vector<1x16xf32> to vector<16xf32>
      %cst_73 = arith.constant 2.500000e-01 : f32
      %94 = vector.broadcast %cst_73 : f32 to vector<16xf32>
      %95 = arith.mulf %93, %94 : vector<16xf32>
      %c0_74 = arith.constant 0 : index
      %c9 = arith.constant 9 : index
      %c3_75 = arith.constant 3 : index
      %96 = vector.load %arg7[%c0_74, %c9, %c3_75] : memref<2x22x22xf32, #tpu.memory_space<vmem>>, vector<1x1x16xf32>
      %97 = vector.shape_cast %96 : vector<1x1x16xf32> to vector<16xf32>
      %98 = vector.shape_cast %95 : vector<16xf32> to vector<1x1x16xf32>
      tpu.vector_store %arg7[%c0_74, %c9, %c3_75], %98 {strides = array<i32>} : memref<2x22x22xf32, #tpu.memory_space<vmem>>, vector<1x1x16xf32>,
      %c0_76 = arith.constant 0 : index
      %c96_77 = arith.constant 96 : index
      %99 = vector.load %arg6[%c0_76, %c96_77] : memref<1x256xf32, #tpu.memory_space<vmem>>, vector<1x16xf32>
      %100 = vector.shape_cast %99 : vector<1x16xf32> to vector<16xf32>
      %c1_78 = arith.constant 1 : index
      %c9_79 = arith.constant 9 : index
      %c3_80 = arith.constant 3 : index
      %101 = vector.load %arg7[%c1_78, %c9_79, %c3_80] : memref<2x22x22xf32, #tpu.memory_space<vmem>>, vector<1x1x16xf32>
      %102 = vector.shape_cast %101 : vector<1x1x16xf32> to vector<16xf32>
      %103 = vector.shape_cast %100 : vector<16xf32> to vector<1x1x16xf32>
      tpu.vector_store %arg7[%c1_78, %c9_79, %c3_80], %103 {strides = array<i32>} : memref<2x22x22xf32, #tpu.memory_space<vmem>>, vector<1x1x16xf32>,
      %c0_81 = arith.constant 0 : index
      %c112 = arith.constant 112 : index
      %104 = vector.load %arg5[%c0_81, %c112] : memref<1x256xf32, #tpu.memory_space<vmem>>, vector<1x16xf32>
      %105 = vector.shape_cast %104 : vector<1x16xf32> to vector<16xf32>
      %cst_82 = arith.constant 2.500000e-01 : f32
      %106 = vector.broadcast %cst_82 : f32 to vector<16xf32>
      %107 = arith.mulf %105, %106 : vector<16xf32>
      %c0_83 = arith.constant 0 : index
      %c10 = arith.constant 10 : index
      %c3_84 = arith.constant 3 : index
      %108 = vector.load %arg7[%c0_83, %c10, %c3_84] : memref<2x22x22xf32, #tpu.memory_space<vmem>>, vector<1x1x16xf32>
      %109 = vector.shape_cast %108 : vector<1x1x16xf32> to vector<16xf32>
      %110 = vector.shape_cast %107 : vector<16xf32> to vector<1x1x16xf32>
      tpu.vector_store %arg7[%c0_83, %c10, %c3_84], %110 {strides = array<i32>} : memref<2x22x22xf32, #tpu.memory_space<vmem>>, vector<1x1x16xf32>,
      %c0_85 = arith.constant 0 : index
      %c112_86 = arith.constant 112 : index
      %111 = vector.load %arg6[%c0_85, %c112_86] : memref<1x256xf32, #tpu.memory_space<vmem>>, vector<1x16xf32>
      %112 = vector.shape_cast %111 : vector<1x16xf32> to vector<16xf32>
      %c1_87 = arith.constant 1 : index
      %c10_88 = arith.constant 10 : index
      %c3_89 = arith.constant 3 : index
      %113 = vector.load %arg7[%c1_87, %c10_88, %c3_89] : memref<2x22x22xf32, #tpu.memory_space<vmem>>, vector<1x1x16xf32>
      %114 = vector.shape_cast %113 : vector<1x1x16xf32> to vector<16xf32>
      %115 = vector.shape_cast %112 : vector<16xf32> to vector<1x1x16xf32>
      tpu.vector_store %arg7[%c1_87, %c10_88, %c3_89], %115 {strides = array<i32>} : memref<2x22x22xf32, #tpu.memory_space<vmem>>, vector<1x1x16xf32>,
      %c0_90 = arith.constant 0 : index
      %c128 = arith.constant 128 : index
      %116 = vector.load %arg5[%c0_90, %c128] : memref<1x256xf32, #tpu.memory_space<vmem>>, vector<1x16xf32>
      %117 = vector.shape_cast %116 : vector<1x16xf32> to vector<16xf32>
      %cst_91 = arith.constant 2.500000e-01 : f32
      %118 = vector.broadcast %cst_91 : f32 to vector<16xf32>
      %119 = arith.mulf %117, %118 : vector<16xf32>
      %c0_92 = arith.constant 0 : index
      %c11 = arith.constant 11 : index
      %c3_93 = arith.constant 3 : index
      %120 = vector.load %arg7[%c0_92, %c11, %c3_93] : memref<2x22x22xf32, #tpu.memory_space<vmem>>, vector<1x1x16xf32>
      %121 = vector.shape_cast %120 : vector<1x1x16xf32> to vector<16xf32>
      %122 = vector.shape_cast %119 : vector<16xf32> to vector<1x1x16xf32>
      tpu.vector_store %arg7[%c0_92, %c11, %c3_93], %122 {strides = array<i32>} : memref<2x22x22xf32, #tpu.memory_space<vmem>>, vector<1x1x16xf32>,
      %c0_94 = arith.constant 0 : index
      %c128_95 = arith.constant 128 : index
      %123 = vector.load %arg6[%c0_94, %c128_95] : memref<1x256xf32, #tpu.memory_space<vmem>>, vector<1x16xf32>
      %124 = vector.shape_cast %123 : vector<1x16xf32> to vector<16xf32>
      %c1_96 = arith.constant 1 : index
      %c11_97 = arith.constant 11 : index
      %c3_98 = arith.constant 3 : index
      %125 = vector.load %arg7[%c1_96, %c11_97, %c3_98] : memref<2x22x22xf32, #tpu.memory_space<vmem>>, vector<1x1x16xf32>
      %126 = vector.shape_cast %125 : vector<1x1x16xf32> to vector<16xf32>
      %127 = vector.shape_cast %124 : vector<16xf32> to vector<1x1x16xf32>
      tpu.vector_store %arg7[%c1_96, %c11_97, %c3_98], %127 {strides = array<i32>} : memref<2x22x22xf32, #tpu.memory_space<vmem>>, vector<1x1x16xf32>,
      %c0_99 = arith.constant 0 : index
      %c144 = arith.constant 144 : index
      %128 = vector.load %arg5[%c0_99, %c144] : memref<1x256xf32, #tpu.memory_space<vmem>>, vector<1x16xf32>
      %129 = vector.shape_cast %128 : vector<1x16xf32> to vector<16xf32>
      %cst_100 = arith.constant 2.500000e-01 : f32
      %130 = vector.broadcast %cst_100 : f32 to vector<16xf32>
      %131 = arith.mulf %129, %130 : vector<16xf32>
      %c0_101 = arith.constant 0 : index
      %c12 = arith.constant 12 : index
      %c3_102 = arith.constant 3 : index
      %132 = vector.load %arg7[%c0_101, %c12, %c3_102] : memref<2x22x22xf32, #tpu.memory_space<vmem>>, vector<1x1x16xf32>
      %133 = vector.shape_cast %132 : vector<1x1x16xf32> to vector<16xf32>
      %134 = vector.shape_cast %131 : vector<16xf32> to vector<1x1x16xf32>
      tpu.vector_store %arg7[%c0_101, %c12, %c3_102], %134 {strides = array<i32>} : memref<2x22x22xf32, #tpu.memory_space<vmem>>, vector<1x1x16xf32>,
      %c0_103 = arith.constant 0 : index
      %c144_104 = arith.constant 144 : index
      %135 = vector.load %arg6[%c0_103, %c144_104] : memref<1x256xf32, #tpu.memory_space<vmem>>, vector<1x16xf32>
      %136 = vector.shape_cast %135 : vector<1x16xf32> to vector<16xf32>
      %c1_105 = arith.constant 1 : index
      %c12_106 = arith.constant 12 : index
      %c3_107 = arith.constant 3 : index
      %137 = vector.load %arg7[%c1_105, %c12_106, %c3_107] : memref<2x22x22xf32, #tpu.memory_space<vmem>>, vector<1x1x16xf32>
      %138 = vector.shape_cast %137 : vector<1x1x16xf32> to vector<16xf32>
      %139 = vector.shape_cast %136 : vector<16xf32> to vector<1x1x16xf32>
      tpu.vector_store %arg7[%c1_105, %c12_106, %c3_107], %139 {strides = array<i32>} : memref<2x22x22xf32, #tpu.memory_space<vmem>>, vector<1x1x16xf32>,
      %c0_108 = arith.constant 0 : index
      %c160 = arith.constant 160 : index
      %140 = vector.load %arg5[%c0_108, %c160] : memref<1x256xf32, #tpu.memory_space<vmem>>, vector<1x16xf32>
      %141 = vector.shape_cast %140 : vector<1x16xf32> to vector<16xf32>
      %cst_109 = arith.constant 2.500000e-01 : f32
      %142 = vector.broadcast %cst_109 : f32 to vector<16xf32>
      %143 = arith.mulf %141, %142 : vector<16xf32>
      %c0_110 = arith.constant 0 : index
      %c13 = arith.constant 13 : index
      %c3_111 = arith.constant 3 : index
      %144 = vector.load %arg7[%c0_110, %c13, %c3_111] : memref<2x22x22xf32, #tpu.memory_space<vmem>>, vector<1x1x16xf32>
      %145 = vector.shape_cast %144 : vector<1x1x16xf32> to vector<16xf32>
      %146 = vector.shape_cast %143 : vector<16xf32> to vector<1x1x16xf32>
      tpu.vector_store %arg7[%c0_110, %c13, %c3_111], %146 {strides = array<i32>} : memref<2x22x22xf32, #tpu.memory_space<vmem>>, vector<1x1x16xf32>,
      %c0_112 = arith.constant 0 : index
      %c160_113 = arith.constant 160 : index
      %147 = vector.load %arg6[%c0_112, %c160_113] : memref<1x256xf32, #tpu.memory_space<vmem>>, vector<1x16xf32>
      %148 = vector.shape_cast %147 : vector<1x16xf32> to vector<16xf32>
      %c1_114 = arith.constant 1 : index
      %c13_115 = arith.constant 13 : index
      %c3_116 = arith.constant 3 : index
      %149 = vector.load %arg7[%c1_114, %c13_115, %c3_116] : memref<2x22x22xf32, #tpu.memory_space<vmem>>, vector<1x1x16xf32>
      %150 = vector.shape_cast %149 : vector<1x1x16xf32> to vector<16xf32>
      %151 = vector.shape_cast %148 : vector<16xf32> to vector<1x1x16xf32>
      tpu.vector_store %arg7[%c1_114, %c13_115, %c3_116], %151 {strides = array<i32>} : memref<2x22x22xf32, #tpu.memory_space<vmem>>, vector<1x1x16xf32>,
      %c0_117 = arith.constant 0 : index
      %c176 = arith.constant 176 : index
      %152 = vector.load %arg5[%c0_117, %c176] : memref<1x256xf32, #tpu.memory_space<vmem>>, vector<1x16xf32>
      %153 = vector.shape_cast %152 : vector<1x16xf32> to vector<16xf32>
      %cst_118 = arith.constant 2.500000e-01 : f32
      %154 = vector.broadcast %cst_118 : f32 to vector<16xf32>
      %155 = arith.mulf %153, %154 : vector<16xf32>
      %c0_119 = arith.constant 0 : index
      %c14 = arith.constant 14 : index
      %c3_120 = arith.constant 3 : index
      %156 = vector.load %arg7[%c0_119, %c14, %c3_120] : memref<2x22x22xf32, #tpu.memory_space<vmem>>, vector<1x1x16xf32>
      %157 = vector.shape_cast %156 : vector<1x1x16xf32> to vector<16xf32>
      %158 = vector.shape_cast %155 : vector<16xf32> to vector<1x1x16xf32>
      tpu.vector_store %arg7[%c0_119, %c14, %c3_120], %158 {strides = array<i32>} : memref<2x22x22xf32, #tpu.memory_space<vmem>>, vector<1x1x16xf32>,
      %c0_121 = arith.constant 0 : index
      %c176_122 = arith.constant 176 : index
      %159 = vector.load %arg6[%c0_121, %c176_122] : memref<1x256xf32, #tpu.memory_space<vmem>>, vector<1x16xf32>
      %160 = vector.shape_cast %159 : vector<1x16xf32> to vector<16xf32>
      %c1_123 = arith.constant 1 : index
      %c14_124 = arith.constant 14 : index
      %c3_125 = arith.constant 3 : index
      %161 = vector.load %arg7[%c1_123, %c14_124, %c3_125] : memref<2x22x22xf32, #tpu.memory_space<vmem>>, vector<1x1x16xf32>
      %162 = vector.shape_cast %161 : vector<1x1x16xf32> to vector<16xf32>
      %163 = vector.shape_cast %160 : vector<16xf32> to vector<1x1x16xf32>
      tpu.vector_store %arg7[%c1_123, %c14_124, %c3_125], %163 {strides = array<i32>} : memref<2x22x22xf32, #tpu.memory_space<vmem>>, vector<1x1x16xf32>,
      %c0_126 = arith.constant 0 : index
      %c192 = arith.constant 192 : index
      %164 = vector.load %arg5[%c0_126, %c192] : memref<1x256xf32, #tpu.memory_space<vmem>>, vector<1x16xf32>
      %165 = vector.shape_cast %164 : vector<1x16xf32> to vector<16xf32>
      %cst_127 = arith.constant 2.500000e-01 : f32
      %166 = vector.broadcast %cst_127 : f32 to vector<16xf32>
      %167 = arith.mulf %165, %166 : vector<16xf32>
      %c0_128 = arith.constant 0 : index
      %c15 = arith.constant 15 : index
      %c3_129 = arith.constant 3 : index
      %168 = vector.load %arg7[%c0_128, %c15, %c3_129] : memref<2x22x22xf32, #tpu.memory_space<vmem>>, vector<1x1x16xf32>
      %169 = vector.shape_cast %168 : vector<1x1x16xf32> to vector<16xf32>
      %170 = vector.shape_cast %167 : vector<16xf32> to vector<1x1x16xf32>
      tpu.vector_store %arg7[%c0_128, %c15, %c3_129], %170 {strides = array<i32>} : memref<2x22x22xf32, #tpu.memory_space<vmem>>, vector<1x1x16xf32>,
      %c0_130 = arith.constant 0 : index
      %c192_131 = arith.constant 192 : index
      %171 = vector.load %arg6[%c0_130, %c192_131] : memref<1x256xf32, #tpu.memory_space<vmem>>, vector<1x16xf32>
      %172 = vector.shape_cast %171 : vector<1x16xf32> to vector<16xf32>
      %c1_132 = arith.constant 1 : index
      %c15_133 = arith.constant 15 : index
      %c3_134 = arith.constant 3 : index
      %173 = vector.load %arg7[%c1_132, %c15_133, %c3_134] : memref<2x22x22xf32, #tpu.memory_space<vmem>>, vector<1x1x16xf32>
      %174 = vector.shape_cast %173 : vector<1x1x16xf32> to vector<16xf32>
      %175 = vector.shape_cast %172 : vector<16xf32> to vector<1x1x16xf32>
      tpu.vector_store %arg7[%c1_132, %c15_133, %c3_134], %175 {strides = array<i32>} : memref<2x22x22xf32, #tpu.memory_space<vmem>>, vector<1x1x16xf32>,
      %c0_135 = arith.constant 0 : index
      %c208 = arith.constant 208 : index
      %176 = vector.load %arg5[%c0_135, %c208] : memref<1x256xf32, #tpu.memory_space<vmem>>, vector<1x16xf32>
      %177 = vector.shape_cast %176 : vector<1x16xf32> to vector<16xf32>
      %cst_136 = arith.constant 2.500000e-01 : f32
      %178 = vector.broadcast %cst_136 : f32 to vector<16xf32>
      %179 = arith.mulf %177, %178 : vector<16xf32>
      %c0_137 = arith.constant 0 : index
      %c16_138 = arith.constant 16 : index
      %c3_139 = arith.constant 3 : index
      %180 = vector.load %arg7[%c0_137, %c16_138, %c3_139] : memref<2x22x22xf32, #tpu.memory_space<vmem>>, vector<1x1x16xf32>
      %181 = vector.shape_cast %180 : vector<1x1x16xf32> to vector<16xf32>
      %182 = vector.shape_cast %179 : vector<16xf32> to vector<1x1x16xf32>
      tpu.vector_store %arg7[%c0_137, %c16_138, %c3_139], %182 {strides = array<i32>} : memref<2x22x22xf32, #tpu.memory_space<vmem>>, vector<1x1x16xf32>,
      %c0_140 = arith.constant 0 : index
      %c208_141 = arith.constant 208 : index
      %183 = vector.load %arg6[%c0_140, %c208_141] : memref<1x256xf32, #tpu.memory_space<vmem>>, vector<1x16xf32>
      %184 = vector.shape_cast %183 : vector<1x16xf32> to vector<16xf32>
      %c1_142 = arith.constant 1 : index
      %c16_143 = arith.constant 16 : index
      %c3_144 = arith.constant 3 : index
      %185 = vector.load %arg7[%c1_142, %c16_143, %c3_144] : memref<2x22x22xf32, #tpu.memory_space<vmem>>, vector<1x1x16xf32>
      %186 = vector.shape_cast %185 : vector<1x1x16xf32> to vector<16xf32>
      %187 = vector.shape_cast %184 : vector<16xf32> to vector<1x1x16xf32>
      tpu.vector_store %arg7[%c1_142, %c16_143, %c3_144], %187 {strides = array<i32>} : memref<2x22x22xf32, #tpu.memory_space<vmem>>, vector<1x1x16xf32>,
      %c0_145 = arith.constant 0 : index
      %c224 = arith.constant 224 : index
      %188 = vector.load %arg5[%c0_145, %c224] : memref<1x256xf32, #tpu.memory_space<vmem>>, vector<1x16xf32>
      %189 = vector.shape_cast %188 : vector<1x16xf32> to vector<16xf32>
      %cst_146 = arith.constant 2.500000e-01 : f32
      %190 = vector.broadcast %cst_146 : f32 to vector<16xf32>
      %191 = arith.mulf %189, %190 : vector<16xf32>
      %c0_147 = arith.constant 0 : index
      %c17 = arith.constant 17 : index
      %c3_148 = arith.constant 3 : index
      %192 = vector.load %arg7[%c0_147, %c17, %c3_148] : memref<2x22x22xf32, #tpu.memory_space<vmem>>, vector<1x1x16xf32>
      %193 = vector.shape_cast %192 : vector<1x1x16xf32> to vector<16xf32>
      %194 = vector.shape_cast %191 : vector<16xf32> to vector<1x1x16xf32>
      tpu.vector_store %arg7[%c0_147, %c17, %c3_148], %194 {strides = array<i32>} : memref<2x22x22xf32, #tpu.memory_space<vmem>>, vector<1x1x16xf32>,
      %c0_149 = arith.constant 0 : index
      %c224_150 = arith.constant 224 : index
      %195 = vector.load %arg6[%c0_149, %c224_150] : memref<1x256xf32, #tpu.memory_space<vmem>>, vector<1x16xf32>
      %196 = vector.shape_cast %195 : vector<1x16xf32> to vector<16xf32>
      %c1_151 = arith.constant 1 : index
      %c17_152 = arith.constant 17 : index
      %c3_153 = arith.constant 3 : index
      %197 = vector.load %arg7[%c1_151, %c17_152, %c3_153] : memref<2x22x22xf32, #tpu.memory_space<vmem>>, vector<1x1x16xf32>
      %198 = vector.shape_cast %197 : vector<1x1x16xf32> to vector<16xf32>
      %199 = vector.shape_cast %196 : vector<16xf32> to vector<1x1x16xf32>
      tpu.vector_store %arg7[%c1_151, %c17_152, %c3_153], %199 {strides = array<i32>} : memref<2x22x22xf32, #tpu.memory_space<vmem>>, vector<1x1x16xf32>,
      %c0_154 = arith.constant 0 : index
      %c240 = arith.constant 240 : index
      %200 = vector.load %arg5[%c0_154, %c240] : memref<1x256xf32, #tpu.memory_space<vmem>>, vector<1x16xf32>
      %201 = vector.shape_cast %200 : vector<1x16xf32> to vector<16xf32>
      %cst_155 = arith.constant 2.500000e-01 : f32
      %202 = vector.broadcast %cst_155 : f32 to vector<16xf32>
      %203 = arith.mulf %201, %202 : vector<16xf32>
      %c0_156 = arith.constant 0 : index
      %c18 = arith.constant 18 : index
      %c3_157 = arith.constant 3 : index
      %204 = vector.load %arg7[%c0_156, %c18, %c3_157] : memref<2x22x22xf32, #tpu.memory_space<vmem>>, vector<1x1x16xf32>
      %205 = vector.shape_cast %204 : vector<1x1x16xf32> to vector<16xf32>
      %206 = vector.shape_cast %203 : vector<16xf32> to vector<1x1x16xf32>
      tpu.vector_store %arg7[%c0_156, %c18, %c3_157], %206 {strides = array<i32>} : memref<2x22x22xf32, #tpu.memory_space<vmem>>, vector<1x1x16xf32>,
      %c0_158 = arith.constant 0 : index
      %c240_159 = arith.constant 240 : index
      %207 = vector.load %arg6[%c0_158, %c240_159] : memref<1x256xf32, #tpu.memory_space<vmem>>, vector<1x16xf32>
      %208 = vector.shape_cast %207 : vector<1x16xf32> to vector<16xf32>
      %c1_160 = arith.constant 1 : index
      %c18_161 = arith.constant 18 : index
      %c3_162 = arith.constant 3 : index
      %209 = vector.load %arg7[%c1_160, %c18_161, %c3_162] : memref<2x22x22xf32, #tpu.memory_space<vmem>>, vector<1x1x16xf32>
      %210 = vector.shape_cast %209 : vector<1x1x16xf32> to vector<16xf32>
      %211 = vector.shape_cast %208 : vector<16xf32> to vector<1x1x16xf32>
      tpu.vector_store %arg7[%c1_160, %c18_161, %c3_162], %211 {strides = array<i32>} : memref<2x22x22xf32, #tpu.memory_space<vmem>>, vector<1x1x16xf32>,
      %cst_163 = arith.constant 0.000000e+00 : f32
      %212 = vector.broadcast %cst_163 : f32 to vector<16x16xf32>
      %c0_164 = arith.constant 0 : index
      %213 = memref.load %arg3[%c0_164] : memref<98xf32, #tpu.memory_space<smem>>
      %c0_165 = arith.constant 0 : index
      %c0_166 = arith.constant 0 : index
      %c0_167 = arith.constant 0 : index
      %214 = vector.load %arg7[%c0_165, %c0_166, %c0_167] : memref<2x22x22xf32, #tpu.memory_space<vmem>>, vector<1x16x16xf32>
      %215 = vector.shape_cast %214 : vector<1x16x16xf32> to vector<16x16xf32>
      %216 = vector.broadcast %213 : f32 to vector<16x16xf32>
      %217 = arith.mulf %216, %215 : vector<16x16xf32>
      %218 = arith.addf %212, %217 : vector<16x16xf32>
      %c1_168 = arith.constant 1 : index
      %219 = memref.load %arg3[%c1_168] : memref<98xf32, #tpu.memory_space<smem>>
      %c0_169 = arith.constant 0 : index
      %c0_170 = arith.constant 0 : index
      %c1_171 = arith.constant 1 : index
      %220 = vector.load %arg7[%c0_169, %c0_170, %c1_171] : memref<2x22x22xf32, #tpu.memory_space<vmem>>, vector<1x16x16xf32>
      %221 = vector.shape_cast %220 : vector<1x16x16xf32> to vector<16x16xf32>
      %222 = vector.broadcast %219 : f32 to vector<16x16xf32>
      %223 = arith.mulf %222, %221 : vector<16x16xf32>
      %224 = arith.addf %218, %223 : vector<16x16xf32>
      %c2 = arith.constant 2 : index
      %225 = memref.load %arg3[%c2] : memref<98xf32, #tpu.memory_space<smem>>
      %c0_172 = arith.constant 0 : index
      %c0_173 = arith.constant 0 : index
      %c2_174 = arith.constant 2 : index
      %226 = vector.load %arg7[%c0_172, %c0_173, %c2_174] : memref<2x22x22xf32, #tpu.memory_space<vmem>>, vector<1x16x16xf32>
      %227 = vector.shape_cast %226 : vector<1x16x16xf32> to vector<16x16xf32>
      %228 = vector.broadcast %225 : f32 to vector<16x16xf32>
      %229 = arith.mulf %228, %227 : vector<16x16xf32>
      %230 = arith.addf %224, %229 : vector<16x16xf32>
      %c3_175 = arith.constant 3 : index
      %231 = memref.load %arg3[%c3_175] : memref<98xf32, #tpu.memory_space<smem>>
      %c0_176 = arith.constant 0 : index
      %c0_177 = arith.constant 0 : index
      %c3_178 = arith.constant 3 : index
      %232 = vector.load %arg7[%c0_176, %c0_177, %c3_178] : memref<2x22x22xf32, #tpu.memory_space<vmem>>, vector<1x16x16xf32>
      %233 = vector.shape_cast %232 : vector<1x16x16xf32> to vector<16x16xf32>
      %234 = vector.broadcast %231 : f32 to vector<16x16xf32>
      %235 = arith.mulf %234, %233 : vector<16x16xf32>
      %236 = arith.addf %230, %235 : vector<16x16xf32>
      %c4_179 = arith.constant 4 : index
      %237 = memref.load %arg3[%c4_179] : memref<98xf32, #tpu.memory_space<smem>>
      %c0_180 = arith.constant 0 : index
      %c0_181 = arith.constant 0 : index
      %c4_182 = arith.constant 4 : index
      %238 = vector.load %arg7[%c0_180, %c0_181, %c4_182] : memref<2x22x22xf32, #tpu.memory_space<vmem>>, vector<1x16x16xf32>
      %239 = vector.shape_cast %238 : vector<1x16x16xf32> to vector<16x16xf32>
      %240 = vector.broadcast %237 : f32 to vector<16x16xf32>
      %241 = arith.mulf %240, %239 : vector<16x16xf32>
      %242 = arith.addf %236, %241 : vector<16x16xf32>
      %c5_183 = arith.constant 5 : index
      %243 = memref.load %arg3[%c5_183] : memref<98xf32, #tpu.memory_space<smem>>
      %c0_184 = arith.constant 0 : index
      %c0_185 = arith.constant 0 : index
      %c5_186 = arith.constant 5 : index
      %244 = vector.load %arg7[%c0_184, %c0_185, %c5_186] : memref<2x22x22xf32, #tpu.memory_space<vmem>>, vector<1x16x16xf32>
      %245 = vector.shape_cast %244 : vector<1x16x16xf32> to vector<16x16xf32>
      %246 = vector.broadcast %243 : f32 to vector<16x16xf32>
      %247 = arith.mulf %246, %245 : vector<16x16xf32>
      %248 = arith.addf %242, %247 : vector<16x16xf32>
      %c6_187 = arith.constant 6 : index
      %249 = memref.load %arg3[%c6_187] : memref<98xf32, #tpu.memory_space<smem>>
      %c0_188 = arith.constant 0 : index
      %c0_189 = arith.constant 0 : index
      %c6_190 = arith.constant 6 : index
      %250 = vector.load %arg7[%c0_188, %c0_189, %c6_190] : memref<2x22x22xf32, #tpu.memory_space<vmem>>, vector<1x16x16xf32>
      %251 = vector.shape_cast %250 : vector<1x16x16xf32> to vector<16x16xf32>
      %252 = vector.broadcast %249 : f32 to vector<16x16xf32>
      %253 = arith.mulf %252, %251 : vector<16x16xf32>
      %254 = arith.addf %248, %253 : vector<16x16xf32>
      %c7_191 = arith.constant 7 : index
      %255 = memref.load %arg3[%c7_191] : memref<98xf32, #tpu.memory_space<smem>>
      %c0_192 = arith.constant 0 : index
      %c1_193 = arith.constant 1 : index
      %c0_194 = arith.constant 0 : index
      %256 = vector.load %arg7[%c0_192, %c1_193, %c0_194] : memref<2x22x22xf32, #tpu.memory_space<vmem>>, vector<1x16x16xf32>
      %257 = vector.shape_cast %256 : vector<1x16x16xf32> to vector<16x16xf32>
      %258 = vector.broadcast %255 : f32 to vector<16x16xf32>
      %259 = arith.mulf %258, %257 : vector<16x16xf32>
      %260 = arith.addf %254, %259 : vector<16x16xf32>
      %c8_195 = arith.constant 8 : index
      %261 = memref.load %arg3[%c8_195] : memref<98xf32, #tpu.memory_space<smem>>
      %c0_196 = arith.constant 0 : index
      %c1_197 = arith.constant 1 : index
      %c1_198 = arith.constant 1 : index
      %262 = vector.load %arg7[%c0_196, %c1_197, %c1_198] : memref<2x22x22xf32, #tpu.memory_space<vmem>>, vector<1x16x16xf32>
      %263 = vector.shape_cast %262 : vector<1x16x16xf32> to vector<16x16xf32>
      %264 = vector.broadcast %261 : f32 to vector<16x16xf32>
      %265 = arith.mulf %264, %263 : vector<16x16xf32>
      %266 = arith.addf %260, %265 : vector<16x16xf32>
      %c9_199 = arith.constant 9 : index
      %267 = memref.load %arg3[%c9_199] : memref<98xf32, #tpu.memory_space<smem>>
      %c0_200 = arith.constant 0 : index
      %c1_201 = arith.constant 1 : index
      %c2_202 = arith.constant 2 : index
      %268 = vector.load %arg7[%c0_200, %c1_201, %c2_202] : memref<2x22x22xf32, #tpu.memory_space<vmem>>, vector<1x16x16xf32>
      %269 = vector.shape_cast %268 : vector<1x16x16xf32> to vector<16x16xf32>
      %270 = vector.broadcast %267 : f32 to vector<16x16xf32>
      %271 = arith.mulf %270, %269 : vector<16x16xf32>
      %272 = arith.addf %266, %271 : vector<16x16xf32>
      %c10_203 = arith.constant 10 : index
      %273 = memref.load %arg3[%c10_203] : memref<98xf32, #tpu.memory_space<smem>>
      %c0_204 = arith.constant 0 : index
      %c1_205 = arith.constant 1 : index
      %c3_206 = arith.constant 3 : index
      %274 = vector.load %arg7[%c0_204, %c1_205, %c3_206] : memref<2x22x22xf32, #tpu.memory_space<vmem>>, vector<1x16x16xf32>
      %275 = vector.shape_cast %274 : vector<1x16x16xf32> to vector<16x16xf32>
      %276 = vector.broadcast %273 : f32 to vector<16x16xf32>
      %277 = arith.mulf %276, %275 : vector<16x16xf32>
      %278 = arith.addf %272, %277 : vector<16x16xf32>
      %c11_207 = arith.constant 11 : index
      %279 = memref.load %arg3[%c11_207] : memref<98xf32, #tpu.memory_space<smem>>
      %c0_208 = arith.constant 0 : index
      %c1_209 = arith.constant 1 : index
      %c4_210 = arith.constant 4 : index
      %280 = vector.load %arg7[%c0_208, %c1_209, %c4_210] : memref<2x22x22xf32, #tpu.memory_space<vmem>>, vector<1x16x16xf32>
      %281 = vector.shape_cast %280 : vector<1x16x16xf32> to vector<16x16xf32>
      %282 = vector.broadcast %279 : f32 to vector<16x16xf32>
      %283 = arith.mulf %282, %281 : vector<16x16xf32>
      %284 = arith.addf %278, %283 : vector<16x16xf32>
      %c12_211 = arith.constant 12 : index
      %285 = memref.load %arg3[%c12_211] : memref<98xf32, #tpu.memory_space<smem>>
      %c0_212 = arith.constant 0 : index
      %c1_213 = arith.constant 1 : index
      %c5_214 = arith.constant 5 : index
      %286 = vector.load %arg7[%c0_212, %c1_213, %c5_214] : memref<2x22x22xf32, #tpu.memory_space<vmem>>, vector<1x16x16xf32>
      %287 = vector.shape_cast %286 : vector<1x16x16xf32> to vector<16x16xf32>
      %288 = vector.broadcast %285 : f32 to vector<16x16xf32>
      %289 = arith.mulf %288, %287 : vector<16x16xf32>
      %290 = arith.addf %284, %289 : vector<16x16xf32>
      %c13_215 = arith.constant 13 : index
      %291 = memref.load %arg3[%c13_215] : memref<98xf32, #tpu.memory_space<smem>>
      %c0_216 = arith.constant 0 : index
      %c1_217 = arith.constant 1 : index
      %c6_218 = arith.constant 6 : index
      %292 = vector.load %arg7[%c0_216, %c1_217, %c6_218] : memref<2x22x22xf32, #tpu.memory_space<vmem>>, vector<1x16x16xf32>
      %293 = vector.shape_cast %292 : vector<1x16x16xf32> to vector<16x16xf32>
      %294 = vector.broadcast %291 : f32 to vector<16x16xf32>
      %295 = arith.mulf %294, %293 : vector<16x16xf32>
      %296 = arith.addf %290, %295 : vector<16x16xf32>
      %c14_219 = arith.constant 14 : index
      %297 = memref.load %arg3[%c14_219] : memref<98xf32, #tpu.memory_space<smem>>
      %c0_220 = arith.constant 0 : index
      %c2_221 = arith.constant 2 : index
      %c0_222 = arith.constant 0 : index
      %298 = vector.load %arg7[%c0_220, %c2_221, %c0_222] : memref<2x22x22xf32, #tpu.memory_space<vmem>>, vector<1x16x16xf32>
      %299 = vector.shape_cast %298 : vector<1x16x16xf32> to vector<16x16xf32>
      %300 = vector.broadcast %297 : f32 to vector<16x16xf32>
      %301 = arith.mulf %300, %299 : vector<16x16xf32>
      %302 = arith.addf %296, %301 : vector<16x16xf32>
      %c15_223 = arith.constant 15 : index
      %303 = memref.load %arg3[%c15_223] : memref<98xf32, #tpu.memory_space<smem>>
      %c0_224 = arith.constant 0 : index
      %c2_225 = arith.constant 2 : index
      %c1_226 = arith.constant 1 : index
      %304 = vector.load %arg7[%c0_224, %c2_225, %c1_226] : memref<2x22x22xf32, #tpu.memory_space<vmem>>, vector<1x16x16xf32>
      %305 = vector.shape_cast %304 : vector<1x16x16xf32> to vector<16x16xf32>
      %306 = vector.broadcast %303 : f32 to vector<16x16xf32>
      %307 = arith.mulf %306, %305 : vector<16x16xf32>
      %308 = arith.addf %302, %307 : vector<16x16xf32>
      %c16_227 = arith.constant 16 : index
      %309 = memref.load %arg3[%c16_227] : memref<98xf32, #tpu.memory_space<smem>>
      %c0_228 = arith.constant 0 : index
      %c2_229 = arith.constant 2 : index
      %c2_230 = arith.constant 2 : index
      %310 = vector.load %arg7[%c0_228, %c2_229, %c2_230] : memref<2x22x22xf32, #tpu.memory_space<vmem>>, vector<1x16x16xf32>
      %311 = vector.shape_cast %310 : vector<1x16x16xf32> to vector<16x16xf32>
      %312 = vector.broadcast %309 : f32 to vector<16x16xf32>
      %313 = arith.mulf %312, %311 : vector<16x16xf32>
      %314 = arith.addf %308, %313 : vector<16x16xf32>
      %c17_231 = arith.constant 17 : index
      %315 = memref.load %arg3[%c17_231] : memref<98xf32, #tpu.memory_space<smem>>
      %c0_232 = arith.constant 0 : index
      %c2_233 = arith.constant 2 : index
      %c3_234 = arith.constant 3 : index
      %316 = vector.load %arg7[%c0_232, %c2_233, %c3_234] : memref<2x22x22xf32, #tpu.memory_space<vmem>>, vector<1x16x16xf32>
      %317 = vector.shape_cast %316 : vector<1x16x16xf32> to vector<16x16xf32>
      %318 = vector.broadcast %315 : f32 to vector<16x16xf32>
      %319 = arith.mulf %318, %317 : vector<16x16xf32>
      %320 = arith.addf %314, %319 : vector<16x16xf32>
      %c18_235 = arith.constant 18 : index
      %321 = memref.load %arg3[%c18_235] : memref<98xf32, #tpu.memory_space<smem>>
      %c0_236 = arith.constant 0 : index
      %c2_237 = arith.constant 2 : index
      %c4_238 = arith.constant 4 : index
      %322 = vector.load %arg7[%c0_236, %c2_237, %c4_238] : memref<2x22x22xf32, #tpu.memory_space<vmem>>, vector<1x16x16xf32>
      %323 = vector.shape_cast %322 : vector<1x16x16xf32> to vector<16x16xf32>
      %324 = vector.broadcast %321 : f32 to vector<16x16xf32>
      %325 = arith.mulf %324, %323 : vector<16x16xf32>
      %326 = arith.addf %320, %325 : vector<16x16xf32>
      %c19 = arith.constant 19 : index
      %327 = memref.load %arg3[%c19] : memref<98xf32, #tpu.memory_space<smem>>
      %c0_239 = arith.constant 0 : index
      %c2_240 = arith.constant 2 : index
      %c5_241 = arith.constant 5 : index
      %328 = vector.load %arg7[%c0_239, %c2_240, %c5_241] : memref<2x22x22xf32, #tpu.memory_space<vmem>>, vector<1x16x16xf32>
      %329 = vector.shape_cast %328 : vector<1x16x16xf32> to vector<16x16xf32>
      %330 = vector.broadcast %327 : f32 to vector<16x16xf32>
      %331 = arith.mulf %330, %329 : vector<16x16xf32>
      %332 = arith.addf %326, %331 : vector<16x16xf32>
      %c20 = arith.constant 20 : index
      %333 = memref.load %arg3[%c20] : memref<98xf32, #tpu.memory_space<smem>>
      %c0_242 = arith.constant 0 : index
      %c2_243 = arith.constant 2 : index
      %c6_244 = arith.constant 6 : index
      %334 = vector.load %arg7[%c0_242, %c2_243, %c6_244] : memref<2x22x22xf32, #tpu.memory_space<vmem>>, vector<1x16x16xf32>
      %335 = vector.shape_cast %334 : vector<1x16x16xf32> to vector<16x16xf32>
      %336 = vector.broadcast %333 : f32 to vector<16x16xf32>
      %337 = arith.mulf %336, %335 : vector<16x16xf32>
      %338 = arith.addf %332, %337 : vector<16x16xf32>
      %c21 = arith.constant 21 : index
      %339 = memref.load %arg3[%c21] : memref<98xf32, #tpu.memory_space<smem>>
      %c0_245 = arith.constant 0 : index
      %c3_246 = arith.constant 3 : index
      %c0_247 = arith.constant 0 : index
      %340 = vector.load %arg7[%c0_245, %c3_246, %c0_247] : memref<2x22x22xf32, #tpu.memory_space<vmem>>, vector<1x16x16xf32>
      %341 = vector.shape_cast %340 : vector<1x16x16xf32> to vector<16x16xf32>
      %342 = vector.broadcast %339 : f32 to vector<16x16xf32>
      %343 = arith.mulf %342, %341 : vector<16x16xf32>
      %344 = arith.addf %338, %343 : vector<16x16xf32>
      %c22 = arith.constant 22 : index
      %345 = memref.load %arg3[%c22] : memref<98xf32, #tpu.memory_space<smem>>
      %c0_248 = arith.constant 0 : index
      %c3_249 = arith.constant 3 : index
      %c1_250 = arith.constant 1 : index
      %346 = vector.load %arg7[%c0_248, %c3_249, %c1_250] : memref<2x22x22xf32, #tpu.memory_space<vmem>>, vector<1x16x16xf32>
      %347 = vector.shape_cast %346 : vector<1x16x16xf32> to vector<16x16xf32>
      %348 = vector.broadcast %345 : f32 to vector<16x16xf32>
      %349 = arith.mulf %348, %347 : vector<16x16xf32>
      %350 = arith.addf %344, %349 : vector<16x16xf32>
      %c23 = arith.constant 23 : index
      %351 = memref.load %arg3[%c23] : memref<98xf32, #tpu.memory_space<smem>>
      %c0_251 = arith.constant 0 : index
      %c3_252 = arith.constant 3 : index
      %c2_253 = arith.constant 2 : index
      %352 = vector.load %arg7[%c0_251, %c3_252, %c2_253] : memref<2x22x22xf32, #tpu.memory_space<vmem>>, vector<1x16x16xf32>
      %353 = vector.shape_cast %352 : vector<1x16x16xf32> to vector<16x16xf32>
      %354 = vector.broadcast %351 : f32 to vector<16x16xf32>
      %355 = arith.mulf %354, %353 : vector<16x16xf32>
      %356 = arith.addf %350, %355 : vector<16x16xf32>
      %c24 = arith.constant 24 : index
      %357 = memref.load %arg3[%c24] : memref<98xf32, #tpu.memory_space<smem>>
      %c0_254 = arith.constant 0 : index
      %c3_255 = arith.constant 3 : index
      %c3_256 = arith.constant 3 : index
      %358 = vector.load %arg7[%c0_254, %c3_255, %c3_256] : memref<2x22x22xf32, #tpu.memory_space<vmem>>, vector<1x16x16xf32>
      %359 = vector.shape_cast %358 : vector<1x16x16xf32> to vector<16x16xf32>
      %360 = vector.broadcast %357 : f32 to vector<16x16xf32>
      %361 = arith.mulf %360, %359 : vector<16x16xf32>
      %362 = arith.addf %356, %361 : vector<16x16xf32>
      %c25 = arith.constant 25 : index
      %363 = memref.load %arg3[%c25] : memref<98xf32, #tpu.memory_space<smem>>
      %c0_257 = arith.constant 0 : index
      %c3_258 = arith.constant 3 : index
      %c4_259 = arith.constant 4 : index
      %364 = vector.load %arg7[%c0_257, %c3_258, %c4_259] : memref<2x22x22xf32, #tpu.memory_space<vmem>>, vector<1x16x16xf32>
      %365 = vector.shape_cast %364 : vector<1x16x16xf32> to vector<16x16xf32>
      %366 = vector.broadcast %363 : f32 to vector<16x16xf32>
      %367 = arith.mulf %366, %365 : vector<16x16xf32>
      %368 = arith.addf %362, %367 : vector<16x16xf32>
      %c26 = arith.constant 26 : index
      %369 = memref.load %arg3[%c26] : memref<98xf32, #tpu.memory_space<smem>>
      %c0_260 = arith.constant 0 : index
      %c3_261 = arith.constant 3 : index
      %c5_262 = arith.constant 5 : index
      %370 = vector.load %arg7[%c0_260, %c3_261, %c5_262] : memref<2x22x22xf32, #tpu.memory_space<vmem>>, vector<1x16x16xf32>
      %371 = vector.shape_cast %370 : vector<1x16x16xf32> to vector<16x16xf32>
      %372 = vector.broadcast %369 : f32 to vector<16x16xf32>
      %373 = arith.mulf %372, %371 : vector<16x16xf32>
      %374 = arith.addf %368, %373 : vector<16x16xf32>
      %c27 = arith.constant 27 : index
      %375 = memref.load %arg3[%c27] : memref<98xf32, #tpu.memory_space<smem>>
      %c0_263 = arith.constant 0 : index
      %c3_264 = arith.constant 3 : index
      %c6_265 = arith.constant 6 : index
      %376 = vector.load %arg7[%c0_263, %c3_264, %c6_265] : memref<2x22x22xf32, #tpu.memory_space<vmem>>, vector<1x16x16xf32>
      %377 = vector.shape_cast %376 : vector<1x16x16xf32> to vector<16x16xf32>
      %378 = vector.broadcast %375 : f32 to vector<16x16xf32>
      %379 = arith.mulf %378, %377 : vector<16x16xf32>
      %380 = arith.addf %374, %379 : vector<16x16xf32>
      %c28 = arith.constant 28 : index
      %381 = memref.load %arg3[%c28] : memref<98xf32, #tpu.memory_space<smem>>
      %c0_266 = arith.constant 0 : index
      %c4_267 = arith.constant 4 : index
      %c0_268 = arith.constant 0 : index
      %382 = vector.load %arg7[%c0_266, %c4_267, %c0_268] : memref<2x22x22xf32, #tpu.memory_space<vmem>>, vector<1x16x16xf32>
      %383 = vector.shape_cast %382 : vector<1x16x16xf32> to vector<16x16xf32>
      %384 = vector.broadcast %381 : f32 to vector<16x16xf32>
      %385 = arith.mulf %384, %383 : vector<16x16xf32>
      %386 = arith.addf %380, %385 : vector<16x16xf32>
      %c29 = arith.constant 29 : index
      %387 = memref.load %arg3[%c29] : memref<98xf32, #tpu.memory_space<smem>>
      %c0_269 = arith.constant 0 : index
      %c4_270 = arith.constant 4 : index
      %c1_271 = arith.constant 1 : index
      %388 = vector.load %arg7[%c0_269, %c4_270, %c1_271] : memref<2x22x22xf32, #tpu.memory_space<vmem>>, vector<1x16x16xf32>
      %389 = vector.shape_cast %388 : vector<1x16x16xf32> to vector<16x16xf32>
      %390 = vector.broadcast %387 : f32 to vector<16x16xf32>
      %391 = arith.mulf %390, %389 : vector<16x16xf32>
      %392 = arith.addf %386, %391 : vector<16x16xf32>
      %c30 = arith.constant 30 : index
      %393 = memref.load %arg3[%c30] : memref<98xf32, #tpu.memory_space<smem>>
      %c0_272 = arith.constant 0 : index
      %c4_273 = arith.constant 4 : index
      %c2_274 = arith.constant 2 : index
      %394 = vector.load %arg7[%c0_272, %c4_273, %c2_274] : memref<2x22x22xf32, #tpu.memory_space<vmem>>, vector<1x16x16xf32>
      %395 = vector.shape_cast %394 : vector<1x16x16xf32> to vector<16x16xf32>
      %396 = vector.broadcast %393 : f32 to vector<16x16xf32>
      %397 = arith.mulf %396, %395 : vector<16x16xf32>
      %398 = arith.addf %392, %397 : vector<16x16xf32>
      %c31 = arith.constant 31 : index
      %399 = memref.load %arg3[%c31] : memref<98xf32, #tpu.memory_space<smem>>
      %c0_275 = arith.constant 0 : index
      %c4_276 = arith.constant 4 : index
      %c3_277 = arith.constant 3 : index
      %400 = vector.load %arg7[%c0_275, %c4_276, %c3_277] : memref<2x22x22xf32, #tpu.memory_space<vmem>>, vector<1x16x16xf32>
      %401 = vector.shape_cast %400 : vector<1x16x16xf32> to vector<16x16xf32>
      %402 = vector.broadcast %399 : f32 to vector<16x16xf32>
      %403 = arith.mulf %402, %401 : vector<16x16xf32>
      %404 = arith.addf %398, %403 : vector<16x16xf32>
      %c32_278 = arith.constant 32 : index
      %405 = memref.load %arg3[%c32_278] : memref<98xf32, #tpu.memory_space<smem>>
      %c0_279 = arith.constant 0 : index
      %c4_280 = arith.constant 4 : index
      %c4_281 = arith.constant 4 : index
      %406 = vector.load %arg7[%c0_279, %c4_280, %c4_281] : memref<2x22x22xf32, #tpu.memory_space<vmem>>, vector<1x16x16xf32>
      %407 = vector.shape_cast %406 : vector<1x16x16xf32> to vector<16x16xf32>
      %408 = vector.broadcast %405 : f32 to vector<16x16xf32>
      %409 = arith.mulf %408, %407 : vector<16x16xf32>
      %410 = arith.addf %404, %409 : vector<16x16xf32>
      %c33 = arith.constant 33 : index
      %411 = memref.load %arg3[%c33] : memref<98xf32, #tpu.memory_space<smem>>
      %c0_282 = arith.constant 0 : index
      %c4_283 = arith.constant 4 : index
      %c5_284 = arith.constant 5 : index
      %412 = vector.load %arg7[%c0_282, %c4_283, %c5_284] : memref<2x22x22xf32, #tpu.memory_space<vmem>>, vector<1x16x16xf32>
      %413 = vector.shape_cast %412 : vector<1x16x16xf32> to vector<16x16xf32>
      %414 = vector.broadcast %411 : f32 to vector<16x16xf32>
      %415 = arith.mulf %414, %413 : vector<16x16xf32>
      %416 = arith.addf %410, %415 : vector<16x16xf32>
      %c34 = arith.constant 34 : index
      %417 = memref.load %arg3[%c34] : memref<98xf32, #tpu.memory_space<smem>>
      %c0_285 = arith.constant 0 : index
      %c4_286 = arith.constant 4 : index
      %c6_287 = arith.constant 6 : index
      %418 = vector.load %arg7[%c0_285, %c4_286, %c6_287] : memref<2x22x22xf32, #tpu.memory_space<vmem>>, vector<1x16x16xf32>
      %419 = vector.shape_cast %418 : vector<1x16x16xf32> to vector<16x16xf32>
      %420 = vector.broadcast %417 : f32 to vector<16x16xf32>
      %421 = arith.mulf %420, %419 : vector<16x16xf32>
      %422 = arith.addf %416, %421 : vector<16x16xf32>
      %c35 = arith.constant 35 : index
      %423 = memref.load %arg3[%c35] : memref<98xf32, #tpu.memory_space<smem>>
      %c0_288 = arith.constant 0 : index
      %c5_289 = arith.constant 5 : index
      %c0_290 = arith.constant 0 : index
      %424 = vector.load %arg7[%c0_288, %c5_289, %c0_290] : memref<2x22x22xf32, #tpu.memory_space<vmem>>, vector<1x16x16xf32>
      %425 = vector.shape_cast %424 : vector<1x16x16xf32> to vector<16x16xf32>
      %426 = vector.broadcast %423 : f32 to vector<16x16xf32>
      %427 = arith.mulf %426, %425 : vector<16x16xf32>
      %428 = arith.addf %422, %427 : vector<16x16xf32>
      %c36 = arith.constant 36 : index
      %429 = memref.load %arg3[%c36] : memref<98xf32, #tpu.memory_space<smem>>
      %c0_291 = arith.constant 0 : index
      %c5_292 = arith.constant 5 : index
      %c1_293 = arith.constant 1 : index
      %430 = vector.load %arg7[%c0_291, %c5_292, %c1_293] : memref<2x22x22xf32, #tpu.memory_space<vmem>>, vector<1x16x16xf32>
      %431 = vector.shape_cast %430 : vector<1x16x16xf32> to vector<16x16xf32>
      %432 = vector.broadcast %429 : f32 to vector<16x16xf32>
      %433 = arith.mulf %432, %431 : vector<16x16xf32>
      %434 = arith.addf %428, %433 : vector<16x16xf32>
      %c37 = arith.constant 37 : index
      %435 = memref.load %arg3[%c37] : memref<98xf32, #tpu.memory_space<smem>>
      %c0_294 = arith.constant 0 : index
      %c5_295 = arith.constant 5 : index
      %c2_296 = arith.constant 2 : index
      %436 = vector.load %arg7[%c0_294, %c5_295, %c2_296] : memref<2x22x22xf32, #tpu.memory_space<vmem>>, vector<1x16x16xf32>
      %437 = vector.shape_cast %436 : vector<1x16x16xf32> to vector<16x16xf32>
      %438 = vector.broadcast %435 : f32 to vector<16x16xf32>
      %439 = arith.mulf %438, %437 : vector<16x16xf32>
      %440 = arith.addf %434, %439 : vector<16x16xf32>
      %c38 = arith.constant 38 : index
      %441 = memref.load %arg3[%c38] : memref<98xf32, #tpu.memory_space<smem>>
      %c0_297 = arith.constant 0 : index
      %c5_298 = arith.constant 5 : index
      %c3_299 = arith.constant 3 : index
      %442 = vector.load %arg7[%c0_297, %c5_298, %c3_299] : memref<2x22x22xf32, #tpu.memory_space<vmem>>, vector<1x16x16xf32>
      %443 = vector.shape_cast %442 : vector<1x16x16xf32> to vector<16x16xf32>
      %444 = vector.broadcast %441 : f32 to vector<16x16xf32>
      %445 = arith.mulf %444, %443 : vector<16x16xf32>
      %446 = arith.addf %440, %445 : vector<16x16xf32>
      %c39 = arith.constant 39 : index
      %447 = memref.load %arg3[%c39] : memref<98xf32, #tpu.memory_space<smem>>
      %c0_300 = arith.constant 0 : index
      %c5_301 = arith.constant 5 : index
      %c4_302 = arith.constant 4 : index
      %448 = vector.load %arg7[%c0_300, %c5_301, %c4_302] : memref<2x22x22xf32, #tpu.memory_space<vmem>>, vector<1x16x16xf32>
      %449 = vector.shape_cast %448 : vector<1x16x16xf32> to vector<16x16xf32>
      %450 = vector.broadcast %447 : f32 to vector<16x16xf32>
      %451 = arith.mulf %450, %449 : vector<16x16xf32>
      %452 = arith.addf %446, %451 : vector<16x16xf32>
      %c40 = arith.constant 40 : index
      %453 = memref.load %arg3[%c40] : memref<98xf32, #tpu.memory_space<smem>>
      %c0_303 = arith.constant 0 : index
      %c5_304 = arith.constant 5 : index
      %c5_305 = arith.constant 5 : index
      %454 = vector.load %arg7[%c0_303, %c5_304, %c5_305] : memref<2x22x22xf32, #tpu.memory_space<vmem>>, vector<1x16x16xf32>
      %455 = vector.shape_cast %454 : vector<1x16x16xf32> to vector<16x16xf32>
      %456 = vector.broadcast %453 : f32 to vector<16x16xf32>
      %457 = arith.mulf %456, %455 : vector<16x16xf32>
      %458 = arith.addf %452, %457 : vector<16x16xf32>
      %c41 = arith.constant 41 : index
      %459 = memref.load %arg3[%c41] : memref<98xf32, #tpu.memory_space<smem>>
      %c0_306 = arith.constant 0 : index
      %c5_307 = arith.constant 5 : index
      %c6_308 = arith.constant 6 : index
      %460 = vector.load %arg7[%c0_306, %c5_307, %c6_308] : memref<2x22x22xf32, #tpu.memory_space<vmem>>, vector<1x16x16xf32>
      %461 = vector.shape_cast %460 : vector<1x16x16xf32> to vector<16x16xf32>
      %462 = vector.broadcast %459 : f32 to vector<16x16xf32>
      %463 = arith.mulf %462, %461 : vector<16x16xf32>
      %464 = arith.addf %458, %463 : vector<16x16xf32>
      %c42 = arith.constant 42 : index
      %465 = memref.load %arg3[%c42] : memref<98xf32, #tpu.memory_space<smem>>
      %c0_309 = arith.constant 0 : index
      %c6_310 = arith.constant 6 : index
      %c0_311 = arith.constant 0 : index
      %466 = vector.load %arg7[%c0_309, %c6_310, %c0_311] : memref<2x22x22xf32, #tpu.memory_space<vmem>>, vector<1x16x16xf32>
      %467 = vector.shape_cast %466 : vector<1x16x16xf32> to vector<16x16xf32>
      %468 = vector.broadcast %465 : f32 to vector<16x16xf32>
      %469 = arith.mulf %468, %467 : vector<16x16xf32>
      %470 = arith.addf %464, %469 : vector<16x16xf32>
      %c43 = arith.constant 43 : index
      %471 = memref.load %arg3[%c43] : memref<98xf32, #tpu.memory_space<smem>>
      %c0_312 = arith.constant 0 : index
      %c6_313 = arith.constant 6 : index
      %c1_314 = arith.constant 1 : index
      %472 = vector.load %arg7[%c0_312, %c6_313, %c1_314] : memref<2x22x22xf32, #tpu.memory_space<vmem>>, vector<1x16x16xf32>
      %473 = vector.shape_cast %472 : vector<1x16x16xf32> to vector<16x16xf32>
      %474 = vector.broadcast %471 : f32 to vector<16x16xf32>
      %475 = arith.mulf %474, %473 : vector<16x16xf32>
      %476 = arith.addf %470, %475 : vector<16x16xf32>
      %c44 = arith.constant 44 : index
      %477 = memref.load %arg3[%c44] : memref<98xf32, #tpu.memory_space<smem>>
      %c0_315 = arith.constant 0 : index
      %c6_316 = arith.constant 6 : index
      %c2_317 = arith.constant 2 : index
      %478 = vector.load %arg7[%c0_315, %c6_316, %c2_317] : memref<2x22x22xf32, #tpu.memory_space<vmem>>, vector<1x16x16xf32>
      %479 = vector.shape_cast %478 : vector<1x16x16xf32> to vector<16x16xf32>
      %480 = vector.broadcast %477 : f32 to vector<16x16xf32>
      %481 = arith.mulf %480, %479 : vector<16x16xf32>
      %482 = arith.addf %476, %481 : vector<16x16xf32>
      %c45 = arith.constant 45 : index
      %483 = memref.load %arg3[%c45] : memref<98xf32, #tpu.memory_space<smem>>
      %c0_318 = arith.constant 0 : index
      %c6_319 = arith.constant 6 : index
      %c3_320 = arith.constant 3 : index
      %484 = vector.load %arg7[%c0_318, %c6_319, %c3_320] : memref<2x22x22xf32, #tpu.memory_space<vmem>>, vector<1x16x16xf32>
      %485 = vector.shape_cast %484 : vector<1x16x16xf32> to vector<16x16xf32>
      %486 = vector.broadcast %483 : f32 to vector<16x16xf32>
      %487 = arith.mulf %486, %485 : vector<16x16xf32>
      %488 = arith.addf %482, %487 : vector<16x16xf32>
      %c46 = arith.constant 46 : index
      %489 = memref.load %arg3[%c46] : memref<98xf32, #tpu.memory_space<smem>>
      %c0_321 = arith.constant 0 : index
      %c6_322 = arith.constant 6 : index
      %c4_323 = arith.constant 4 : index
      %490 = vector.load %arg7[%c0_321, %c6_322, %c4_323] : memref<2x22x22xf32, #tpu.memory_space<vmem>>, vector<1x16x16xf32>
      %491 = vector.shape_cast %490 : vector<1x16x16xf32> to vector<16x16xf32>
      %492 = vector.broadcast %489 : f32 to vector<16x16xf32>
      %493 = arith.mulf %492, %491 : vector<16x16xf32>
      %494 = arith.addf %488, %493 : vector<16x16xf32>
      %c47 = arith.constant 47 : index
      %495 = memref.load %arg3[%c47] : memref<98xf32, #tpu.memory_space<smem>>
      %c0_324 = arith.constant 0 : index
      %c6_325 = arith.constant 6 : index
      %c5_326 = arith.constant 5 : index
      %496 = vector.load %arg7[%c0_324, %c6_325, %c5_326] : memref<2x22x22xf32, #tpu.memory_space<vmem>>, vector<1x16x16xf32>
      %497 = vector.shape_cast %496 : vector<1x16x16xf32> to vector<16x16xf32>
      %498 = vector.broadcast %495 : f32 to vector<16x16xf32>
      %499 = arith.mulf %498, %497 : vector<16x16xf32>
      %500 = arith.addf %494, %499 : vector<16x16xf32>
      %c48_327 = arith.constant 48 : index
      %501 = memref.load %arg3[%c48_327] : memref<98xf32, #tpu.memory_space<smem>>
      %c0_328 = arith.constant 0 : index
      %c6_329 = arith.constant 6 : index
      %c6_330 = arith.constant 6 : index
      %502 = vector.load %arg7[%c0_328, %c6_329, %c6_330] : memref<2x22x22xf32, #tpu.memory_space<vmem>>, vector<1x16x16xf32>
      %503 = vector.shape_cast %502 : vector<1x16x16xf32> to vector<16x16xf32>
      %504 = vector.broadcast %501 : f32 to vector<16x16xf32>
      %505 = arith.mulf %504, %503 : vector<16x16xf32>
      %506 = arith.addf %500, %505 : vector<16x16xf32>
      %c49 = arith.constant 49 : index
      %507 = memref.load %arg3[%c49] : memref<98xf32, #tpu.memory_space<smem>>
      %c1_331 = arith.constant 1 : index
      %c0_332 = arith.constant 0 : index
      %c0_333 = arith.constant 0 : index
      %508 = vector.load %arg7[%c1_331, %c0_332, %c0_333] : memref<2x22x22xf32, #tpu.memory_space<vmem>>, vector<1x16x16xf32>
      %509 = vector.shape_cast %508 : vector<1x16x16xf32> to vector<16x16xf32>
      %510 = vector.broadcast %507 : f32 to vector<16x16xf32>
      %511 = arith.mulf %510, %509 : vector<16x16xf32>
      %512 = arith.addf %506, %511 : vector<16x16xf32>
      %c50 = arith.constant 50 : index
      %513 = memref.load %arg3[%c50] : memref<98xf32, #tpu.memory_space<smem>>
      %c1_334 = arith.constant 1 : index
      %c0_335 = arith.constant 0 : index
      %c1_336 = arith.constant 1 : index
      %514 = vector.load %arg7[%c1_334, %c0_335, %c1_336] : memref<2x22x22xf32, #tpu.memory_space<vmem>>, vector<1x16x16xf32>
      %515 = vector.shape_cast %514 : vector<1x16x16xf32> to vector<16x16xf32>
      %516 = vector.broadcast %513 : f32 to vector<16x16xf32>
      %517 = arith.mulf %516, %515 : vector<16x16xf32>
      %518 = arith.addf %512, %517 : vector<16x16xf32>
      %c51 = arith.constant 51 : index
      %519 = memref.load %arg3[%c51] : memref<98xf32, #tpu.memory_space<smem>>
      %c1_337 = arith.constant 1 : index
      %c0_338 = arith.constant 0 : index
      %c2_339 = arith.constant 2 : index
      %520 = vector.load %arg7[%c1_337, %c0_338, %c2_339] : memref<2x22x22xf32, #tpu.memory_space<vmem>>, vector<1x16x16xf32>
      %521 = vector.shape_cast %520 : vector<1x16x16xf32> to vector<16x16xf32>
      %522 = vector.broadcast %519 : f32 to vector<16x16xf32>
      %523 = arith.mulf %522, %521 : vector<16x16xf32>
      %524 = arith.addf %518, %523 : vector<16x16xf32>
      %c52 = arith.constant 52 : index
      %525 = memref.load %arg3[%c52] : memref<98xf32, #tpu.memory_space<smem>>
      %c1_340 = arith.constant 1 : index
      %c0_341 = arith.constant 0 : index
      %c3_342 = arith.constant 3 : index
      %526 = vector.load %arg7[%c1_340, %c0_341, %c3_342] : memref<2x22x22xf32, #tpu.memory_space<vmem>>, vector<1x16x16xf32>
      %527 = vector.shape_cast %526 : vector<1x16x16xf32> to vector<16x16xf32>
      %528 = vector.broadcast %525 : f32 to vector<16x16xf32>
      %529 = arith.mulf %528, %527 : vector<16x16xf32>
      %530 = arith.addf %524, %529 : vector<16x16xf32>
      %c53 = arith.constant 53 : index
      %531 = memref.load %arg3[%c53] : memref<98xf32, #tpu.memory_space<smem>>
      %c1_343 = arith.constant 1 : index
      %c0_344 = arith.constant 0 : index
      %c4_345 = arith.constant 4 : index
      %532 = vector.load %arg7[%c1_343, %c0_344, %c4_345] : memref<2x22x22xf32, #tpu.memory_space<vmem>>, vector<1x16x16xf32>
      %533 = vector.shape_cast %532 : vector<1x16x16xf32> to vector<16x16xf32>
      %534 = vector.broadcast %531 : f32 to vector<16x16xf32>
      %535 = arith.mulf %534, %533 : vector<16x16xf32>
      %536 = arith.addf %530, %535 : vector<16x16xf32>
      %c54 = arith.constant 54 : index
      %537 = memref.load %arg3[%c54] : memref<98xf32, #tpu.memory_space<smem>>
      %c1_346 = arith.constant 1 : index
      %c0_347 = arith.constant 0 : index
      %c5_348 = arith.constant 5 : index
      %538 = vector.load %arg7[%c1_346, %c0_347, %c5_348] : memref<2x22x22xf32, #tpu.memory_space<vmem>>, vector<1x16x16xf32>
      %539 = vector.shape_cast %538 : vector<1x16x16xf32> to vector<16x16xf32>
      %540 = vector.broadcast %537 : f32 to vector<16x16xf32>
      %541 = arith.mulf %540, %539 : vector<16x16xf32>
      %542 = arith.addf %536, %541 : vector<16x16xf32>
      %c55 = arith.constant 55 : index
      %543 = memref.load %arg3[%c55] : memref<98xf32, #tpu.memory_space<smem>>
      %c1_349 = arith.constant 1 : index
      %c0_350 = arith.constant 0 : index
      %c6_351 = arith.constant 6 : index
      %544 = vector.load %arg7[%c1_349, %c0_350, %c6_351] : memref<2x22x22xf32, #tpu.memory_space<vmem>>, vector<1x16x16xf32>
      %545 = vector.shape_cast %544 : vector<1x16x16xf32> to vector<16x16xf32>
      %546 = vector.broadcast %543 : f32 to vector<16x16xf32>
      %547 = arith.mulf %546, %545 : vector<16x16xf32>
      %548 = arith.addf %542, %547 : vector<16x16xf32>
      %c56 = arith.constant 56 : index
      %549 = memref.load %arg3[%c56] : memref<98xf32, #tpu.memory_space<smem>>
      %c1_352 = arith.constant 1 : index
      %c1_353 = arith.constant 1 : index
      %c0_354 = arith.constant 0 : index
      %550 = vector.load %arg7[%c1_352, %c1_353, %c0_354] : memref<2x22x22xf32, #tpu.memory_space<vmem>>, vector<1x16x16xf32>
      %551 = vector.shape_cast %550 : vector<1x16x16xf32> to vector<16x16xf32>
      %552 = vector.broadcast %549 : f32 to vector<16x16xf32>
      %553 = arith.mulf %552, %551 : vector<16x16xf32>
      %554 = arith.addf %548, %553 : vector<16x16xf32>
      %c57 = arith.constant 57 : index
      %555 = memref.load %arg3[%c57] : memref<98xf32, #tpu.memory_space<smem>>
      %c1_355 = arith.constant 1 : index
      %c1_356 = arith.constant 1 : index
      %c1_357 = arith.constant 1 : index
      %556 = vector.load %arg7[%c1_355, %c1_356, %c1_357] : memref<2x22x22xf32, #tpu.memory_space<vmem>>, vector<1x16x16xf32>
      %557 = vector.shape_cast %556 : vector<1x16x16xf32> to vector<16x16xf32>
      %558 = vector.broadcast %555 : f32 to vector<16x16xf32>
      %559 = arith.mulf %558, %557 : vector<16x16xf32>
      %560 = arith.addf %554, %559 : vector<16x16xf32>
      %c58 = arith.constant 58 : index
      %561 = memref.load %arg3[%c58] : memref<98xf32, #tpu.memory_space<smem>>
      %c1_358 = arith.constant 1 : index
      %c1_359 = arith.constant 1 : index
      %c2_360 = arith.constant 2 : index
      %562 = vector.load %arg7[%c1_358, %c1_359, %c2_360] : memref<2x22x22xf32, #tpu.memory_space<vmem>>, vector<1x16x16xf32>
      %563 = vector.shape_cast %562 : vector<1x16x16xf32> to vector<16x16xf32>
      %564 = vector.broadcast %561 : f32 to vector<16x16xf32>
      %565 = arith.mulf %564, %563 : vector<16x16xf32>
      %566 = arith.addf %560, %565 : vector<16x16xf32>
      %c59 = arith.constant 59 : index
      %567 = memref.load %arg3[%c59] : memref<98xf32, #tpu.memory_space<smem>>
      %c1_361 = arith.constant 1 : index
      %c1_362 = arith.constant 1 : index
      %c3_363 = arith.constant 3 : index
      %568 = vector.load %arg7[%c1_361, %c1_362, %c3_363] : memref<2x22x22xf32, #tpu.memory_space<vmem>>, vector<1x16x16xf32>
      %569 = vector.shape_cast %568 : vector<1x16x16xf32> to vector<16x16xf32>
      %570 = vector.broadcast %567 : f32 to vector<16x16xf32>
      %571 = arith.mulf %570, %569 : vector<16x16xf32>
      %572 = arith.addf %566, %571 : vector<16x16xf32>
      %c60 = arith.constant 60 : index
      %573 = memref.load %arg3[%c60] : memref<98xf32, #tpu.memory_space<smem>>
      %c1_364 = arith.constant 1 : index
      %c1_365 = arith.constant 1 : index
      %c4_366 = arith.constant 4 : index
      %574 = vector.load %arg7[%c1_364, %c1_365, %c4_366] : memref<2x22x22xf32, #tpu.memory_space<vmem>>, vector<1x16x16xf32>
      %575 = vector.shape_cast %574 : vector<1x16x16xf32> to vector<16x16xf32>
      %576 = vector.broadcast %573 : f32 to vector<16x16xf32>
      %577 = arith.mulf %576, %575 : vector<16x16xf32>
      %578 = arith.addf %572, %577 : vector<16x16xf32>
      %c61 = arith.constant 61 : index
      %579 = memref.load %arg3[%c61] : memref<98xf32, #tpu.memory_space<smem>>
      %c1_367 = arith.constant 1 : index
      %c1_368 = arith.constant 1 : index
      %c5_369 = arith.constant 5 : index
      %580 = vector.load %arg7[%c1_367, %c1_368, %c5_369] : memref<2x22x22xf32, #tpu.memory_space<vmem>>, vector<1x16x16xf32>
      %581 = vector.shape_cast %580 : vector<1x16x16xf32> to vector<16x16xf32>
      %582 = vector.broadcast %579 : f32 to vector<16x16xf32>
      %583 = arith.mulf %582, %581 : vector<16x16xf32>
      %584 = arith.addf %578, %583 : vector<16x16xf32>
      %c62 = arith.constant 62 : index
      %585 = memref.load %arg3[%c62] : memref<98xf32, #tpu.memory_space<smem>>
      %c1_370 = arith.constant 1 : index
      %c1_371 = arith.constant 1 : index
      %c6_372 = arith.constant 6 : index
      %586 = vector.load %arg7[%c1_370, %c1_371, %c6_372] : memref<2x22x22xf32, #tpu.memory_space<vmem>>, vector<1x16x16xf32>
      %587 = vector.shape_cast %586 : vector<1x16x16xf32> to vector<16x16xf32>
      %588 = vector.broadcast %585 : f32 to vector<16x16xf32>
      %589 = arith.mulf %588, %587 : vector<16x16xf32>
      %590 = arith.addf %584, %589 : vector<16x16xf32>
      %c63 = arith.constant 63 : index
      %591 = memref.load %arg3[%c63] : memref<98xf32, #tpu.memory_space<smem>>
      %c1_373 = arith.constant 1 : index
      %c2_374 = arith.constant 2 : index
      %c0_375 = arith.constant 0 : index
      %592 = vector.load %arg7[%c1_373, %c2_374, %c0_375] : memref<2x22x22xf32, #tpu.memory_space<vmem>>, vector<1x16x16xf32>
      %593 = vector.shape_cast %592 : vector<1x16x16xf32> to vector<16x16xf32>
      %594 = vector.broadcast %591 : f32 to vector<16x16xf32>
      %595 = arith.mulf %594, %593 : vector<16x16xf32>
      %596 = arith.addf %590, %595 : vector<16x16xf32>
      %c64_376 = arith.constant 64 : index
      %597 = memref.load %arg3[%c64_376] : memref<98xf32, #tpu.memory_space<smem>>
      %c1_377 = arith.constant 1 : index
      %c2_378 = arith.constant 2 : index
      %c1_379 = arith.constant 1 : index
      %598 = vector.load %arg7[%c1_377, %c2_378, %c1_379] : memref<2x22x22xf32, #tpu.memory_space<vmem>>, vector<1x16x16xf32>
      %599 = vector.shape_cast %598 : vector<1x16x16xf32> to vector<16x16xf32>
      %600 = vector.broadcast %597 : f32 to vector<16x16xf32>
      %601 = arith.mulf %600, %599 : vector<16x16xf32>
      %602 = arith.addf %596, %601 : vector<16x16xf32>
      %c65 = arith.constant 65 : index
      %603 = memref.load %arg3[%c65] : memref<98xf32, #tpu.memory_space<smem>>
      %c1_380 = arith.constant 1 : index
      %c2_381 = arith.constant 2 : index
      %c2_382 = arith.constant 2 : index
      %604 = vector.load %arg7[%c1_380, %c2_381, %c2_382] : memref<2x22x22xf32, #tpu.memory_space<vmem>>, vector<1x16x16xf32>
      %605 = vector.shape_cast %604 : vector<1x16x16xf32> to vector<16x16xf32>
      %606 = vector.broadcast %603 : f32 to vector<16x16xf32>
      %607 = arith.mulf %606, %605 : vector<16x16xf32>
      %608 = arith.addf %602, %607 : vector<16x16xf32>
      %c66 = arith.constant 66 : index
      %609 = memref.load %arg3[%c66] : memref<98xf32, #tpu.memory_space<smem>>
      %c1_383 = arith.constant 1 : index
      %c2_384 = arith.constant 2 : index
      %c3_385 = arith.constant 3 : index
      %610 = vector.load %arg7[%c1_383, %c2_384, %c3_385] : memref<2x22x22xf32, #tpu.memory_space<vmem>>, vector<1x16x16xf32>
      %611 = vector.shape_cast %610 : vector<1x16x16xf32> to vector<16x16xf32>
      %612 = vector.broadcast %609 : f32 to vector<16x16xf32>
      %613 = arith.mulf %612, %611 : vector<16x16xf32>
      %614 = arith.addf %608, %613 : vector<16x16xf32>
      %c67 = arith.constant 67 : index
      %615 = memref.load %arg3[%c67] : memref<98xf32, #tpu.memory_space<smem>>
      %c1_386 = arith.constant 1 : index
      %c2_387 = arith.constant 2 : index
      %c4_388 = arith.constant 4 : index
      %616 = vector.load %arg7[%c1_386, %c2_387, %c4_388] : memref<2x22x22xf32, #tpu.memory_space<vmem>>, vector<1x16x16xf32>
      %617 = vector.shape_cast %616 : vector<1x16x16xf32> to vector<16x16xf32>
      %618 = vector.broadcast %615 : f32 to vector<16x16xf32>
      %619 = arith.mulf %618, %617 : vector<16x16xf32>
      %620 = arith.addf %614, %619 : vector<16x16xf32>
      %c68 = arith.constant 68 : index
      %621 = memref.load %arg3[%c68] : memref<98xf32, #tpu.memory_space<smem>>
      %c1_389 = arith.constant 1 : index
      %c2_390 = arith.constant 2 : index
      %c5_391 = arith.constant 5 : index
      %622 = vector.load %arg7[%c1_389, %c2_390, %c5_391] : memref<2x22x22xf32, #tpu.memory_space<vmem>>, vector<1x16x16xf32>
      %623 = vector.shape_cast %622 : vector<1x16x16xf32> to vector<16x16xf32>
      %624 = vector.broadcast %621 : f32 to vector<16x16xf32>
      %625 = arith.mulf %624, %623 : vector<16x16xf32>
      %626 = arith.addf %620, %625 : vector<16x16xf32>
      %c69 = arith.constant 69 : index
      %627 = memref.load %arg3[%c69] : memref<98xf32, #tpu.memory_space<smem>>
      %c1_392 = arith.constant 1 : index
      %c2_393 = arith.constant 2 : index
      %c6_394 = arith.constant 6 : index
      %628 = vector.load %arg7[%c1_392, %c2_393, %c6_394] : memref<2x22x22xf32, #tpu.memory_space<vmem>>, vector<1x16x16xf32>
      %629 = vector.shape_cast %628 : vector<1x16x16xf32> to vector<16x16xf32>
      %630 = vector.broadcast %627 : f32 to vector<16x16xf32>
      %631 = arith.mulf %630, %629 : vector<16x16xf32>
      %632 = arith.addf %626, %631 : vector<16x16xf32>
      %c70 = arith.constant 70 : index
      %633 = memref.load %arg3[%c70] : memref<98xf32, #tpu.memory_space<smem>>
      %c1_395 = arith.constant 1 : index
      %c3_396 = arith.constant 3 : index
      %c0_397 = arith.constant 0 : index
      %634 = vector.load %arg7[%c1_395, %c3_396, %c0_397] : memref<2x22x22xf32, #tpu.memory_space<vmem>>, vector<1x16x16xf32>
      %635 = vector.shape_cast %634 : vector<1x16x16xf32> to vector<16x16xf32>
      %636 = vector.broadcast %633 : f32 to vector<16x16xf32>
      %637 = arith.mulf %636, %635 : vector<16x16xf32>
      %638 = arith.addf %632, %637 : vector<16x16xf32>
      %c71 = arith.constant 71 : index
      %639 = memref.load %arg3[%c71] : memref<98xf32, #tpu.memory_space<smem>>
      %c1_398 = arith.constant 1 : index
      %c3_399 = arith.constant 3 : index
      %c1_400 = arith.constant 1 : index
      %640 = vector.load %arg7[%c1_398, %c3_399, %c1_400] : memref<2x22x22xf32, #tpu.memory_space<vmem>>, vector<1x16x16xf32>
      %641 = vector.shape_cast %640 : vector<1x16x16xf32> to vector<16x16xf32>
      %642 = vector.broadcast %639 : f32 to vector<16x16xf32>
      %643 = arith.mulf %642, %641 : vector<16x16xf32>
      %644 = arith.addf %638, %643 : vector<16x16xf32>
      %c72 = arith.constant 72 : index
      %645 = memref.load %arg3[%c72] : memref<98xf32, #tpu.memory_space<smem>>
      %c1_401 = arith.constant 1 : index
      %c3_402 = arith.constant 3 : index
      %c2_403 = arith.constant 2 : index
      %646 = vector.load %arg7[%c1_401, %c3_402, %c2_403] : memref<2x22x22xf32, #tpu.memory_space<vmem>>, vector<1x16x16xf32>
      %647 = vector.shape_cast %646 : vector<1x16x16xf32> to vector<16x16xf32>
      %648 = vector.broadcast %645 : f32 to vector<16x16xf32>
      %649 = arith.mulf %648, %647 : vector<16x16xf32>
      %650 = arith.addf %644, %649 : vector<16x16xf32>
      %c73 = arith.constant 73 : index
      %651 = memref.load %arg3[%c73] : memref<98xf32, #tpu.memory_space<smem>>
      %c1_404 = arith.constant 1 : index
      %c3_405 = arith.constant 3 : index
      %c3_406 = arith.constant 3 : index
      %652 = vector.load %arg7[%c1_404, %c3_405, %c3_406] : memref<2x22x22xf32, #tpu.memory_space<vmem>>, vector<1x16x16xf32>
      %653 = vector.shape_cast %652 : vector<1x16x16xf32> to vector<16x16xf32>
      %654 = vector.broadcast %651 : f32 to vector<16x16xf32>
      %655 = arith.mulf %654, %653 : vector<16x16xf32>
      %656 = arith.addf %650, %655 : vector<16x16xf32>
      %c74 = arith.constant 74 : index
      %657 = memref.load %arg3[%c74] : memref<98xf32, #tpu.memory_space<smem>>
      %c1_407 = arith.constant 1 : index
      %c3_408 = arith.constant 3 : index
      %c4_409 = arith.constant 4 : index
      %658 = vector.load %arg7[%c1_407, %c3_408, %c4_409] : memref<2x22x22xf32, #tpu.memory_space<vmem>>, vector<1x16x16xf32>
      %659 = vector.shape_cast %658 : vector<1x16x16xf32> to vector<16x16xf32>
      %660 = vector.broadcast %657 : f32 to vector<16x16xf32>
      %661 = arith.mulf %660, %659 : vector<16x16xf32>
      %662 = arith.addf %656, %661 : vector<16x16xf32>
      %c75 = arith.constant 75 : index
      %663 = memref.load %arg3[%c75] : memref<98xf32, #tpu.memory_space<smem>>
      %c1_410 = arith.constant 1 : index
      %c3_411 = arith.constant 3 : index
      %c5_412 = arith.constant 5 : index
      %664 = vector.load %arg7[%c1_410, %c3_411, %c5_412] : memref<2x22x22xf32, #tpu.memory_space<vmem>>, vector<1x16x16xf32>
      %665 = vector.shape_cast %664 : vector<1x16x16xf32> to vector<16x16xf32>
      %666 = vector.broadcast %663 : f32 to vector<16x16xf32>
      %667 = arith.mulf %666, %665 : vector<16x16xf32>
      %668 = arith.addf %662, %667 : vector<16x16xf32>
      %c76 = arith.constant 76 : index
      %669 = memref.load %arg3[%c76] : memref<98xf32, #tpu.memory_space<smem>>
      %c1_413 = arith.constant 1 : index
      %c3_414 = arith.constant 3 : index
      %c6_415 = arith.constant 6 : index
      %670 = vector.load %arg7[%c1_413, %c3_414, %c6_415] : memref<2x22x22xf32, #tpu.memory_space<vmem>>, vector<1x16x16xf32>
      %671 = vector.shape_cast %670 : vector<1x16x16xf32> to vector<16x16xf32>
      %672 = vector.broadcast %669 : f32 to vector<16x16xf32>
      %673 = arith.mulf %672, %671 : vector<16x16xf32>
      %674 = arith.addf %668, %673 : vector<16x16xf32>
      %c77 = arith.constant 77 : index
      %675 = memref.load %arg3[%c77] : memref<98xf32, #tpu.memory_space<smem>>
      %c1_416 = arith.constant 1 : index
      %c4_417 = arith.constant 4 : index
      %c0_418 = arith.constant 0 : index
      %676 = vector.load %arg7[%c1_416, %c4_417, %c0_418] : memref<2x22x22xf32, #tpu.memory_space<vmem>>, vector<1x16x16xf32>
      %677 = vector.shape_cast %676 : vector<1x16x16xf32> to vector<16x16xf32>
      %678 = vector.broadcast %675 : f32 to vector<16x16xf32>
      %679 = arith.mulf %678, %677 : vector<16x16xf32>
      %680 = arith.addf %674, %679 : vector<16x16xf32>
      %c78 = arith.constant 78 : index
      %681 = memref.load %arg3[%c78] : memref<98xf32, #tpu.memory_space<smem>>
      %c1_419 = arith.constant 1 : index
      %c4_420 = arith.constant 4 : index
      %c1_421 = arith.constant 1 : index
      %682 = vector.load %arg7[%c1_419, %c4_420, %c1_421] : memref<2x22x22xf32, #tpu.memory_space<vmem>>, vector<1x16x16xf32>
      %683 = vector.shape_cast %682 : vector<1x16x16xf32> to vector<16x16xf32>
      %684 = vector.broadcast %681 : f32 to vector<16x16xf32>
      %685 = arith.mulf %684, %683 : vector<16x16xf32>
      %686 = arith.addf %680, %685 : vector<16x16xf32>
      %c79 = arith.constant 79 : index
      %687 = memref.load %arg3[%c79] : memref<98xf32, #tpu.memory_space<smem>>
      %c1_422 = arith.constant 1 : index
      %c4_423 = arith.constant 4 : index
      %c2_424 = arith.constant 2 : index
      %688 = vector.load %arg7[%c1_422, %c4_423, %c2_424] : memref<2x22x22xf32, #tpu.memory_space<vmem>>, vector<1x16x16xf32>
      %689 = vector.shape_cast %688 : vector<1x16x16xf32> to vector<16x16xf32>
      %690 = vector.broadcast %687 : f32 to vector<16x16xf32>
      %691 = arith.mulf %690, %689 : vector<16x16xf32>
      %692 = arith.addf %686, %691 : vector<16x16xf32>
      %c80_425 = arith.constant 80 : index
      %693 = memref.load %arg3[%c80_425] : memref<98xf32, #tpu.memory_space<smem>>
      %c1_426 = arith.constant 1 : index
      %c4_427 = arith.constant 4 : index
      %c3_428 = arith.constant 3 : index
      %694 = vector.load %arg7[%c1_426, %c4_427, %c3_428] : memref<2x22x22xf32, #tpu.memory_space<vmem>>, vector<1x16x16xf32>
      %695 = vector.shape_cast %694 : vector<1x16x16xf32> to vector<16x16xf32>
      %696 = vector.broadcast %693 : f32 to vector<16x16xf32>
      %697 = arith.mulf %696, %695 : vector<16x16xf32>
      %698 = arith.addf %692, %697 : vector<16x16xf32>
      %c81 = arith.constant 81 : index
      %699 = memref.load %arg3[%c81] : memref<98xf32, #tpu.memory_space<smem>>
      %c1_429 = arith.constant 1 : index
      %c4_430 = arith.constant 4 : index
      %c4_431 = arith.constant 4 : index
      %700 = vector.load %arg7[%c1_429, %c4_430, %c4_431] : memref<2x22x22xf32, #tpu.memory_space<vmem>>, vector<1x16x16xf32>
      %701 = vector.shape_cast %700 : vector<1x16x16xf32> to vector<16x16xf32>
      %702 = vector.broadcast %699 : f32 to vector<16x16xf32>
      %703 = arith.mulf %702, %701 : vector<16x16xf32>
      %704 = arith.addf %698, %703 : vector<16x16xf32>
      %c82 = arith.constant 82 : index
      %705 = memref.load %arg3[%c82] : memref<98xf32, #tpu.memory_space<smem>>
      %c1_432 = arith.constant 1 : index
      %c4_433 = arith.constant 4 : index
      %c5_434 = arith.constant 5 : index
      %706 = vector.load %arg7[%c1_432, %c4_433, %c5_434] : memref<2x22x22xf32, #tpu.memory_space<vmem>>, vector<1x16x16xf32>
      %707 = vector.shape_cast %706 : vector<1x16x16xf32> to vector<16x16xf32>
      %708 = vector.broadcast %705 : f32 to vector<16x16xf32>
      %709 = arith.mulf %708, %707 : vector<16x16xf32>
      %710 = arith.addf %704, %709 : vector<16x16xf32>
      %c83 = arith.constant 83 : index
      %711 = memref.load %arg3[%c83] : memref<98xf32, #tpu.memory_space<smem>>
      %c1_435 = arith.constant 1 : index
      %c4_436 = arith.constant 4 : index
      %c6_437 = arith.constant 6 : index
      %712 = vector.load %arg7[%c1_435, %c4_436, %c6_437] : memref<2x22x22xf32, #tpu.memory_space<vmem>>, vector<1x16x16xf32>
      %713 = vector.shape_cast %712 : vector<1x16x16xf32> to vector<16x16xf32>
      %714 = vector.broadcast %711 : f32 to vector<16x16xf32>
      %715 = arith.mulf %714, %713 : vector<16x16xf32>
      %716 = arith.addf %710, %715 : vector<16x16xf32>
      %c84 = arith.constant 84 : index
      %717 = memref.load %arg3[%c84] : memref<98xf32, #tpu.memory_space<smem>>
      %c1_438 = arith.constant 1 : index
      %c5_439 = arith.constant 5 : index
      %c0_440 = arith.constant 0 : index
      %718 = vector.load %arg7[%c1_438, %c5_439, %c0_440] : memref<2x22x22xf32, #tpu.memory_space<vmem>>, vector<1x16x16xf32>
      %719 = vector.shape_cast %718 : vector<1x16x16xf32> to vector<16x16xf32>
      %720 = vector.broadcast %717 : f32 to vector<16x16xf32>
      %721 = arith.mulf %720, %719 : vector<16x16xf32>
      %722 = arith.addf %716, %721 : vector<16x16xf32>
      %c85 = arith.constant 85 : index
      %723 = memref.load %arg3[%c85] : memref<98xf32, #tpu.memory_space<smem>>
      %c1_441 = arith.constant 1 : index
      %c5_442 = arith.constant 5 : index
      %c1_443 = arith.constant 1 : index
      %724 = vector.load %arg7[%c1_441, %c5_442, %c1_443] : memref<2x22x22xf32, #tpu.memory_space<vmem>>, vector<1x16x16xf32>
      %725 = vector.shape_cast %724 : vector<1x16x16xf32> to vector<16x16xf32>
      %726 = vector.broadcast %723 : f32 to vector<16x16xf32>
      %727 = arith.mulf %726, %725 : vector<16x16xf32>
      %728 = arith.addf %722, %727 : vector<16x16xf32>
      %c86 = arith.constant 86 : index
      %729 = memref.load %arg3[%c86] : memref<98xf32, #tpu.memory_space<smem>>
      %c1_444 = arith.constant 1 : index
      %c5_445 = arith.constant 5 : index
      %c2_446 = arith.constant 2 : index
      %730 = vector.load %arg7[%c1_444, %c5_445, %c2_446] : memref<2x22x22xf32, #tpu.memory_space<vmem>>, vector<1x16x16xf32>
      %731 = vector.shape_cast %730 : vector<1x16x16xf32> to vector<16x16xf32>
      %732 = vector.broadcast %729 : f32 to vector<16x16xf32>
      %733 = arith.mulf %732, %731 : vector<16x16xf32>
      %734 = arith.addf %728, %733 : vector<16x16xf32>
      %c87 = arith.constant 87 : index
      %735 = memref.load %arg3[%c87] : memref<98xf32, #tpu.memory_space<smem>>
      %c1_447 = arith.constant 1 : index
      %c5_448 = arith.constant 5 : index
      %c3_449 = arith.constant 3 : index
      %736 = vector.load %arg7[%c1_447, %c5_448, %c3_449] : memref<2x22x22xf32, #tpu.memory_space<vmem>>, vector<1x16x16xf32>
      %737 = vector.shape_cast %736 : vector<1x16x16xf32> to vector<16x16xf32>
      %738 = vector.broadcast %735 : f32 to vector<16x16xf32>
      %739 = arith.mulf %738, %737 : vector<16x16xf32>
      %740 = arith.addf %734, %739 : vector<16x16xf32>
      %c88 = arith.constant 88 : index
      %741 = memref.load %arg3[%c88] : memref<98xf32, #tpu.memory_space<smem>>
      %c1_450 = arith.constant 1 : index
      %c5_451 = arith.constant 5 : index
      %c4_452 = arith.constant 4 : index
      %742 = vector.load %arg7[%c1_450, %c5_451, %c4_452] : memref<2x22x22xf32, #tpu.memory_space<vmem>>, vector<1x16x16xf32>
      %743 = vector.shape_cast %742 : vector<1x16x16xf32> to vector<16x16xf32>
      %744 = vector.broadcast %741 : f32 to vector<16x16xf32>
      %745 = arith.mulf %744, %743 : vector<16x16xf32>
      %746 = arith.addf %740, %745 : vector<16x16xf32>
      %c89 = arith.constant 89 : index
      %747 = memref.load %arg3[%c89] : memref<98xf32, #tpu.memory_space<smem>>
      %c1_453 = arith.constant 1 : index
      %c5_454 = arith.constant 5 : index
      %c5_455 = arith.constant 5 : index
      %748 = vector.load %arg7[%c1_453, %c5_454, %c5_455] : memref<2x22x22xf32, #tpu.memory_space<vmem>>, vector<1x16x16xf32>
      %749 = vector.shape_cast %748 : vector<1x16x16xf32> to vector<16x16xf32>
      %750 = vector.broadcast %747 : f32 to vector<16x16xf32>
      %751 = arith.mulf %750, %749 : vector<16x16xf32>
      %752 = arith.addf %746, %751 : vector<16x16xf32>
      %c90 = arith.constant 90 : index
      %753 = memref.load %arg3[%c90] : memref<98xf32, #tpu.memory_space<smem>>
      %c1_456 = arith.constant 1 : index
      %c5_457 = arith.constant 5 : index
      %c6_458 = arith.constant 6 : index
      %754 = vector.load %arg7[%c1_456, %c5_457, %c6_458] : memref<2x22x22xf32, #tpu.memory_space<vmem>>, vector<1x16x16xf32>
      %755 = vector.shape_cast %754 : vector<1x16x16xf32> to vector<16x16xf32>
      %756 = vector.broadcast %753 : f32 to vector<16x16xf32>
      %757 = arith.mulf %756, %755 : vector<16x16xf32>
      %758 = arith.addf %752, %757 : vector<16x16xf32>
      %c91 = arith.constant 91 : index
      %759 = memref.load %arg3[%c91] : memref<98xf32, #tpu.memory_space<smem>>
      %c1_459 = arith.constant 1 : index
      %c6_460 = arith.constant 6 : index
      %c0_461 = arith.constant 0 : index
      %760 = vector.load %arg7[%c1_459, %c6_460, %c0_461] : memref<2x22x22xf32, #tpu.memory_space<vmem>>, vector<1x16x16xf32>
      %761 = vector.shape_cast %760 : vector<1x16x16xf32> to vector<16x16xf32>
      %762 = vector.broadcast %759 : f32 to vector<16x16xf32>
      %763 = arith.mulf %762, %761 : vector<16x16xf32>
      %764 = arith.addf %758, %763 : vector<16x16xf32>
      %c92 = arith.constant 92 : index
      %765 = memref.load %arg3[%c92] : memref<98xf32, #tpu.memory_space<smem>>
      %c1_462 = arith.constant 1 : index
      %c6_463 = arith.constant 6 : index
      %c1_464 = arith.constant 1 : index
      %766 = vector.load %arg7[%c1_462, %c6_463, %c1_464] : memref<2x22x22xf32, #tpu.memory_space<vmem>>, vector<1x16x16xf32>
      %767 = vector.shape_cast %766 : vector<1x16x16xf32> to vector<16x16xf32>
      %768 = vector.broadcast %765 : f32 to vector<16x16xf32>
      %769 = arith.mulf %768, %767 : vector<16x16xf32>
      %770 = arith.addf %764, %769 : vector<16x16xf32>
      %c93 = arith.constant 93 : index
      %771 = memref.load %arg3[%c93] : memref<98xf32, #tpu.memory_space<smem>>
      %c1_465 = arith.constant 1 : index
      %c6_466 = arith.constant 6 : index
      %c2_467 = arith.constant 2 : index
      %772 = vector.load %arg7[%c1_465, %c6_466, %c2_467] : memref<2x22x22xf32, #tpu.memory_space<vmem>>, vector<1x16x16xf32>
      %773 = vector.shape_cast %772 : vector<1x16x16xf32> to vector<16x16xf32>
      %774 = vector.broadcast %771 : f32 to vector<16x16xf32>
      %775 = arith.mulf %774, %773 : vector<16x16xf32>
      %776 = arith.addf %770, %775 : vector<16x16xf32>
      %c94 = arith.constant 94 : index
      %777 = memref.load %arg3[%c94] : memref<98xf32, #tpu.memory_space<smem>>
      %c1_468 = arith.constant 1 : index
      %c6_469 = arith.constant 6 : index
      %c3_470 = arith.constant 3 : index
      %778 = vector.load %arg7[%c1_468, %c6_469, %c3_470] : memref<2x22x22xf32, #tpu.memory_space<vmem>>, vector<1x16x16xf32>
      %779 = vector.shape_cast %778 : vector<1x16x16xf32> to vector<16x16xf32>
      %780 = vector.broadcast %777 : f32 to vector<16x16xf32>
      %781 = arith.mulf %780, %779 : vector<16x16xf32>
      %782 = arith.addf %776, %781 : vector<16x16xf32>
      %c95 = arith.constant 95 : index
      %783 = memref.load %arg3[%c95] : memref<98xf32, #tpu.memory_space<smem>>
      %c1_471 = arith.constant 1 : index
      %c6_472 = arith.constant 6 : index
      %c4_473 = arith.constant 4 : index
      %784 = vector.load %arg7[%c1_471, %c6_472, %c4_473] : memref<2x22x22xf32, #tpu.memory_space<vmem>>, vector<1x16x16xf32>
      %785 = vector.shape_cast %784 : vector<1x16x16xf32> to vector<16x16xf32>
      %786 = vector.broadcast %783 : f32 to vector<16x16xf32>
      %787 = arith.mulf %786, %785 : vector<16x16xf32>
      %788 = arith.addf %782, %787 : vector<16x16xf32>
      %c96_474 = arith.constant 96 : index
      %789 = memref.load %arg3[%c96_474] : memref<98xf32, #tpu.memory_space<smem>>
      %c1_475 = arith.constant 1 : index
      %c6_476 = arith.constant 6 : index
      %c5_477 = arith.constant 5 : index
      %790 = vector.load %arg7[%c1_475, %c6_476, %c5_477] : memref<2x22x22xf32, #tpu.memory_space<vmem>>, vector<1x16x16xf32>
      %791 = vector.shape_cast %790 : vector<1x16x16xf32> to vector<16x16xf32>
      %792 = vector.broadcast %789 : f32 to vector<16x16xf32>
      %793 = arith.mulf %792, %791 : vector<16x16xf32>
      %794 = arith.addf %788, %793 : vector<16x16xf32>
      %c97 = arith.constant 97 : index
      %795 = memref.load %arg3[%c97] : memref<98xf32, #tpu.memory_space<smem>>
      %c1_478 = arith.constant 1 : index
      %c6_479 = arith.constant 6 : index
      %c6_480 = arith.constant 6 : index
      %796 = vector.load %arg7[%c1_478, %c6_479, %c6_480] : memref<2x22x22xf32, #tpu.memory_space<vmem>>, vector<1x16x16xf32>
      %797 = vector.shape_cast %796 : vector<1x16x16xf32> to vector<16x16xf32>
      %798 = vector.broadcast %795 : f32 to vector<16x16xf32>
      %799 = arith.mulf %798, %797 : vector<16x16xf32>
      %800 = arith.addf %794, %799 : vector<16x16xf32>
      %801 = arith.negf %800 : vector<16x16xf32>
      %802 = math.exp %801 : vector<16x16xf32>
      %cst_481 = arith.constant 1.000000e+00 : f32
      %803 = vector.broadcast %cst_481 : f32 to vector<16x16xf32>
      %804 = arith.addf %803, %802 : vector<16x16xf32>
      %805 = arith.divf %803, %804 : vector<16x16xf32>
      %c0_482 = arith.constant 0 : index
      %c0_483 = arith.constant 0 : index
      %c0_484 = arith.constant 0 : index
      %c0_485 = arith.constant 0 : index
      %806 = vector.load %arg4[%c0_482, %c0_483, %c0_484, %c0_485] : memref<1x1x16x16xf32, #tpu.memory_space<vmem>>, vector<1x1x16x16xf32>
      %807 = vector.shape_cast %806 : vector<1x1x16x16xf32> to vector<16x16xf32>
      %808 = vector.shape_cast %805 : vector<16x16xf32> to vector<1x1x16x16xf32>
      tpu.vector_store %arg4[%c0_482, %c0_483, %c0_484, %c0_485], %808 {strides = array<i32>} : memref<1x1x16x16xf32, #tpu.memory_space<vmem>>, vector<1x1x16x16xf32>,
    } else {
    }
    return
  }
  func.func @transform_0(%arg0: i32, %arg1: i32) -> (i32, i32, i32) {
    %c0_i32 = arith.constant 0 : i32
    %c0_i32_0 = arith.constant 0 : i32
    return %arg0, %arg1, %c0_i32 : i32, i32, i32
  }
  func.func @transform_1(%arg0: i32, %arg1: i32) -> i32 {
    %c0_i32 = arith.constant 0 : i32
    %c0_i32_0 = arith.constant 0 : i32
    return %c0_i32 : i32
  }
  func.func @transform_2(%arg0: i32, %arg1: i32) -> (i32, i32, i32, i32) {
    %c0_i32 = arith.constant 0 : i32
    %c0_i32_0 = arith.constant 0 : i32
    %c0_i32_1 = arith.constant 0 : i32
    %c0_i32_2 = arith.constant 0 : i32
    return %arg0, %c0_i32, %c0_i32_0, %c0_i32_1 : i32, i32, i32, i32
  }
}

</mosaic_0001>

<llo_original>
// kernel: tpu_custom_call.1
$region0: #{tpu_custom_call.1}
  #allocation0 [shape = 'u32[]', space=smem, size = 0x4, offset = 0x4, fixed_abs, tag = 'smem constant byte address 0x4 - core index']
  #allocation1 [shape = 'u32[144,128]{1,0:T(1,128)}', space=vmem, size = 0x12000, scoped, tag = 'internal scratch']
  #allocation2 [shape = 'f32[1,256]{1,0:T(1,128)}', space=vmem, size = 0x400, scoped, tag = 'scratch operand']
  #allocation3 [shape = 'f32[1,256]{1,0:T(1,128)}', space=vmem, size = 0x400, scoped, tag = 'scratch operand']
  #allocation4 [shape = 'f32[2,22,22]{2,1,0:T(8,128)}', space=vmem, size = 0x6000, scoped, tag = 'scratch operand']
  %s0 = inlined_call_operand.hbm [shape: f32[2,4,256], index: 0, kind: input, shape index: {}]
  %s1 = inlined_call_operand.vmem [shape: f32[98], index: 1, kind: input, shape index: {}]
  %s2 = inlined_call_operand.hbm [shape: f32[2,1,16,16], index: 2, kind: output, shape index: {}]
  %s3 = sld [smem:[#allocation0]]
  $region57: #{tpu_custom_call.1} parent=0
    _
  %s5 = ssub.s32 1, %s3
  %s6 = scalar_select 0, %s5, %s3
  $region1: #{tpu_custom_call.1} parent=0
    #allocation5 [shape = 'u8[8192]{0}', space=vmem, size = 0x2000, scoped, tag = 'input window, operand 0']
    #allocation6 [shape = 's32[2]{0}', space=sflag, size = 0x8, scoped, tag = 'scoped memory for tpu_custom_call.1']
    #allocation7 [shape = 's32[2]{0}', space=sflag, size = 0x8, scoped, tag = 'scoped memory for tpu_custom_call.1']
    #allocation8 [shape = 's32[2]{0}', space=sflag, size = 0x8, scoped, tag = 'scoped memory for tpu_custom_call.1']
    #allocation9 [shape = 'u8[512]{0}', space=smem, size = 0x200, scoped, tag = 'input window, operand 1, single buffered']
    #allocation10 [shape = 'u8[16384]{0}', space=vmem, size = 0x4000, scoped, tag = 'output window, operand 0']
    %7 = vsyncpa [#allocation6], 0
    %s8 = scalar_lea.sflag [#allocation6], 1
    %9 = vsyncpa %s8, 0
    %10 = vsyncpa [#allocation8], 0
    %11 = vsyncpa [#allocation7], 0
    %s12 = scalar_lea.sflag [#allocation7], 1
    %13 = vsyncpa %s12, 0
    loop: start=0, step=1, limit=4
    $region2: #{tpu_custom_call.1} parent=1 // loop_pre_header
      _
    $region3: #{tpu_custom_call.1} parent=1 // loop_header
      %s15 = sphi 0, %s19
      %p16 = scmp.ge.s32.totalorder %s15, 4
      %s22 = sphi 0, %s34
      %s23 = sphi 0, %s30
      %s24 = sphi 0, %s22
      %s25 = sphi 0, %s23
      %s26 = sphi 0, %s24
      %s27 = sphi 0, %s25
      %s39 = sphi 0, %s41
      %s42 = sphi 0, %s39
      %s43 = sphi 0, %s42
      %s59 = sphi 0, %s43
      %s63 = sphi 0, %s63
      %s65 = sphi 0, %s63
      %s66 = sphi 0, %s65
      %s80 = sphi 0, %s66
      %s86 = sphi 0, %s88
      %s89 = sphi 0, %s86
      %s90 = sphi 0, %s89
      %s106 = sphi 0, %s90
    $region4: #{tpu_custom_call.1} parent=1 // loop_header_branch
      %18 = sbr.rel (%p16) target = $region8
    $region5: #{tpu_custom_call.1} parent=1 // loop_body
      %s20 = ssub.s32 %s15, 1
      %s21 = ssub.s32 %s15, 2
      %s28 = sadd.s32 1, %s23
      %p29 = scmp.ge.s32.totalorder %s28, 1
      %s30 = scalar_select %p29, 0, %s28
      %s31 = sadd.s32 1, %s22
      %s32 = scalar_select %p29, %s31, %s22
      %p33 = scmp.ge.s32.totalorder %s32, 2
      %s34 = scalar_select %p33, 0, %s32
      %s35 = ssub.s32 %s22, %s34
      %s36 = ssub.s32 %s23, %s30
      %s37 = sor.u32 %s35, %s36
      %p38 = scmp.eq.s32.totalorder %s37, 0
      %s40 = sadd.s32 %s39, 1
      %s41 = scalar_select %p38, %s39, %s40
      %p44 = pneg %p38
      %p45 = scmp.eq.s32.totalorder %s15, 1
      %p46 = por %p44, %p45
      %p47 = scmp.ne.s32.totalorder %s39, %s42
      %p48 = scmp.eq.s32.totalorder %s15, 0
      %p49 = por %p47, %p48
      %p50 = scmp.ne.s32.totalorder %s39, %s42
      %p51 = scmp.eq.s32.totalorder %s20, 1
      %p52 = por %p50, %p51
      %p53 = scmp.ne.s32.totalorder %s42, %s43
      %p54 = scmp.eq.s32.totalorder %s20, 0
      %p55 = por %p53, %p54
      %p56 = scmp.ne.s32.totalorder %s42, %s43
      %p57 = scmp.eq.s32.totalorder %s21, 1
      %p58 = por %p56, %p57
      %p60 = scmp.ne.s32.totalorder %s43, %s59
      %p61 = scmp.eq.s32.totalorder %s21, 0
      %p62 = por %p60, %p61
      %s64 = sadd.s32 %s63, 1
      %p67 = scmp.eq.s32.totalorder %s15, 1
      %p68 = scmp.ne.s32.totalorder %s63, %s65
      %p69 = scmp.eq.s32.totalorder %s15, 0
      %p70 = por %p68, %p69
      %p71 = scmp.ne.s32.totalorder %s63, %s65
      %p72 = scmp.eq.s32.totalorder %s20, 1
      %p73 = por %p71, %p72
      %p74 = scmp.ne.s32.totalorder %s65, %s66
      %p75 = scmp.eq.s32.totalorder %s20, 0
      %p76 = por %p74, %p75
      %p77 = scmp.ne.s32.totalorder %s65, %s66
      %p78 = scmp.eq.s32.totalorder %s21, 1
      %p79 = por %p77, %p78
      %p81 = scmp.ne.s32.totalorder %s66, %s80
      %p82 = scmp.eq.s32.totalorder %s21, 0
      %p83 = por %p81, %p82
      %s84 = ssub.s32 %s22, %s34
      %p85 = scmp.eq.s32.totalorder %s84, 0
      %s87 = sadd.s32 %s86, 1
      %s88 = scalar_select %p85, %s86, %s87
      %p91 = pneg %p85
      %p92 = scmp.eq.s32.totalorder %s15, 1
      %p93 = por %p91, %p92
      %p94 = scmp.ne.s32.totalorder %s86, %s89
      %p95 = scmp.eq.s32.totalorder %s15, 0
      %p96 = por %p94, %p95
      %p97 = scmp.ne.s32.totalorder %s86, %s89
      %p98 = scmp.eq.s32.totalorder %s20, 1
      %p99 = por %p97, %p98
      %p100 = scmp.ne.s32.totalorder %s89, %s90
      %p101 = scmp.eq.s32.totalorder %s20, 0
      %p102 = por %p100, %p101
      %p103 = scmp.ne.s32.totalorder %s89, %s90
      %p104 = scmp.eq.s32.totalorder %s21, 1
      %p105 = por %p103, %p104
      %p107 = scmp.ne.s32.totalorder %s90, %s106
      %p108 = scmp.eq.s32.totalorder %s21, 0
      %p109 = por %p107, %p108
      %p110 = scmp.le.s32.totalorder 1, %s15
      %p111 = scmp.lt.s32.totalorder %s15, 3
      %p112 = pnand %p110, %p111
      %p113 = pneg %p112
      // Predicated region
      $region9: #{tpu_custom_call.1} parent=5 // pred_check
        _
      $region10: #{tpu_custom_call.1} parent=5 // pred_check_branch
        %115 = sbr.rel (%p112) target = $region12
      $region11: #{tpu_custom_call.1} parent=5 // pred_region
        %s116 = ssub.s32 %s15, 1
        // Predicated region
        $region13: #{tpu_custom_call.1} parent=11 // pred_check
          %p117 = pneg %p76
        $region14: #{tpu_custom_call.1} parent=11 // pred_check_branch
          %119 = sbr.rel (%p117) target = $region16
        $region15: #{tpu_custom_call.1} parent=11 // pred_region
          %s121 = ssub.s32 16, 16
          %122 = vsyncadd [#allocation8], %s121
          %s124 = sshll.u32 %s1, 4
          %s125 = int_to_ptr.vmem [resolvable:$true] %s124
          %127 = dma.vmem_to_smem %s125, 16, [#allocation9], [#allocation8]
        $region16: #{tpu_custom_call.1} parent=11 // pred_fallthru
          _
      $region12: #{tpu_custom_call.1} parent=5 // pred_fallthru
        _
      %p128 = scmp.lt.s32.totalorder %s15, 2
      // Predicated region
      $region17: #{tpu_custom_call.1} parent=5 // pred_check
        %p129 = pneg %p128
      $region18: #{tpu_custom_call.1} parent=5 // pred_check_branch
        %131 = sbr.rel (%p129) target = $region20
      $region19: #{tpu_custom_call.1} parent=5 // pred_region
        // Predicated region
        $region21: #{tpu_custom_call.1} parent=19 // pred_check
          %p132 = pneg %p49
        $region22: #{tpu_custom_call.1} parent=19 // pred_check_branch
          %134 = sbr.rel (%p132) target = $region24
        $region23: #{tpu_custom_call.1} parent=19 // pred_region
          %s135 = sand.u32 %s39, 1
          %s136 = scalar_lea.sflag [#allocation6], %s135
          %s137 = sand.u32 %s39, 1
          %s138 = smul.addr %s137, 8
          %s139 = scalar_lea.vmem [#allocation5], %s138
          %s141 = ssub.s32 128, 128
          %142 = vsyncadd %s136, %s141
          %s143 = smul.addr %s23, 2
          %s144 = smul.addr %s22, 2
          %s145 = sadd.s32 %s143, %s144
          %s146 = smul.addr %s145, 64
          %s147 = scalar_lea.hbm %s0, %s146
          %s149 = sshll.u32 %s139, 4
          %s150 = int_to_ptr.vmem [resolvable:$true] %s149
          %152 = dma.hbm_to_vmem [thread:$0]  %s147, 128, %s150, %s136
        $region24: #{tpu_custom_call.1} parent=19 // pred_fallthru
          _
      $region20: #{tpu_custom_call.1} parent=5 // pred_fallthru
        _
      %p153 = scmp.le.s32.totalorder 1, %s15
      %p154 = scmp.lt.s32.totalorder %s15, 3
      %p155 = pnand %p153, %p154
      %p156 = pneg %p155
      // Predicated region
      $region25: #{tpu_custom_call.1} parent=5 // pred_check
        _
      $region26: #{tpu_custom_call.1} parent=5 // pred_check_branch
        %158 = sbr.rel (%p155) target = $region28
      $region27: #{tpu_custom_call.1} parent=5 // pred_region
        %s159 = ssub.s32 %s15, 1
        %s160 = sand.u32 %s42, 1
        %s161 = scalar_lea.sflag [#allocation6], %s160
        %s162 = sand.u32 %s42, 1
        %s163 = smul.addr %s162, 8
        %s164 = scalar_lea.vmem [#allocation5], %s163
        // Predicated region
        $region29: #{tpu_custom_call.1} parent=27 // pred_check
          %p165 = pneg %p55
        $region30: #{tpu_custom_call.1} parent=27 // pred_check_branch
          %167 = sbr.rel (%p165) target = $region32
        $region31: #{tpu_custom_call.1} parent=27 // pred_region
          %168 = dma.done %s161, 128
        $region32: #{tpu_custom_call.1} parent=27 // pred_fallthru
          _
        // Predicated region
        $region33: #{tpu_custom_call.1} parent=27 // pred_check
          %p169 = pneg %p76
        $region34: #{tpu_custom_call.1} parent=27 // pred_check_branch
          %171 = sbr.rel (%p169) target = $region36
        $region35: #{tpu_custom_call.1} parent=27 // pred_region
          %172 = dma.done [#allocation8], 16
        $region36: #{tpu_custom_call.1} parent=27 // pred_fallthru
          _
        %173 = sfence
        %s174 = sand.u32 %s42, 1
        %s175 = scalar_lea.sflag [#allocation6], %s174
        %s176 = sand.u32 %s42, 1
        %s177 = smul.addr %s176, 8
        %s178 = scalar_lea.vmem [#allocation5], %s177
        %p179 = pneg %p55
        %p180 = pneg %p52
        %p181 = pneg %p76
        %p182 = pneg %p73
        %p183 = pneg %p102
        %p184 = pneg %p99
        %s185 = sand.u32 %s89, 1
        %s186 = scalar_lea.sflag [#allocation7], %s185
        %s187 = sand.u32 %s89, 1
        %s188 = smul.addr %s187, 16
        %s189 = scalar_lea.vmem [#allocation10], %s188
        %p190 = scmp.eq.s32.totalorder %s25, 0
        // Predicated region
        $region37: #{tpu_custom_call.1} parent=27 // pred_check
          %p191 = pneg %p190
        $region38: #{tpu_custom_call.1} parent=27 // pred_check_branch
          %193 = sbr.rel (%p191) target = $region40
        $region39: #{tpu_custom_call.1} parent=27 // pred_region
          %v194 = vlaneseq
          %vm195 = vcmp.ge.s32.totalorder %v194, 0
          %vm196 = vcmp.lt.s32.totalorder %v194, 256
          %vm197 = vmand %vm195, %vm196
          %198 = vst.msk [vmem:[#allocation2] sm:$0x3] %vm197, 0.0
          %199 = vst.msk [vmem:[#allocation3] sm:$0x3] %vm197, -inf
        $region40: #{tpu_custom_call.1} parent=27 // pred_fallthru
          _
        %v200 = vld [vmem:[%s164] sm:$0xff]
        %v201 = vld [vmem:[#allocation2] sm:$0x3]
        %v203 = vcombine.high %v200, %v200
        %vm205 = vcmask 1043456
        %v206 = vsel %vm205, %v200, 0.0
        %v207 = vrot.slane %v206, 4
        %v208 = vadd.f32 %v206, %v207
        %v209 = vrot.slane %v208, 2
        %v210 = vadd.f32 %v208, %v209
        %v211 = vrot.slane %v210, 1
        %v212 = vadd.f32 %v210, %v211
        %v213 = vsel %vm205, %v203, 0.0
        %v214 = vrot.slane %v213, 4
        %v215 = vadd.f32 %v213, %v214
        %v216 = vrot.slane %v215, 2
        %v217 = vadd.f32 %v215, %v216
        %v218 = vrot.slane %v217, 1
        %v219 = vadd.f32 %v217, %v218
        %v222 = vcombine.low %v212, %v219
        %v224 = vunpack.c.l.s4 1966171168
        %v225 = vunpack.c.0.s8 %v224
        %v226 = vlaneseq
        %v227 = vshrl.u32 %v226, 7
        %v228 = vsub.s32 %v225, %v227
        %v229 = vrot.slane %v222, %v228
        %v231 = vunpack.c.l.s4 1966171168
        %v232 = vunpack.c.0.s8 %v231
        %v233 = vlaneseq
        %v234 = vshrl.u32 %v233, 7
        %v235 = vsub.s32 %v232, %v234
        %v236 = vrot.slane %v229, %v235
        %v238 = vadd.f32 %v201, %v236
        %v239 = vlaneseq
        %vm240 = vcmp.ge.s32.totalorder %v239, 0
        %vm241 = vcmp.lt.s32.totalorder %v239, 256
        %vm242 = vmand %vm240, %vm241
        %243 = vst.msk [vmem:[#allocation2] sm:$0x3] %vm242, %v238
        %v244 = vld [vmem:[#allocation3] sm:$0x3]
        %v245 = vsel %vm205, %v200, -inf
        %v246 = vrot.slane %v245, 4
        %v247 = vmax.f32 %v245, %v246
        %v248 = vrot.slane %v247, 2
        %v249 = vmax.f32 %v247, %v248
        %v250 = vrot.slane %v249, 1
        %v251 = vmax.f32 %v249, %v250
        %v252 = vsel %vm205, %v203, -inf
        %v253 = vrot.slane %v252, 4
        %v254 = vmax.f32 %v252, %v253
        %v255 = vrot.slane %v254, 2
        %v256 = vmax.f32 %v254, %v255
        %v257 = vrot.slane %v256, 1
        %v258 = vmax.f32 %v256, %v257
        %v261 = vcombine.low %v251, %v258
        %v263 = vunpack.c.l.s4 1966171168
        %v264 = vunpack.c.0.s8 %v263
        %v265 = vlaneseq
        %v266 = vshrl.u32 %v265, 7
        %v267 = vsub.s32 %v264, %v266
        %v268 = vrot.slane %v261, %v267
        %v270 = vunpack.c.l.s4 1966171168
        %v271 = vunpack.c.0.s8 %v270
        %v272 = vlaneseq
        %v273 = vshrl.u32 %v272, 7
        %v274 = vsub.s32 %v271, %v273
        %v275 = vrot.slane %v268, %v274
        %v277 = vmax.f32 %v244, %v275
        %278 = vst.msk [vmem:[#allocation3] sm:$0x3] %vm242, %v277
        // Predicated region
        $region41: #{tpu_custom_call.1} parent=27 // pred_check
          %p279 = pneg %p190
        $region42: #{tpu_custom_call.1} parent=27 // pred_check_branch
          %281 = sbr.rel (%p279) target = $region44
        $region43: #{tpu_custom_call.1} parent=27 // pred_region
          %vm282 = vcmask 179200
          %283 = vst.msk [vmem:[#allocation4] sm:$0xff] %vm282, 0.0
          %284 = vst.msk [vmem:[#allocation4 + $0x8] sm:$0xff] %vm282, 0.0
          %vm285 = vcmask 177152
          %286 = vst.msk [vmem:[#allocation4 + $0x10] sm:$0x3f] %vm285, 0.0
          %287 = vst.msk [vmem:[#allocation4 + $0x18] sm:$0xff] %vm282, 0.0
          %288 = vst.msk [vmem:[#allocation4 + $0x20] sm:$0xff] %vm282, 0.0
          %289 = vst.msk [vmem:[#allocation4 + $0x28] sm:$0x3f] %vm285, 0.0
          %v290 = vld [vmem:[#allocation2] sm:$0x1]
          %v291 = vmul.f32 %v290, 0.25
          %v293 = vlaneseq
          %v294 = vshrl.u32 %v293, 7
          %v295 = vsub.s32 0, %v294
          %v296 = vrot.slane %v291, %v295
          %297 = vrot.lane.b32.xlu0 %v296, 3
          %v298 = vpop.permute.xlu0 %297
          %vm300 = vcmask 147480
          %301 = vst.msk [vmem:[#allocation4 + $0x3] sm:$0x1] %vm300, %v298
          %v302 = vld [vmem:[#allocation3] sm:$0x1]
          %v304 = vlaneseq
          %v305 = vshrl.u32 %v304, 7
          %v306 = vsub.s32 0, %v305
          %v307 = vrot.slane %v302, %v306
          %308 = vrot.lane.b32.xlu0 %v307, 3
          %v309 = vpop.permute.xlu0 %308
          %s311 = scalar_lea.vmem [#allocation4], 24
          %312 = vst.msk [vmem:[%s311 + $0x3] sm:$0x1] %vm300, %v309
          %v313 = vld [vmem:[#allocation2] sm:$0x1]
          %v314 = vmul.f32 %v313, 0.25
          %v316 = vlaneseq
          %v317 = vshrl.u32 %v316, 7
          %v318 = vsub.s32 0, %v317
          %v319 = vrot.slane %v314, %v318
          %320 = vrot.lane.b32.xlu0 %v319, 115
          %v321 = vpop.permute.xlu0 %320
          %323 = vst.msk [vmem:[#allocation4 + $0x4] sm:$0x1] %vm300, %v321
          %v324 = vld [vmem:[#allocation3] sm:$0x1]
          %v326 = vlaneseq
          %v327 = vshrl.u32 %v326, 7
          %v328 = vsub.s32 0, %v327
          %v329 = vrot.slane %v324, %v328
          %330 = vrot.lane.b32.xlu0 %v329, 115
          %v331 = vpop.permute.xlu0 %330
          %333 = vst.msk [vmem:[%s311 + $0x4] sm:$0x1] %vm300, %v331
          %v334 = vld [vmem:[#allocation2] sm:$0x1]
          %v335 = vmul.f32 %v334, 0.25
          %v337 = vlaneseq
          %v338 = vshrl.u32 %v337, 7
          %v339 = vsub.s32 0, %v338
          %v340 = vrot.slane %v335, %v339
          %341 = vrot.lane.b32.xlu0 %v340, 99
          %v342 = vpop.permute.xlu0 %341
          %344 = vst.msk [vmem:[#allocation4 + $0x5] sm:$0x1] %vm300, %v342
          %v345 = vld [vmem:[#allocation3] sm:$0x1]
          %v347 = vlaneseq
          %v348 = vshrl.u32 %v347, 7
          %v349 = vsub.s32 0, %v348
          %v350 = vrot.slane %v345, %v349
          %351 = vrot.lane.b32.xlu0 %v350, 99
          %v352 = vpop.permute.xlu0 %351
          %354 = vst.msk [vmem:[%s311 + $0x5] sm:$0x1] %vm300, %v352
          %v355 = vld [vmem:[#allocation2] sm:$0x1]
          %v356 = vmul.f32 %v355, 0.25
          %v358 = vlaneseq
          %v359 = vshrl.u32 %v358, 7
          %v360 = vsub.s32 0, %v359
          %v361 = vrot.slane %v356, %v360
          %362 = vrot.lane.b32.xlu0 %v361, 83
          %v363 = vpop.permute.xlu0 %362
          %365 = vst.msk [vmem:[#allocation4 + $0x6] sm:$0x1] %vm300, %v363
          %v366 = vld [vmem:[#allocation3] sm:$0x1]
          %v368 = vlaneseq
          %v369 = vshrl.u32 %v368, 7
          %v370 = vsub.s32 0, %v369
          %v371 = vrot.slane %v366, %v370
          %372 = vrot.lane.b32.xlu0 %v371, 83
          %v373 = vpop.permute.xlu0 %372
          %375 = vst.msk [vmem:[%s311 + $0x6] sm:$0x1] %vm300, %v373
          %v376 = vld [vmem:[#allocation2] sm:$0x1]
          %v377 = vmul.f32 %v376, 0.25
          %v379 = vlaneseq
          %v380 = vshrl.u32 %v379, 7
          %v381 = vsub.s32 0, %v380
          %v382 = vrot.slane %v377, %v381
          %383 = vrot.lane.b32.xlu0 %v382, 67
          %v384 = vpop.permute.xlu0 %383
          %386 = vst.msk [vmem:[#allocation4 + $0x7] sm:$0x1] %vm300, %v384
          %v387 = vld [vmem:[#allocation3] sm:$0x1]
          %v389 = vlaneseq
          %v390 = vshrl.u32 %v389, 7
          %v391 = vsub.s32 0, %v390
          %v392 = vrot.slane %v387, %v391
          %393 = vrot.lane.b32.xlu0 %v392, 67
          %v394 = vpop.permute.xlu0 %393
          %396 = vst.msk [vmem:[%s311 + $0x7] sm:$0x1] %vm300, %v394
          %v397 = vld [vmem:[#allocation2] sm:$0x1]
          %v398 = vmul.f32 %v397, 0.25
          %v400 = vlaneseq
          %v401 = vshrl.u32 %v400, 7
          %v402 = vsub.s32 0, %v401
          %v403 = vrot.slane %v398, %v402
          %404 = vrot.lane.b32.xlu0 %v403, 51
          %v405 = vpop.permute.xlu0 %404
          %407 = vst.msk [vmem:[#allocation4 + $0x8] sm:$0x1] %vm300, %v405
          %v408 = vld [vmem:[#allocation3] sm:$0x1]
          %v410 = vlaneseq
          %v411 = vshrl.u32 %v410, 7
          %v412 = vsub.s32 0, %v411
          %v413 = vrot.slane %v408, %v412
          %414 = vrot.lane.b32.xlu0 %v413, 51
          %v415 = vpop.permute.xlu0 %414
          %417 = vst.msk [vmem:[%s311 + $0x8] sm:$0x1] %vm300, %v415
          %v418 = vld [vmem:[#allocation2] sm:$0x1]
          %v419 = vmul.f32 %v418, 0.25
          %v421 = vlaneseq
          %v422 = vshrl.u32 %v421, 7
          %v423 = vsub.s32 0, %v422
          %v424 = vrot.slane %v419, %v423
          %425 = vrot.lane.b32.xlu0 %v424, 35
          %v426 = vpop.permute.xlu0 %425
          %428 = vst.msk [vmem:[#allocation4 + $0x9] sm:$0x1] %vm300, %v426
          %v429 = vld [vmem:[#allocation3] sm:$0x1]
          %v431 = vlaneseq
          %v432 = vshrl.u32 %v431, 7
          %v433 = vsub.s32 0, %v432
          %v434 = vrot.slane %v429, %v433
          %435 = vrot.lane.b32.xlu0 %v434, 35
          %v436 = vpop.permute.xlu0 %435
          %438 = vst.msk [vmem:[%s311 + $0x9] sm:$0x1] %vm300, %v436
          %v439 = vld [vmem:[#allocation2] sm:$0x1]
          %v440 = vmul.f32 %v439, 0.25
          %v442 = vlaneseq
          %v443 = vshrl.u32 %v442, 7
          %v444 = vsub.s32 0, %v443
          %v445 = vrot.slane %v440, %v444
          %446 = vrot.lane.b32.xlu0 %v445, 19
          %v447 = vpop.permute.xlu0 %446
          %449 = vst.msk [vmem:[#allocation4 + $0xa] sm:$0x1] %vm300, %v447
          %v450 = vld [vmem:[#allocation3] sm:$0x1]
          %v452 = vlaneseq
          %v453 = vshrl.u32 %v452, 7
          %v454 = vsub.s32 0, %v453
          %v455 = vrot.slane %v450, %v454
          %456 = vrot.lane.b32.xlu0 %v455, 19
          %v457 = vpop.permute.xlu0 %456
          %459 = vst.msk [vmem:[%s311 + $0xa] sm:$0x1] %vm300, %v457
          %v460 = vld [vmem:[#allocation2 + $0x1] sm:$0x1]
          %v461 = vmul.f32 %v460, 0.25
          %v463 = vlaneseq
          %v464 = vshrl.u32 %v463, 7
          %v465 = vsub.s32 0, %v464
          %v466 = vrot.slane %v461, %v465
          %467 = vrot.lane.b32.xlu0 %v466, 3
          %v468 = vpop.permute.xlu0 %467
          %470 = vst.msk [vmem:[#allocation4 + $0xb] sm:$0x1] %vm300, %v468
          %v471 = vld [vmem:[#allocation3 + $0x1] sm:$0x1]
          %v473 = vlaneseq
          %v474 = vshrl.u32 %v473, 7
          %v475 = vsub.s32 0, %v474
          %v476 = vrot.slane %v471, %v475
          %477 = vrot.lane.b32.xlu0 %v476, 3
          %v478 = vpop.permute.xlu0 %477
          %480 = vst.msk [vmem:[%s311 + $0xb] sm:$0x1] %vm300, %v478
          %v481 = vld [vmem:[#allocation2 + $0x1] sm:$0x1]
          %v482 = vmul.f32 %v481, 0.25
          %v484 = vlaneseq
          %v485 = vshrl.u32 %v484, 7
          %v486 = vsub.s32 0, %v485
          %v487 = vrot.slane %v482, %v486
          %488 = vrot.lane.b32.xlu0 %v487, 115
          %v489 = vpop.permute.xlu0 %488
          %491 = vst.msk [vmem:[#allocation4 + $0xc] sm:$0x1] %vm300, %v489
          %v492 = vld [vmem:[#allocation3 + $0x1] sm:$0x1]
          %v494 = vlaneseq
          %v495 = vshrl.u32 %v494, 7
          %v496 = vsub.s32 0, %v495
          %v497 = vrot.slane %v492, %v496
          %498 = vrot.lane.b32.xlu0 %v497, 115
          %v499 = vpop.permute.xlu0 %498
          %501 = vst.msk [vmem:[%s311 + $0xc] sm:$0x1] %vm300, %v499
          %v502 = vld [vmem:[#allocation2 + $0x1] sm:$0x1]
          %v503 = vmul.f32 %v502, 0.25
          %v505 = vlaneseq
          %v506 = vshrl.u32 %v505, 7
          %v507 = vsub.s32 0, %v506
          %v508 = vrot.slane %v503, %v507
          %509 = vrot.lane.b32.xlu0 %v508, 99
          %v510 = vpop.permute.xlu0 %509
          %512 = vst.msk [vmem:[#allocation4 + $0xd] sm:$0x1] %vm300, %v510
          %v513 = vld [vmem:[#allocation3 + $0x1] sm:$0x1]
          %v515 = vlaneseq
          %v516 = vshrl.u32 %v515, 7
          %v517 = vsub.s32 0, %v516
          %v518 = vrot.slane %v513, %v517
          %519 = vrot.lane.b32.xlu0 %v518, 99
          %v520 = vpop.permute.xlu0 %519
          %522 = vst.msk [vmem:[%s311 + $0xd] sm:$0x1] %vm300, %v520
          %v523 = vld [vmem:[#allocation2 + $0x1] sm:$0x1]
          %v524 = vmul.f32 %v523, 0.25
          %v526 = vlaneseq
          %v527 = vshrl.u32 %v526, 7
          %v528 = vsub.s32 0, %v527
          %v529 = vrot.slane %v524, %v528
          %530 = vrot.lane.b32.xlu0 %v529, 83
          %v531 = vpop.permute.xlu0 %530
          %533 = vst.msk [vmem:[#allocation4 + $0xe] sm:$0x1] %vm300, %v531
          %v534 = vld [vmem:[#allocation3 + $0x1] sm:$0x1]
          %v536 = vlaneseq
          %v537 = vshrl.u32 %v536, 7
          %v538 = vsub.s32 0, %v537
          %v539 = vrot.slane %v534, %v538
          %540 = vrot.lane.b32.xlu0 %v539, 83
          %v541 = vpop.permute.xlu0 %540
          %543 = vst.msk [vmem:[%s311 + $0xe] sm:$0x1] %vm300, %v541
          %v544 = vld [vmem:[#allocation2 + $0x1] sm:$0x1]
          %v545 = vmul.f32 %v544, 0.25
          %v547 = vlaneseq
          %v548 = vshrl.u32 %v547, 7
          %v549 = vsub.s32 0, %v548
          %v550 = vrot.slane %v545, %v549
          %551 = vrot.lane.b32.xlu0 %v550, 67
          %v552 = vpop.permute.xlu0 %551
          %554 = vst.msk [vmem:[#allocation4 + $0xf] sm:$0x1] %vm300, %v552
          %v555 = vld [vmem:[#allocation3 + $0x1] sm:$0x1]
          %v557 = vlaneseq
          %v558 = vshrl.u32 %v557, 7
          %v559 = vsub.s32 0, %v558
          %v560 = vrot.slane %v555, %v559
          %561 = vrot.lane.b32.xlu0 %v560, 67
          %v562 = vpop.permute.xlu0 %561
          %564 = vst.msk [vmem:[%s311 + $0xf] sm:$0x1] %vm300, %v562
          %v565 = vld [vmem:[#allocation2 + $0x1] sm:$0x1]
          %v566 = vmul.f32 %v565, 0.25
          %v568 = vlaneseq
          %v569 = vshrl.u32 %v568, 7
          %v570 = vsub.s32 0, %v569
          %v571 = vrot.slane %v566, %v570
          %572 = vrot.lane.b32.xlu0 %v571, 51
          %v573 = vpop.permute.xlu0 %572
          %575 = vst.msk [vmem:[#allocation4 + $0x10] sm:$0x1] %vm300, %v573
          %v576 = vld [vmem:[#allocation3 + $0x1] sm:$0x1]
          %v578 = vlaneseq
          %v579 = vshrl.u32 %v578, 7
          %v580 = vsub.s32 0, %v579
          %v581 = vrot.slane %v576, %v580
          %582 = vrot.lane.b32.xlu0 %v581, 51
          %v583 = vpop.permute.xlu0 %582
          %585 = vst.msk [vmem:[%s311 + $0x10] sm:$0x1] %vm300, %v583
          %v586 = vld [vmem:[#allocation2 + $0x1] sm:$0x1]
          %v587 = vmul.f32 %v586, 0.25
          %v589 = vlaneseq
          %v590 = vshrl.u32 %v589, 7
          %v591 = vsub.s32 0, %v590
          %v592 = vrot.slane %v587, %v591
          %593 = vrot.lane.b32.xlu0 %v592, 35
          %v594 = vpop.permute.xlu0 %593
          %596 = vst.msk [vmem:[#allocation4 + $0x11] sm:$0x1] %vm300, %v594
          %v597 = vld [vmem:[#allocation3 + $0x1] sm:$0x1]
          %v599 = vlaneseq
          %v600 = vshrl.u32 %v599, 7
          %v601 = vsub.s32 0, %v600
          %v602 = vrot.slane %v597, %v601
          %603 = vrot.lane.b32.xlu0 %v602, 35
          %v604 = vpop.permute.xlu0 %603
          %606 = vst.msk [vmem:[%s311 + $0x11] sm:$0x1] %vm300, %v604
          %v607 = vld [vmem:[#allocation2 + $0x1] sm:$0x1]
          %v608 = vmul.f32 %v607, 0.25
          %v610 = vlaneseq
          %v611 = vshrl.u32 %v610, 7
          %v612 = vsub.s32 0, %v611
          %v613 = vrot.slane %v608, %v612
          %614 = vrot.lane.b32.xlu0 %v613, 19
          %v615 = vpop.permute.xlu0 %614
          %617 = vst.msk [vmem:[#allocation4 + $0x12] sm:$0x1] %vm300, %v615
          %v618 = vld [vmem:[#allocation3 + $0x1] sm:$0x1]
          %v620 = vlaneseq
          %v621 = vshrl.u32 %v620, 7
          %v622 = vsub.s32 0, %v621
          %v623 = vrot.slane %v618, %v622
          %624 = vrot.lane.b32.xlu0 %v623, 19
          %v625 = vpop.permute.xlu0 %624
          %627 = vst.msk [vmem:[%s311 + $0x12] sm:$0x1] %vm300, %v625
          %s628 = sld [smem:[#allocation9]]
          %v629 = vld [vmem:[#allocation4] sm:$0xff]
          %v630 = vld [vmem:[#allocation4 + $0x8] sm:$0xff]
          %v631 = vstv %s628
          %v632 = vmul.f32 %v631, %v629
          %v633 = vmul.f32 %v631, %v630
          %v634 = vadd.f32 %v632, 0.0
          %v635 = vadd.f32 %v633, 0.0
          %s636 = sld [smem:[#allocation9 + $0x1]]
          %v637 = vstv %s636
          %v638 = vmul.f32 %v637, %v629
          %v639 = vmul.f32 %v637, %v630
          %642 = vrot.lane.b32.xlu0 %v638, 127
          %v643 = vpop.permute.xlu0 %642
          %644 = vrot.lane.b32.xlu0 %v639, 127
          %v645 = vpop.permute.xlu0 %644
          %v648 = vadd.f32 %v634, %v643
          %v649 = vadd.f32 %v635, %v645
          %s650 = sld [smem:[#allocation9 + $0x2]]
          %v651 = vstv %s650
          %v652 = vmul.f32 %v651, %v629
          %v653 = vmul.f32 %v651, %v630
          %656 = vrot.lane.b32.xlu0 %v652, 126
          %v657 = vpop.permute.xlu0 %656
          %658 = vrot.lane.b32.xlu0 %v653, 126
          %v659 = vpop.permute.xlu0 %658
          %v662 = vadd.f32 %v648, %v657
          %v663 = vadd.f32 %v649, %v659
          %s664 = sld [smem:[#allocation9 + $0x3]]
          %v665 = vstv %s664
          %v666 = vmul.f32 %v665, %v629
          %v667 = vmul.f32 %v665, %v630
          %670 = vrot.lane.b32.xlu0 %v666, 125
          %v671 = vpop.permute.xlu0 %670
          %672 = vrot.lane.b32.xlu0 %v667, 125
          %v673 = vpop.permute.xlu0 %672
          %v676 = vadd.f32 %v662, %v671
          %v677 = vadd.f32 %v663, %v673
          %s678 = sld [smem:[#allocation9 + $0x4]]
          %v679 = vstv %s678
          %v680 = vmul.f32 %v679, %v629
          %v681 = vmul.f32 %v679, %v630
          %684 = vrot.lane.b32.xlu0 %v680, 124
          %v685 = vpop.permute.xlu0 %684
          %686 = vrot.lane.b32.xlu0 %v681, 124
          %v687 = vpop.permute.xlu0 %686
          %v690 = vadd.f32 %v676, %v685
          %v691 = vadd.f32 %v677, %v687
          %s692 = sld [smem:[#allocation9 + $0x5]]
          %v693 = vstv %s692
          %v694 = vmul.f32 %v693, %v629
          %v695 = vmul.f32 %v693, %v630
          %698 = vrot.lane.b32.xlu0 %v694, 123
          %v699 = vpop.permute.xlu0 %698
          %700 = vrot.lane.b32.xlu0 %v695, 123
          %v701 = vpop.permute.xlu0 %700
          %v704 = vadd.f32 %v690, %v699
          %v705 = vadd.f32 %v691, %v701
          %s706 = sld [smem:[#allocation9 + $0x6]]
          %v707 = vstv %s706
          %v708 = vmul.f32 %v707, %v629
          %v709 = vmul.f32 %v707, %v630
          %712 = vrot.lane.b32.xlu0 %v708, 122
          %v713 = vpop.permute.xlu0 %712
          %714 = vrot.lane.b32.xlu0 %v709, 122
          %v715 = vpop.permute.xlu0 %714
          %v718 = vadd.f32 %v704, %v713
          %v719 = vadd.f32 %v705, %v715
          %s720 = sld [smem:[#allocation9 + $0x7]]
          %v721 = vld [vmem:[#allocation4 + $0x1] sm:$0xff]
          %v722 = vld [vmem:[#allocation4 + $0x9] sm:$0xff]
          %v723 = vstv %s720
          %v724 = vmul.f32 %v723, %v721
          %v725 = vmul.f32 %v723, %v722
          %v726 = vadd.f32 %v718, %v724
          %v727 = vadd.f32 %v719, %v725
          %s728 = sld [smem:[#allocation9 + $0x8]]
          %v729 = vstv %s728
          %v730 = vmul.f32 %v729, %v721
          %v731 = vmul.f32 %v729, %v722
          %734 = vrot.lane.b32.xlu0 %v730, 127
          %v735 = vpop.permute.xlu0 %734
          %736 = vrot.lane.b32.xlu0 %v731, 127
          %v737 = vpop.permute.xlu0 %736
          %v740 = vadd.f32 %v726, %v735
          %v741 = vadd.f32 %v727, %v737
          %s742 = sld [smem:[#allocation9 + $0x9]]
          %v743 = vstv %s742
          %v744 = vmul.f32 %v743, %v721
          %v745 = vmul.f32 %v743, %v722
          %748 = vrot.lane.b32.xlu0 %v744, 126
          %v749 = vpop.permute.xlu0 %748
          %750 = vrot.lane.b32.xlu0 %v745, 126
          %v751 = vpop.permute.xlu0 %750
          %v754 = vadd.f32 %v740, %v749
          %v755 = vadd.f32 %v741, %v751
          %s756 = sld [smem:[#allocation9 + $0xa]]
          %v757 = vstv %s756
          %v758 = vmul.f32 %v757, %v721
          %v759 = vmul.f32 %v757, %v722
          %762 = vrot.lane.b32.xlu0 %v758, 125
          %v763 = vpop.permute.xlu0 %762
          %764 = vrot.lane.b32.xlu0 %v759, 125
          %v765 = vpop.permute.xlu0 %764
          %v768 = vadd.f32 %v754, %v763
          %v769 = vadd.f32 %v755, %v765
          %s770 = sld [smem:[#allocation9 + $0xb]]
          %v771 = vstv %s770
          %v772 = vmul.f32 %v771, %v721
          %v773 = vmul.f32 %v771, %v722
          %776 = vrot.lane.b32.xlu0 %v772, 124
          %v777 = vpop.permute.xlu0 %776
          %778 = vrot.lane.b32.xlu0 %v773, 124
          %v779 = vpop.permute.xlu0 %778
          %v782 = vadd.f32 %v768, %v777
          %v783 = vadd.f32 %v769, %v779
          %s784 = sld [smem:[#allocation9 + $0xc]]
          %v785 = vstv %s784
          %v786 = vmul.f32 %v785, %v721
          %v787 = vmul.f32 %v785, %v722
          %790 = vrot.lane.b32.xlu0 %v786, 123
          %v791 = vpop.permute.xlu0 %790
          %792 = vrot.lane.b32.xlu0 %v787, 123
          %v793 = vpop.permute.xlu0 %792
          %v796 = vadd.f32 %v782, %v791
          %v797 = vadd.f32 %v783, %v793
          %s798 = sld [smem:[#allocation9 + $0xd]]
          %v799 = vstv %s798
          %v800 = vmul.f32 %v799, %v721
          %v801 = vmul.f32 %v799, %v722
          %804 = vrot.lane.b32.xlu0 %v800, 122
          %v805 = vpop.permute.xlu0 %804
          %806 = vrot.lane.b32.xlu0 %v801, 122
          %v807 = vpop.permute.xlu0 %806
          %v810 = vadd.f32 %v796, %v805
          %v811 = vadd.f32 %v797, %v807
          %s812 = sld [smem:[#allocation9 + $0xe]]
          %v813 = vld [vmem:[#allocation4 + $0x2] sm:$0xff]
          %v814 = vld [vmem:[#allocation4 + $0xa] sm:$0xff]
          %v815 = vstv %s812
          %v816 = vmul.f32 %v815, %v813
          %v817 = vmul.f32 %v815, %v814
          %v818 = vadd.f32 %v810, %v816
          %v819 = vadd.f32 %v811, %v817
          %s820 = sld [smem:[#allocation9 + $0xf]]
          %v821 = vstv %s820
          %v822 = vmul.f32 %v821, %v813
          %v823 = vmul.f32 %v821, %v814
          %826 = vrot.lane.b32.xlu0 %v822, 127
          %v827 = vpop.permute.xlu0 %826
          %828 = vrot.lane.b32.xlu0 %v823, 127
          %v829 = vpop.permute.xlu0 %828
          %v832 = vadd.f32 %v818, %v827
          %v833 = vadd.f32 %v819, %v829
          %s834 = sld [smem:[#allocation9 + $0x10]]
          %v835 = vstv %s834
          %v836 = vmul.f32 %v835, %v813
          %v837 = vmul.f32 %v835, %v814
          %840 = vrot.lane.b32.xlu0 %v836, 126
          %v841 = vpop.permute.xlu0 %840
          %842 = vrot.lane.b32.xlu0 %v837, 126
          %v843 = vpop.permute.xlu0 %842
          %v846 = vadd.f32 %v832, %v841
          %v847 = vadd.f32 %v833, %v843
          %s848 = sld [smem:[#allocation9 + $0x11]]
          %v849 = vstv %s848
          %v850 = vmul.f32 %v849, %v813
          %v851 = vmul.f32 %v849, %v814
          %854 = vrot.lane.b32.xlu0 %v850, 125
          %v855 = vpop.permute.xlu0 %854
          %856 = vrot.lane.b32.xlu0 %v851, 125
          %v857 = vpop.permute.xlu0 %856
          %v860 = vadd.f32 %v846, %v855
          %v861 = vadd.f32 %v847, %v857
          %s862 = sld [smem:[#allocation9 + $0x12]]
          %v863 = vstv %s862
          %v864 = vmul.f32 %v863, %v813
          %v865 = vmul.f32 %v863, %v814
          %868 = vrot.lane.b32.xlu0 %v864, 124
          %v869 = vpop.permute.xlu0 %868
          %870 = vrot.lane.b32.xlu0 %v865, 124
          %v871 = vpop.permute.xlu0 %870
          %v874 = vadd.f32 %v860, %v869
          %v875 = vadd.f32 %v861, %v871
          %s876 = sld [smem:[#allocation9 + $0x13]]
          %v877 = vstv %s876
          %v878 = vmul.f32 %v877, %v813
          %v879 = vmul.f32 %v877, %v814
          %882 = vrot.lane.b32.xlu0 %v878, 123
          %v883 = vpop.permute.xlu0 %882
          %884 = vrot.lane.b32.xlu0 %v879, 123
          %v885 = vpop.permute.xlu0 %884
          %v888 = vadd.f32 %v874, %v883
          %v889 = vadd.f32 %v875, %v885
          %s890 = sld [smem:[#allocation9 + $0x14]]
          %v891 = vstv %s890
          %v892 = vmul.f32 %v891, %v813
          %v893 = vmul.f32 %v891, %v814
          %896 = vrot.lane.b32.xlu0 %v892, 122
          %v897 = vpop.permute.xlu0 %896
          %898 = vrot.lane.b32.xlu0 %v893, 122
          %v899 = vpop.permute.xlu0 %898
          %v902 = vadd.f32 %v888, %v897
          %v903 = vadd.f32 %v889, %v899
          %s904 = sld [smem:[#allocation9 + $0x15]]
          %v905 = vld [vmem:[#allocation4 + $0x3] sm:$0xff]
          %v906 = vld [vmem:[#allocation4 + $0xb] sm:$0xff]
          %v907 = vstv %s904
          %v908 = vmul.f32 %v907, %v905
          %v909 = vmul.f32 %v907, %v906
          %v910 = vadd.f32 %v902, %v908
          %v911 = vadd.f32 %v903, %v909
          %s912 = sld [smem:[#allocation9 + $0x16]]
          %v913 = vstv %s912
          %v914 = vmul.f32 %v913, %v905
          %v915 = vmul.f32 %v913, %v906
          %918 = vrot.lane.b32.xlu0 %v914, 127
          %v919 = vpop.permute.xlu0 %918
          %920 = vrot.lane.b32.xlu0 %v915, 127
          %v921 = vpop.permute.xlu0 %920
          %v924 = vadd.f32 %v910, %v919
          %v925 = vadd.f32 %v911, %v921
          %s926 = sld [smem:[#allocation9 + $0x17]]
          %v927 = vstv %s926
          %v928 = vmul.f32 %v927, %v905
          %v929 = vmul.f32 %v927, %v906
          %932 = vrot.lane.b32.xlu0 %v928, 126
          %v933 = vpop.permute.xlu0 %932
          %934 = vrot.lane.b32.xlu0 %v929, 126
          %v935 = vpop.permute.xlu0 %934
          %v938 = vadd.f32 %v924, %v933
          %v939 = vadd.f32 %v925, %v935
          %s940 = sld [smem:[#allocation9 + $0x18]]
          %v941 = vstv %s940
          %v942 = vmul.f32 %v941, %v905
          %v943 = vmul.f32 %v941, %v906
          %946 = vrot.lane.b32.xlu0 %v942, 125
          %v947 = vpop.permute.xlu0 %946
          %948 = vrot.lane.b32.xlu0 %v943, 125
          %v949 = vpop.permute.xlu0 %948
          %v952 = vadd.f32 %v938, %v947
          %v953 = vadd.f32 %v939, %v949
          %s954 = sld [smem:[#allocation9 + $0x19]]
          %v955 = vstv %s954
          %v956 = vmul.f32 %v955, %v905
          %v957 = vmul.f32 %v955, %v906
          %960 = vrot.lane.b32.xlu0 %v956, 124
          %v961 = vpop.permute.xlu0 %960
          %962 = vrot.lane.b32.xlu0 %v957, 124
          %v963 = vpop.permute.xlu0 %962
          %v966 = vadd.f32 %v952, %v961
          %v967 = vadd.f32 %v953, %v963
          %s968 = sld [smem:[#allocation9 + $0x1a]]
          %v969 = vstv %s968
          %v970 = vmul.f32 %v969, %v905
          %v971 = vmul.f32 %v969, %v906
          %974 = vrot.lane.b32.xlu0 %v970, 123
          %v975 = vpop.permute.xlu0 %974
          %976 = vrot.lane.b32.xlu0 %v971, 123
          %v977 = vpop.permute.xlu0 %976
          %v980 = vadd.f32 %v966, %v975
          %v981 = vadd.f32 %v967, %v977
          %s982 = sld [smem:[#allocation9 + $0x1b]]
          %v983 = vstv %s982
          %v984 = vmul.f32 %v983, %v905
          %v985 = vmul.f32 %v983, %v906
          %988 = vrot.lane.b32.xlu0 %v984, 122
          %v989 = vpop.permute.xlu0 %988
          %990 = vrot.lane.b32.xlu0 %v985, 122
          %v991 = vpop.permute.xlu0 %990
          %v994 = vadd.f32 %v980, %v989
          %v995 = vadd.f32 %v981, %v991
          %s996 = sld [smem:[#allocation9 + $0x1c]]
          %v997 = vld [vmem:[#allocation4 + $0x4] sm:$0xff]
          %v998 = vld [vmem:[#allocation4 + $0xc] sm:$0xff]
          %v999 = vstv %s996
          %v1000 = vmul.f32 %v999, %v997
          %v1001 = vmul.f32 %v999, %v998
          %v1002 = vadd.f32 %v994, %v1000
          %v1003 = vadd.f32 %v995, %v1001
          %s1004 = sld [smem:[#allocation9 + $0x1d]]
          %v1005 = vstv %s1004
          %v1006 = vmul.f32 %v1005, %v997
          %v1007 = vmul.f32 %v1005, %v998
          %1010 = vrot.lane.b32.xlu0 %v1006, 127
          %v1011 = vpop.permute.xlu0 %1010
          %1012 = vrot.lane.b32.xlu0 %v1007, 127
          %v1013 = vpop.permute.xlu0 %1012
          %v1016 = vadd.f32 %v1002, %v1011
          %v1017 = vadd.f32 %v1003, %v1013
          %s1018 = sld [smem:[#allocation9 + $0x1e]]
          %v1019 = vstv %s1018
          %v1020 = vmul.f32 %v1019, %v997
          %v1021 = vmul.f32 %v1019, %v998
          %1024 = vrot.lane.b32.xlu0 %v1020, 126
          %v1025 = vpop.permute.xlu0 %1024
          %1026 = vrot.lane.b32.xlu0 %v1021, 126
          %v1027 = vpop.permute.xlu0 %1026
          %v1030 = vadd.f32 %v1016, %v1025
          %v1031 = vadd.f32 %v1017, %v1027
          %s1032 = sld [smem:[#allocation9 + $0x1f]]
          %v1033 = vstv %s1032
          %v1034 = vmul.f32 %v1033, %v997
          %v1035 = vmul.f32 %v1033, %v998
          %1038 = vrot.lane.b32.xlu0 %v1034, 125
          %v1039 = vpop.permute.xlu0 %1038
          %1040 = vrot.lane.b32.xlu0 %v1035, 125
          %v1041 = vpop.permute.xlu0 %1040
          %v1044 = vadd.f32 %v1030, %v1039
          %v1045 = vadd.f32 %v1031, %v1041
          %s1046 = sld [smem:[#allocation9 + $0x20]]
          %v1047 = vstv %s1046
          %v1048 = vmul.f32 %v1047, %v997
          %v1049 = vmul.f32 %v1047, %v998
          %1052 = vrot.lane.b32.xlu0 %v1048, 124
          %v1053 = vpop.permute.xlu0 %1052
          %1054 = vrot.lane.b32.xlu0 %v1049, 124
          %v1055 = vpop.permute.xlu0 %1054
          %v1058 = vadd.f32 %v1044, %v1053
          %v1059 = vadd.f32 %v1045, %v1055
          %s1060 = sld [smem:[#allocation9 + $0x21]]
          %v1061 = vstv %s1060
          %v1062 = vmul.f32 %v1061, %v997
          %v1063 = vmul.f32 %v1061, %v998
          %1066 = vrot.lane.b32.xlu0 %v1062, 123
          %v1067 = vpop.permute.xlu0 %1066
          %1068 = vrot.lane.b32.xlu0 %v1063, 123
          %v1069 = vpop.permute.xlu0 %1068
          %v1072 = vadd.f32 %v1058, %v1067
          %v1073 = vadd.f32 %v1059, %v1069
          %s1074 = sld [smem:[#allocation9 + $0x22]]
          %v1075 = vstv %s1074
          %v1076 = vmul.f32 %v1075, %v997
          %v1077 = vmul.f32 %v1075, %v998
          %1080 = vrot.lane.b32.xlu0 %v1076, 122
          %v1081 = vpop.permute.xlu0 %1080
          %1082 = vrot.lane.b32.xlu0 %v1077, 122
          %v1083 = vpop.permute.xlu0 %1082
          %v1086 = vadd.f32 %v1072, %v1081
          %v1087 = vadd.f32 %v1073, %v1083
          %s1088 = sld [smem:[#allocation9 + $0x23]]
          %v1089 = vld [vmem:[#allocation4 + $0x5] sm:$0xff]
          %v1090 = vld [vmem:[#allocation4 + $0xd] sm:$0xff]
          %v1091 = vstv %s1088
          %v1092 = vmul.f32 %v1091, %v1089
          %v1093 = vmul.f32 %v1091, %v1090
          %v1094 = vadd.f32 %v1086, %v1092
          %v1095 = vadd.f32 %v1087, %v1093
          %s1096 = sld [smem:[#allocation9 + $0x24]]
          %v1097 = vstv %s1096
          %v1098 = vmul.f32 %v1097, %v1089
          %v1099 = vmul.f32 %v1097, %v1090
          %1102 = vrot.lane.b32.xlu0 %v1098, 127
          %v1103 = vpop.permute.xlu0 %1102
          %1104 = vrot.lane.b32.xlu0 %v1099, 127
          %v1105 = vpop.permute.xlu0 %1104
          %v1108 = vadd.f32 %v1094, %v1103
          %v1109 = vadd.f32 %v1095, %v1105
          %s1110 = sld [smem:[#allocation9 + $0x25]]
          %v1111 = vstv %s1110
          %v1112 = vmul.f32 %v1111, %v1089
          %v1113 = vmul.f32 %v1111, %v1090
          %1116 = vrot.lane.b32.xlu0 %v1112, 126
          %v1117 = vpop.permute.xlu0 %1116
          %1118 = vrot.lane.b32.xlu0 %v1113, 126
          %v1119 = vpop.permute.xlu0 %1118
          %v1122 = vadd.f32 %v1108, %v1117
          %v1123 = vadd.f32 %v1109, %v1119
          %s1124 = sld [smem:[#allocation9 + $0x26]]
          %v1125 = vstv %s1124
          %v1126 = vmul.f32 %v1125, %v1089
          %v1127 = vmul.f32 %v1125, %v1090
          %1130 = vrot.lane.b32.xlu0 %v1126, 125
          %v1131 = vpop.permute.xlu0 %1130
          %1132 = vrot.lane.b32.xlu0 %v1127, 125
          %v1133 = vpop.permute.xlu0 %1132
          %v1136 = vadd.f32 %v1122, %v1131
          %v1137 = vadd.f32 %v1123, %v1133
          %s1138 = sld [smem:[#allocation9 + $0x27]]
          %v1139 = vstv %s1138
          %v1140 = vmul.f32 %v1139, %v1089
          %v1141 = vmul.f32 %v1139, %v1090
          %1144 = vrot.lane.b32.xlu0 %v1140, 124
          %v1145 = vpop.permute.xlu0 %1144
          %1146 = vrot.lane.b32.xlu0 %v1141, 124
          %v1147 = vpop.permute.xlu0 %1146
          %v1150 = vadd.f32 %v1136, %v1145
          %v1151 = vadd.f32 %v1137, %v1147
          %s1152 = sld [smem:[#allocation9 + $0x28]]
          %v1153 = vstv %s1152
          %v1154 = vmul.f32 %v1153, %v1089
          %v1155 = vmul.f32 %v1153, %v1090
          %1158 = vrot.lane.b32.xlu0 %v1154, 123
          %v1159 = vpop.permute.xlu0 %1158
          %1160 = vrot.lane.b32.xlu0 %v1155, 123
          %v1161 = vpop.permute.xlu0 %1160
          %v1164 = vadd.f32 %v1150, %v1159
          %v1165 = vadd.f32 %v1151, %v1161
          %s1166 = sld [smem:[#allocation9 + $0x29]]
          %v1167 = vstv %s1166
          %v1168 = vmul.f32 %v1167, %v1089
          %v1169 = vmul.f32 %v1167, %v1090
          %1172 = vrot.lane.b32.xlu0 %v1168, 122
          %v1173 = vpop.permute.xlu0 %1172
          %1174 = vrot.lane.b32.xlu0 %v1169, 122
          %v1175 = vpop.permute.xlu0 %1174
          %v1178 = vadd.f32 %v1164, %v1173
          %v1179 = vadd.f32 %v1165, %v1175
          %s1180 = sld [smem:[#allocation9 + $0x2a]]
          %v1181 = vld [vmem:[#allocation4 + $0x6] sm:$0xff]
          %v1182 = vld [vmem:[#allocation4 + $0xe] sm:$0xff]
          %v1183 = vstv %s1180
          %v1184 = vmul.f32 %v1183, %v1181
          %v1185 = vmul.f32 %v1183, %v1182
          %v1186 = vadd.f32 %v1178, %v1184
          %v1187 = vadd.f32 %v1179, %v1185
          %s1188 = sld [smem:[#allocation9 + $0x2b]]
          %v1189 = vstv %s1188
          %v1190 = vmul.f32 %v1189, %v1181
          %v1191 = vmul.f32 %v1189, %v1182
          %1194 = vrot.lane.b32.xlu0 %v1190, 127
          %v1195 = vpop.permute.xlu0 %1194
          %1196 = vrot.lane.b32.xlu0 %v1191, 127
          %v1197 = vpop.permute.xlu0 %1196
          %v1200 = vadd.f32 %v1186, %v1195
          %v1201 = vadd.f32 %v1187, %v1197
          %s1202 = sld [smem:[#allocation9 + $0x2c]]
          %v1203 = vstv %s1202
          %v1204 = vmul.f32 %v1203, %v1181
          %v1205 = vmul.f32 %v1203, %v1182
          %1208 = vrot.lane.b32.xlu0 %v1204, 126
          %v1209 = vpop.permute.xlu0 %1208
          %1210 = vrot.lane.b32.xlu0 %v1205, 126
          %v1211 = vpop.permute.xlu0 %1210
          %v1214 = vadd.f32 %v1200, %v1209
          %v1215 = vadd.f32 %v1201, %v1211
          %s1216 = sld [smem:[#allocation9 + $0x2d]]
          %v1217 = vstv %s1216
          %v1218 = vmul.f32 %v1217, %v1181
          %v1219 = vmul.f32 %v1217, %v1182
          %1222 = vrot.lane.b32.xlu0 %v1218, 125
          %v1223 = vpop.permute.xlu0 %1222
          %1224 = vrot.lane.b32.xlu0 %v1219, 125
          %v1225 = vpop.permute.xlu0 %1224
          %v1228 = vadd.f32 %v1214, %v1223
          %v1229 = vadd.f32 %v1215, %v1225
          %s1230 = sld [smem:[#allocation9 + $0x2e]]
          %v1231 = vstv %s1230
          %v1232 = vmul.f32 %v1231, %v1181
          %v1233 = vmul.f32 %v1231, %v1182
          %1236 = vrot.lane.b32.xlu0 %v1232, 124
          %v1237 = vpop.permute.xlu0 %1236
          %1238 = vrot.lane.b32.xlu0 %v1233, 124
          %v1239 = vpop.permute.xlu0 %1238
          %v1242 = vadd.f32 %v1228, %v1237
          %v1243 = vadd.f32 %v1229, %v1239
          %s1244 = sld [smem:[#allocation9 + $0x2f]]
          %v1245 = vstv %s1244
          %v1246 = vmul.f32 %v1245, %v1181
          %v1247 = vmul.f32 %v1245, %v1182
          %1250 = vrot.lane.b32.xlu0 %v1246, 123
          %v1251 = vpop.permute.xlu0 %1250
          %1252 = vrot.lane.b32.xlu0 %v1247, 123
          %v1253 = vpop.permute.xlu0 %1252
          %v1256 = vadd.f32 %v1242, %v1251
          %v1257 = vadd.f32 %v1243, %v1253
          %s1258 = sld [smem:[#allocation9 + $0x30]]
          %v1259 = vstv %s1258
          %v1260 = vmul.f32 %v1259, %v1181
          %v1261 = vmul.f32 %v1259, %v1182
          %1264 = vrot.lane.b32.xlu0 %v1260, 122
          %v1265 = vpop.permute.xlu0 %1264
          %1266 = vrot.lane.b32.xlu0 %v1261, 122
          %v1267 = vpop.permute.xlu0 %1266
          %v1270 = vadd.f32 %v1256, %v1265
          %v1271 = vadd.f32 %v1257, %v1267
          %s1272 = sld [smem:[#allocation9 + $0x31]]
          %v1273 = vld [vmem:[%s311] sm:$0xff]
          %v1274 = vld [vmem:[%s311 + $0x8] sm:$0xff]
          %v1275 = vstv %s1272
          %v1276 = vmul.f32 %v1275, %v1273
          %v1277 = vmul.f32 %v1275, %v1274
          %v1278 = vadd.f32 %v1270, %v1276
          %v1279 = vadd.f32 %v1271, %v1277
          %s1280 = sld [smem:[#allocation9 + $0x32]]
          %v1281 = vstv %s1280
          %v1282 = vmul.f32 %v1281, %v1273
          %v1283 = vmul.f32 %v1281, %v1274
          %1286 = vrot.lane.b32.xlu0 %v1282, 127
          %v1287 = vpop.permute.xlu0 %1286
          %1288 = vrot.lane.b32.xlu0 %v1283, 127
          %v1289 = vpop.permute.xlu0 %1288
          %v1292 = vadd.f32 %v1278, %v1287
          %v1293 = vadd.f32 %v1279, %v1289
          %s1294 = sld [smem:[#allocation9 + $0x33]]
          %v1295 = vstv %s1294
          %v1296 = vmul.f32 %v1295, %v1273
          %v1297 = vmul.f32 %v1295, %v1274
          %1300 = vrot.lane.b32.xlu0 %v1296, 126
          %v1301 = vpop.permute.xlu0 %1300
          %1302 = vrot.lane.b32.xlu0 %v1297, 126
          %v1303 = vpop.permute.xlu0 %1302
          %v1306 = vadd.f32 %v1292, %v1301
          %v1307 = vadd.f32 %v1293, %v1303
          %s1308 = sld [smem:[#allocation9 + $0x34]]
          %v1309 = vstv %s1308
          %v1310 = vmul.f32 %v1309, %v1273
          %v1311 = vmul.f32 %v1309, %v1274
          %1314 = vrot.lane.b32.xlu0 %v1310, 125
          %v1315 = vpop.permute.xlu0 %1314
          %1316 = vrot.lane.b32.xlu0 %v1311, 125
          %v1317 = vpop.permute.xlu0 %1316
          %v1320 = vadd.f32 %v1306, %v1315
          %v1321 = vadd.f32 %v1307, %v1317
          %s1322 = sld [smem:[#allocation9 + $0x35]]
          %v1323 = vstv %s1322
          %v1324 = vmul.f32 %v1323, %v1273
          %v1325 = vmul.f32 %v1323, %v1274
          %1328 = vrot.lane.b32.xlu0 %v1324, 124
          %v1329 = vpop.permute.xlu0 %1328
          %1330 = vrot.lane.b32.xlu0 %v1325, 124
          %v1331 = vpop.permute.xlu0 %1330
          %v1334 = vadd.f32 %v1320, %v1329
          %v1335 = vadd.f32 %v1321, %v1331
          %s1336 = sld [smem:[#allocation9 + $0x36]]
          %v1337 = vstv %s1336
          %v1338 = vmul.f32 %v1337, %v1273
          %v1339 = vmul.f32 %v1337, %v1274
          %1342 = vrot.lane.b32.xlu0 %v1338, 123
          %v1343 = vpop.permute.xlu0 %1342
          %1344 = vrot.lane.b32.xlu0 %v1339, 123
          %v1345 = vpop.permute.xlu0 %1344
          %v1348 = vadd.f32 %v1334, %v1343
          %v1349 = vadd.f32 %v1335, %v1345
          %s1350 = sld [smem:[#allocation9 + $0x37]]
          %v1351 = vstv %s1350
          %v1352 = vmul.f32 %v1351, %v1273
          %v1353 = vmul.f32 %v1351, %v1274
          %1356 = vrot.lane.b32.xlu0 %v1352, 122
          %v1357 = vpop.permute.xlu0 %1356
          %1358 = vrot.lane.b32.xlu0 %v1353, 122
          %v1359 = vpop.permute.xlu0 %1358
          %v1362 = vadd.f32 %v1348, %v1357
          %v1363 = vadd.f32 %v1349, %v1359
          %s1364 = sld [smem:[#allocation9 + $0x38]]
          %v1365 = vld [vmem:[%s311 + $0x1] sm:$0xff]
          %v1366 = vld [vmem:[%s311 + $0x9] sm:$0xff]
          %v1367 = vstv %s1364
          %v1368 = vmul.f32 %v1367, %v1365
          %v1369 = vmul.f32 %v1367, %v1366
          %v1370 = vadd.f32 %v1362, %v1368
          %v1371 = vadd.f32 %v1363, %v1369
          %s1372 = sld [smem:[#allocation9 + $0x39]]
          %v1373 = vstv %s1372
          %v1374 = vmul.f32 %v1373, %v1365
          %v1375 = vmul.f32 %v1373, %v1366
          %1378 = vrot.lane.b32.xlu0 %v1374, 127
          %v1379 = vpop.permute.xlu0 %1378
          %1380 = vrot.lane.b32.xlu0 %v1375, 127
          %v1381 = vpop.permute.xlu0 %1380
          %v1384 = vadd.f32 %v1370, %v1379
          %v1385 = vadd.f32 %v1371, %v1381
          %s1386 = sld [smem:[#allocation9 + $0x3a]]
          %v1387 = vstv %s1386
          %v1388 = vmul.f32 %v1387, %v1365
          %v1389 = vmul.f32 %v1387, %v1366
          %1392 = vrot.lane.b32.xlu0 %v1388, 126
          %v1393 = vpop.permute.xlu0 %1392
          %1394 = vrot.lane.b32.xlu0 %v1389, 126
          %v1395 = vpop.permute.xlu0 %1394
          %v1398 = vadd.f32 %v1384, %v1393
          %v1399 = vadd.f32 %v1385, %v1395
          %s1400 = sld [smem:[#allocation9 + $0x3b]]
          %v1401 = vstv %s1400
          %v1402 = vmul.f32 %v1401, %v1365
          %v1403 = vmul.f32 %v1401, %v1366
          %1406 = vrot.lane.b32.xlu0 %v1402, 125
          %v1407 = vpop.permute.xlu0 %1406
          %1408 = vrot.lane.b32.xlu0 %v1403, 125
          %v1409 = vpop.permute.xlu0 %1408
          %v1412 = vadd.f32 %v1398, %v1407
          %v1413 = vadd.f32 %v1399, %v1409
          %s1414 = sld [smem:[#allocation9 + $0x3c]]
          %v1415 = vstv %s1414
          %v1416 = vmul.f32 %v1415, %v1365
          %v1417 = vmul.f32 %v1415, %v1366
          %1420 = vrot.lane.b32.xlu0 %v1416, 124
          %v1421 = vpop.permute.xlu0 %1420
          %1422 = vrot.lane.b32.xlu0 %v1417, 124
          %v1423 = vpop.permute.xlu0 %1422
          %v1426 = vadd.f32 %v1412, %v1421
          %v1427 = vadd.f32 %v1413, %v1423
          %s1428 = sld [smem:[#allocation9 + $0x3d]]
          %v1429 = vstv %s1428
          %v1430 = vmul.f32 %v1429, %v1365
          %v1431 = vmul.f32 %v1429, %v1366
          %1434 = vrot.lane.b32.xlu0 %v1430, 123
          %v1435 = vpop.permute.xlu0 %1434
          %1436 = vrot.lane.b32.xlu0 %v1431, 123
          %v1437 = vpop.permute.xlu0 %1436
          %v1440 = vadd.f32 %v1426, %v1435
          %v1441 = vadd.f32 %v1427, %v1437
          %s1442 = sld [smem:[#allocation9 + $0x3e]]
          %v1443 = vstv %s1442
          %v1444 = vmul.f32 %v1443, %v1365
          %v1445 = vmul.f32 %v1443, %v1366
          %1448 = vrot.lane.b32.xlu0 %v1444, 122
          %v1449 = vpop.permute.xlu0 %1448
          %1450 = vrot.lane.b32.xlu0 %v1445, 122
          %v1451 = vpop.permute.xlu0 %1450
          %v1454 = vadd.f32 %v1440, %v1449
          %v1455 = vadd.f32 %v1441, %v1451
          %s1456 = sld [smem:[#allocation9 + $0x3f]]
          %v1457 = vld [vmem:[%s311 + $0x2] sm:$0xff]
          %v1458 = vld [vmem:[%s311 + $0xa] sm:$0xff]
          %v1459 = vstv %s1456
          %v1460 = vmul.f32 %v1459, %v1457
          %v1461 = vmul.f32 %v1459, %v1458
          %v1462 = vadd.f32 %v1454, %v1460
          %v1463 = vadd.f32 %v1455, %v1461
          %s1464 = sld [smem:[#allocation9 + $0x40]]
          %v1465 = vstv %s1464
          %v1466 = vmul.f32 %v1465, %v1457
          %v1467 = vmul.f32 %v1465, %v1458
          %1470 = vrot.lane.b32.xlu0 %v1466, 127
          %v1471 = vpop.permute.xlu0 %1470
          %1472 = vrot.lane.b32.xlu0 %v1467, 127
          %v1473 = vpop.permute.xlu0 %1472
          %v1476 = vadd.f32 %v1462, %v1471
          %v1477 = vadd.f32 %v1463, %v1473
          %s1478 = sld [smem:[#allocation9 + $0x41]]
          %v1479 = vstv %s1478
          %v1480 = vmul.f32 %v1479, %v1457
          %v1481 = vmul.f32 %v1479, %v1458
          %1484 = vrot.lane.b32.xlu0 %v1480, 126
          %v1485 = vpop.permute.xlu0 %1484
          %1486 = vrot.lane.b32.xlu0 %v1481, 126
          %v1487 = vpop.permute.xlu0 %1486
          %v1490 = vadd.f32 %v1476, %v1485
          %v1491 = vadd.f32 %v1477, %v1487
          %s1492 = sld [smem:[#allocation9 + $0x42]]
          %v1493 = vstv %s1492
          %v1494 = vmul.f32 %v1493, %v1457
          %v1495 = vmul.f32 %v1493, %v1458
          %1498 = vrot.lane.b32.xlu0 %v1494, 125
          %v1499 = vpop.permute.xlu0 %1498
          %1500 = vrot.lane.b32.xlu0 %v1495, 125
          %v1501 = vpop.permute.xlu0 %1500
          %v1504 = vadd.f32 %v1490, %v1499
          %v1505 = vadd.f32 %v1491, %v1501
          %s1506 = sld [smem:[#allocation9 + $0x43]]
          %v1507 = vstv %s1506
          %v1508 = vmul.f32 %v1507, %v1457
          %v1509 = vmul.f32 %v1507, %v1458
          %1512 = vrot.lane.b32.xlu0 %v1508, 124
          %v1513 = vpop.permute.xlu0 %1512
          %1514 = vrot.lane.b32.xlu0 %v1509, 124
          %v1515 = vpop.permute.xlu0 %1514
          %v1518 = vadd.f32 %v1504, %v1513
          %v1519 = vadd.f32 %v1505, %v1515
          %s1520 = sld [smem:[#allocation9 + $0x44]]
          %v1521 = vstv %s1520
          %v1522 = vmul.f32 %v1521, %v1457
          %v1523 = vmul.f32 %v1521, %v1458
          %1526 = vrot.lane.b32.xlu0 %v1522, 123
          %v1527 = vpop.permute.xlu0 %1526
          %1528 = vrot.lane.b32.xlu0 %v1523, 123
          %v1529 = vpop.permute.xlu0 %1528
          %v1532 = vadd.f32 %v1518, %v1527
          %v1533 = vadd.f32 %v1519, %v1529
          %s1534 = sld [smem:[#allocation9 + $0x45]]
          %v1535 = vstv %s1534
          %v1536 = vmul.f32 %v1535, %v1457
          %v1537 = vmul.f32 %v1535, %v1458
          %1540 = vrot.lane.b32.xlu0 %v1536, 122
          %v1541 = vpop.permute.xlu0 %1540
          %1542 = vrot.lane.b32.xlu0 %v1537, 122
          %v1543 = vpop.permute.xlu0 %1542
          %v1546 = vadd.f32 %v1532, %v1541
          %v1547 = vadd.f32 %v1533, %v1543
          %s1548 = sld [smem:[#allocation9 + $0x46]]
          %v1549 = vld [vmem:[%s311 + $0x3] sm:$0xff]
          %v1550 = vld [vmem:[%s311 + $0xb] sm:$0xff]
          %v1551 = vstv %s1548
          %v1552 = vmul.f32 %v1551, %v1549
          %v1553 = vmul.f32 %v1551, %v1550
          %v1554 = vadd.f32 %v1546, %v1552
          %v1555 = vadd.f32 %v1547, %v1553
          %s1556 = sld [smem:[#allocation9 + $0x47]]
          %v1557 = vstv %s1556
          %v1558 = vmul.f32 %v1557, %v1549
          %v1559 = vmul.f32 %v1557, %v1550
          %1562 = vrot.lane.b32.xlu0 %v1558, 127
          %v1563 = vpop.permute.xlu0 %1562
          %1564 = vrot.lane.b32.xlu0 %v1559, 127
          %v1565 = vpop.permute.xlu0 %1564
          %v1568 = vadd.f32 %v1554, %v1563
          %v1569 = vadd.f32 %v1555, %v1565
          %s1570 = sld [smem:[#allocation9 + $0x48]]
          %v1571 = vstv %s1570
          %v1572 = vmul.f32 %v1571, %v1549
          %v1573 = vmul.f32 %v1571, %v1550
          %1576 = vrot.lane.b32.xlu0 %v1572, 126
          %v1577 = vpop.permute.xlu0 %1576
          %1578 = vrot.lane.b32.xlu0 %v1573, 126
          %v1579 = vpop.permute.xlu0 %1578
          %v1582 = vadd.f32 %v1568, %v1577
          %v1583 = vadd.f32 %v1569, %v1579
          %s1584 = sld [smem:[#allocation9 + $0x49]]
          %v1585 = vstv %s1584
          %v1586 = vmul.f32 %v1585, %v1549
          %v1587 = vmul.f32 %v1585, %v1550
          %1590 = vrot.lane.b32.xlu0 %v1586, 125
          %v1591 = vpop.permute.xlu0 %1590
          %1592 = vrot.lane.b32.xlu0 %v1587, 125
          %v1593 = vpop.permute.xlu0 %1592
          %v1596 = vadd.f32 %v1582, %v1591
          %v1597 = vadd.f32 %v1583, %v1593
          %s1598 = sld [smem:[#allocation9 + $0x4a]]
          %v1599 = vstv %s1598
          %v1600 = vmul.f32 %v1599, %v1549
          %v1601 = vmul.f32 %v1599, %v1550
          %1604 = vrot.lane.b32.xlu0 %v1600, 124
          %v1605 = vpop.permute.xlu0 %1604
          %1606 = vrot.lane.b32.xlu0 %v1601, 124
          %v1607 = vpop.permute.xlu0 %1606
          %v1610 = vadd.f32 %v1596, %v1605
          %v1611 = vadd.f32 %v1597, %v1607
          %s1612 = sld [smem:[#allocation9 + $0x4b]]
          %v1613 = vstv %s1612
          %v1614 = vmul.f32 %v1613, %v1549
          %v1615 = vmul.f32 %v1613, %v1550
          %1618 = vrot.lane.b32.xlu0 %v1614, 123
          %v1619 = vpop.permute.xlu0 %1618
          %1620 = vrot.lane.b32.xlu0 %v1615, 123
          %v1621 = vpop.permute.xlu0 %1620
          %v1624 = vadd.f32 %v1610, %v1619
          %v1625 = vadd.f32 %v1611, %v1621
          %s1626 = sld [smem:[#allocation9 + $0x4c]]
          %v1627 = vstv %s1626
          %v1628 = vmul.f32 %v1627, %v1549
          %v1629 = vmul.f32 %v1627, %v1550
          %1632 = vrot.lane.b32.xlu0 %v1628, 122
          %v1633 = vpop.permute.xlu0 %1632
          %1634 = vrot.lane.b32.xlu0 %v1629, 122
          %v1635 = vpop.permute.xlu0 %1634
          %v1638 = vadd.f32 %v1624, %v1633
          %v1639 = vadd.f32 %v1625, %v1635
          %s1640 = sld [smem:[#allocation9 + $0x4d]]
          %v1641 = vld [vmem:[%s311 + $0x4] sm:$0xff]
          %v1642 = vld [vmem:[%s311 + $0xc] sm:$0xff]
          %v1643 = vstv %s1640
          %v1644 = vmul.f32 %v1643, %v1641
          %v1645 = vmul.f32 %v1643, %v1642
          %v1646 = vadd.f32 %v1638, %v1644
          %v1647 = vadd.f32 %v1639, %v1645
          %s1648 = sld [smem:[#allocation9 + $0x4e]]
          %v1649 = vstv %s1648
          %v1650 = vmul.f32 %v1649, %v1641
          %v1651 = vmul.f32 %v1649, %v1642
          %1654 = vrot.lane.b32.xlu0 %v1650, 127
          %v1655 = vpop.permute.xlu0 %1654
          %1656 = vrot.lane.b32.xlu0 %v1651, 127
          %v1657 = vpop.permute.xlu0 %1656
          %v1660 = vadd.f32 %v1646, %v1655
          %v1661 = vadd.f32 %v1647, %v1657
          %s1662 = sld [smem:[#allocation9 + $0x4f]]
          %v1663 = vstv %s1662
          %v1664 = vmul.f32 %v1663, %v1641
          %v1665 = vmul.f32 %v1663, %v1642
          %1668 = vrot.lane.b32.xlu0 %v1664, 126
          %v1669 = vpop.permute.xlu0 %1668
          %1670 = vrot.lane.b32.xlu0 %v1665, 126
          %v1671 = vpop.permute.xlu0 %1670
          %v1674 = vadd.f32 %v1660, %v1669
          %v1675 = vadd.f32 %v1661, %v1671
          %s1676 = sld [smem:[#allocation9 + $0x50]]
          %v1677 = vstv %s1676
          %v1678 = vmul.f32 %v1677, %v1641
          %v1679 = vmul.f32 %v1677, %v1642
          %1682 = vrot.lane.b32.xlu0 %v1678, 125
          %v1683 = vpop.permute.xlu0 %1682
          %1684 = vrot.lane.b32.xlu0 %v1679, 125
          %v1685 = vpop.permute.xlu0 %1684
          %v1688 = vadd.f32 %v1674, %v1683
          %v1689 = vadd.f32 %v1675, %v1685
          %s1690 = sld [smem:[#allocation9 + $0x51]]
          %v1691 = vstv %s1690
          %v1692 = vmul.f32 %v1691, %v1641
          %v1693 = vmul.f32 %v1691, %v1642
          %1696 = vrot.lane.b32.xlu0 %v1692, 124
          %v1697 = vpop.permute.xlu0 %1696
          %1698 = vrot.lane.b32.xlu0 %v1693, 124
          %v1699 = vpop.permute.xlu0 %1698
          %v1702 = vadd.f32 %v1688, %v1697
          %v1703 = vadd.f32 %v1689, %v1699
          %s1704 = sld [smem:[#allocation9 + $0x52]]
          %v1705 = vstv %s1704
          %v1706 = vmul.f32 %v1705, %v1641
          %v1707 = vmul.f32 %v1705, %v1642
          %1710 = vrot.lane.b32.xlu0 %v1706, 123
          %v1711 = vpop.permute.xlu0 %1710
          %1712 = vrot.lane.b32.xlu0 %v1707, 123
          %v1713 = vpop.permute.xlu0 %1712
          %v1716 = vadd.f32 %v1702, %v1711
          %v1717 = vadd.f32 %v1703, %v1713
          %s1718 = sld [smem:[#allocation9 + $0x53]]
          %v1719 = vstv %s1718
          %v1720 = vmul.f32 %v1719, %v1641
          %v1721 = vmul.f32 %v1719, %v1642
          %1724 = vrot.lane.b32.xlu0 %v1720, 122
          %v1725 = vpop.permute.xlu0 %1724
          %1726 = vrot.lane.b32.xlu0 %v1721, 122
          %v1727 = vpop.permute.xlu0 %1726
          %v1730 = vadd.f32 %v1716, %v1725
          %v1731 = vadd.f32 %v1717, %v1727
          %s1732 = sld [smem:[#allocation9 + $0x54]]
          %v1733 = vld [vmem:[%s311 + $0x5] sm:$0xff]
          %v1734 = vld [vmem:[%s311 + $0xd] sm:$0xff]
          %v1735 = vstv %s1732
          %v1736 = vmul.f32 %v1735, %v1733
          %v1737 = vmul.f32 %v1735, %v1734
          %v1738 = vadd.f32 %v1730, %v1736
          %v1739 = vadd.f32 %v1731, %v1737
          %s1740 = sld [smem:[#allocation9 + $0x55]]
          %v1741 = vstv %s1740
          %v1742 = vmul.f32 %v1741, %v1733
          %v1743 = vmul.f32 %v1741, %v1734
          %1746 = vrot.lane.b32.xlu0 %v1742, 127
          %v1747 = vpop.permute.xlu0 %1746
          %1748 = vrot.lane.b32.xlu0 %v1743, 127
          %v1749 = vpop.permute.xlu0 %1748
          %v1752 = vadd.f32 %v1738, %v1747
          %v1753 = vadd.f32 %v1739, %v1749
          %s1754 = sld [smem:[#allocation9 + $0x56]]
          %v1755 = vstv %s1754
          %v1756 = vmul.f32 %v1755, %v1733
          %v1757 = vmul.f32 %v1755, %v1734
          %1760 = vrot.lane.b32.xlu0 %v1756, 126
          %v1761 = vpop.permute.xlu0 %1760
          %1762 = vrot.lane.b32.xlu0 %v1757, 126
          %v1763 = vpop.permute.xlu0 %1762
          %v1766 = vadd.f32 %v1752, %v1761
          %v1767 = vadd.f32 %v1753, %v1763
          %s1768 = sld [smem:[#allocation9 + $0x57]]
          %v1769 = vstv %s1768
          %v1770 = vmul.f32 %v1769, %v1733
          %v1771 = vmul.f32 %v1769, %v1734
          %1774 = vrot.lane.b32.xlu0 %v1770, 125
          %v1775 = vpop.permute.xlu0 %1774
          %1776 = vrot.lane.b32.xlu0 %v1771, 125
          %v1777 = vpop.permute.xlu0 %1776
          %v1780 = vadd.f32 %v1766, %v1775
          %v1781 = vadd.f32 %v1767, %v1777
          %s1782 = sld [smem:[#allocation9 + $0x58]]
          %v1783 = vstv %s1782
          %v1784 = vmul.f32 %v1783, %v1733
          %v1785 = vmul.f32 %v1783, %v1734
          %1788 = vrot.lane.b32.xlu0 %v1784, 124
          %v1789 = vpop.permute.xlu0 %1788
          %1790 = vrot.lane.b32.xlu0 %v1785, 124
          %v1791 = vpop.permute.xlu0 %1790
          %v1794 = vadd.f32 %v1780, %v1789
          %v1795 = vadd.f32 %v1781, %v1791
          %s1796 = sld [smem:[#allocation9 + $0x59]]
          %v1797 = vstv %s1796
          %v1798 = vmul.f32 %v1797, %v1733
          %v1799 = vmul.f32 %v1797, %v1734
          %1802 = vrot.lane.b32.xlu0 %v1798, 123
          %v1803 = vpop.permute.xlu0 %1802
          %1804 = vrot.lane.b32.xlu0 %v1799, 123
          %v1805 = vpop.permute.xlu0 %1804
          %v1808 = vadd.f32 %v1794, %v1803
          %v1809 = vadd.f32 %v1795, %v1805
          %s1810 = sld [smem:[#allocation9 + $0x5a]]
          %v1811 = vstv %s1810
          %v1812 = vmul.f32 %v1811, %v1733
          %v1813 = vmul.f32 %v1811, %v1734
          %1816 = vrot.lane.b32.xlu0 %v1812, 122
          %v1817 = vpop.permute.xlu0 %1816
          %1818 = vrot.lane.b32.xlu0 %v1813, 122
          %v1819 = vpop.permute.xlu0 %1818
          %v1822 = vadd.f32 %v1808, %v1817
          %v1823 = vadd.f32 %v1809, %v1819
          %s1824 = sld [smem:[#allocation9 + $0x5b]]
          %v1825 = vld [vmem:[%s311 + $0x6] sm:$0xff]
          %v1826 = vld [vmem:[%s311 + $0xe] sm:$0xff]
          %v1827 = vstv %s1824
          %v1828 = vmul.f32 %v1827, %v1825
          %v1829 = vmul.f32 %v1827, %v1826
          %v1830 = vadd.f32 %v1822, %v1828
          %v1831 = vadd.f32 %v1823, %v1829
          %s1832 = sld [smem:[#allocation9 + $0x5c]]
          %v1833 = vstv %s1832
          %v1834 = vmul.f32 %v1833, %v1825
          %v1835 = vmul.f32 %v1833, %v1826
          %1838 = vrot.lane.b32.xlu0 %v1834, 127
          %v1839 = vpop.permute.xlu0 %1838
          %1840 = vrot.lane.b32.xlu0 %v1835, 127
          %v1841 = vpop.permute.xlu0 %1840
          %v1844 = vadd.f32 %v1830, %v1839
          %v1845 = vadd.f32 %v1831, %v1841
          %s1846 = sld [smem:[#allocation9 + $0x5d]]
          %v1847 = vstv %s1846
          %v1848 = vmul.f32 %v1847, %v1825
          %v1849 = vmul.f32 %v1847, %v1826
          %1852 = vrot.lane.b32.xlu0 %v1848, 126
          %v1853 = vpop.permute.xlu0 %1852
          %1854 = vrot.lane.b32.xlu0 %v1849, 126
          %v1855 = vpop.permute.xlu0 %1854
          %v1858 = vadd.f32 %v1844, %v1853
          %v1859 = vadd.f32 %v1845, %v1855
          %s1860 = sld [smem:[#allocation9 + $0x5e]]
          %v1861 = vstv %s1860
          %v1862 = vmul.f32 %v1861, %v1825
          %v1863 = vmul.f32 %v1861, %v1826
          %1866 = vrot.lane.b32.xlu0 %v1862, 125
          %v1867 = vpop.permute.xlu0 %1866
          %1868 = vrot.lane.b32.xlu0 %v1863, 125
          %v1869 = vpop.permute.xlu0 %1868
          %v1872 = vadd.f32 %v1858, %v1867
          %v1873 = vadd.f32 %v1859, %v1869
          %s1874 = sld [smem:[#allocation9 + $0x5f]]
          %v1875 = vstv %s1874
          %v1876 = vmul.f32 %v1875, %v1825
          %v1877 = vmul.f32 %v1875, %v1826
          %1880 = vrot.lane.b32.xlu0 %v1876, 124
          %v1881 = vpop.permute.xlu0 %1880
          %1882 = vrot.lane.b32.xlu0 %v1877, 124
          %v1883 = vpop.permute.xlu0 %1882
          %v1886 = vadd.f32 %v1872, %v1881
          %v1887 = vadd.f32 %v1873, %v1883
          %s1888 = sld [smem:[#allocation9 + $0x60]]
          %v1889 = vstv %s1888
          %v1890 = vmul.f32 %v1889, %v1825
          %v1891 = vmul.f32 %v1889, %v1826
          %1894 = vrot.lane.b32.xlu0 %v1890, 123
          %v1895 = vpop.permute.xlu0 %1894
          %1896 = vrot.lane.b32.xlu0 %v1891, 123
          %v1897 = vpop.permute.xlu0 %1896
          %v1900 = vadd.f32 %v1886, %v1895
          %v1901 = vadd.f32 %v1887, %v1897
          %s1902 = sld [smem:[#allocation9 + $0x61]]
          %v1903 = vstv %s1902
          %v1904 = vmul.f32 %v1903, %v1825
          %v1905 = vmul.f32 %v1903, %v1826
          %1908 = vrot.lane.b32.xlu0 %v1904, 122
          %v1909 = vpop.permute.xlu0 %1908
          %1910 = vrot.lane.b32.xlu0 %v1905, 122
          %v1911 = vpop.permute.xlu0 %1910
          %v1914 = vadd.f32 %v1900, %v1909
          %v1915 = vadd.f32 %v1901, %v1911
          %v1916 = vxor.u32 %v1914, 2147483648
          %v1917 = vxor.u32 %v1915, 2147483648
          %v1918 = vmul.f32 %v1916, 1.442695
          %v1919 = vpow.pop %v1918
          %v1920 = vmul.f32 %v1917, 1.442695
          %v1921 = vpow.pop %v1920
          %v1922 = vadd.f32 %v1919, 1.0
          %v1923 = vadd.f32 %v1921, 1.0
          %v1924 = vrcp.pop %v1922
          %v1925 = vmul.f32 1.0, %v1924
          %v1926 = vrcp.pop %v1923
          %v1927 = vmul.f32 1.0, %v1926
          %vm1928 = vcmask 130048
          %1929 = vst.msk [vmem:[%s189] sm:$0xff] %vm1928, %v1925
          %1930 = vst.msk [vmem:[%s189 + $0x8] sm:$0xff] %vm1928, %v1927
        $region44: #{tpu_custom_call.1} parent=27 // pred_fallthru
          _
        %s1931 = sand.u32 %s89, 1
        %s1932 = scalar_lea.sflag [#allocation7], %s1931
        %s1933 = sand.u32 %s89, 1
        %s1934 = smul.addr %s1933, 16
        %s1935 = scalar_lea.vmem [#allocation10], %s1934
        // Predicated region
        $region45: #{tpu_custom_call.1} parent=27 // pred_check
          %p1936 = pneg %p99
        $region46: #{tpu_custom_call.1} parent=27 // pred_check_branch
          %1938 = sbr.rel (%p1936) target = $region48
        $region47: #{tpu_custom_call.1} parent=27 // pred_region
          %s1940 = ssub.s32 256, 256
          %1941 = vsyncadd %s1932, %s1940
          %s1942 = smul.addr %s24, 2
          %s1943 = smul.addr %s1942, 128
          %s1944 = scalar_lea.hbm %s2, %s1943
          %s1945 = sshll.u32 %s1935, 4
          %s1946 = int_to_ptr.vmem [resolvable:$true] %s1945
          %1951 = dma.vmem_to_hbm [thread:$0]  %s1946, 256, %s1944, %s1932, 128, 128, 8
        $region48: #{tpu_custom_call.1} parent=27 // pred_fallthru
          _
      $region28: #{tpu_custom_call.1} parent=5 // pred_fallthru
        _
      %p1952 = scmp.le.s32.totalorder 2, %s15
      // Predicated region
      $region49: #{tpu_custom_call.1} parent=5 // pred_check
        %p1953 = pneg %p1952
      $region50: #{tpu_custom_call.1} parent=5 // pred_check_branch
        %1955 = sbr.rel (%p1953) target = $region52
      $region51: #{tpu_custom_call.1} parent=5 // pred_region
        %s1956 = ssub.s32 %s15, 2
        // Predicated region
        $region53: #{tpu_custom_call.1} parent=51 // pred_check
          %p1957 = pneg %p105
        $region54: #{tpu_custom_call.1} parent=51 // pred_check_branch
          %1959 = sbr.rel (%p1957) target = $region56
        $region55: #{tpu_custom_call.1} parent=51 // pred_region
          %s1960 = sand.u32 %s90, 1
          %s1961 = scalar_lea.sflag [#allocation7], %s1960
          %s1962 = sand.u32 %s90, 1
          %s1963 = smul.addr %s1962, 16
          %s1964 = scalar_lea.vmem [#allocation10], %s1963
          %1965 = dma.done %s1961, 256
        $region56: #{tpu_custom_call.1} parent=51 // pred_fallthru
          _
      $region52: #{tpu_custom_call.1} parent=5 // pred_fallthru
        _
    $region6: #{tpu_custom_call.1} parent=1 // loop_footer
      %s19 = sadd.s32 1, %s15
    $region7: #{tpu_custom_call.1} parent=1 // loop_footer_branch
      %14 = sbr.rel target = $region3
    $region8: #{tpu_custom_call.1} parent=1 // loop_exit
      _
    %1966 = vsyncpa [#allocation6], 1
    %s1967 = scalar_lea.sflag [#allocation6], 1
    %1968 = vsyncpa %s1967, 1
    %1969 = vsyncpa [#allocation7], 1
    %s1970 = scalar_lea.sflag [#allocation7], 1
    %1971 = vsyncpa %s1970, 1
    %1972 = vsyncpa [#allocation8], 1
    %s1973 = scalar_lea.sflag [#allocation8], 1
    %1974 = vsyncpa %s1973, 1

</llo_original>
